<compile_context>
chip_gen: v7x
topology: tpu7x:2x2x1
jax: 0.10.0
libtpu: 0.0.40
codegen_flags: <defaults>
</compile_context>

<pallas_src>
import jax
import jax.numpy as jnp
from jax.experimental import pallas as pl
from jax.experimental.pallas import tpu as pltpu

LN_EPS = 1e-5                # PyTorch nn.LayerNorm default
_N_BLOCKS = 3                # hidden1/2/3 in the reference module
_MAX_BATCH_TILE = 4096       # amortizes the ~600-cycle per-grid-step overhead; far below VMEM


def _round_up(v, m):
    return ((v + m - 1) // m) * m


def _tensorcores_per_device():
    """Best-effort TensorCore count per device (dual-core on v4 / v5p / v7x)."""
    try:
        kind = jax.devices()[0].device_kind.lower()
    except Exception:
        return 1
    return 2 if any(t in kind for t in ("v4", "v5p", "v7")) else 1


def _choose_batch_tile(batch, n_cores):
    """Adaptive batch tile: single grid step on single-TC chips, >=2 parallel steps on dual-TC."""
    if n_cores >= 2:
        tile = _round_up(max(1, -(-batch // 2)), 128)   # >= 2 grid steps -> both TCs get work
    else:
        tile = _round_up(batch, 128)                    # single TC -> one grid step is cheapest
    return max(128, min(tile, _MAX_BATCH_TILE))


def _make_kernel(n_in, n_hidden, n_out, n_blocks=_N_BLOCKS):
    """Build the fused kernel (closes over static sizes and slab column offsets)."""
    H = n_hidden
    c_wout = n_blocks * H            # W_out stored in rows 0..n_out-1, width H (lane-tile aligned)
    c_win = c_wout + H               # [w_in | b_in], width n_in+1
    c_ln = c_win + n_in + 1          # 3*n_blocks LayerNorm/bias columns (b_i, gamma_i, beta_i)
    c_bout = c_ln + 3 * n_blocks     # b_out column (rows 0..n_out-1)

    def kernel(x_ref, p_ref, o_ref):
        x = x_ref[...].astype(jnp.float32)        # (n_in+1, T): last row is ones (bias fold)
        P = p_ref[...]                            # (H, slab_width) packed parameters

        # input layer: bias folded into the matmul via the ones row of x
        w_in_aug = P[:, c_win:c_win + n_in + 1]   # (H, n_in+1) = [w_in | b_in]
        h = jnp.tanh(jnp.dot(w_in_aug, x, preferred_element_type=jnp.float32))

        for i in range(n_blocks):                 # unrolled at trace time
            w = P[:, i * H:(i + 1) * H]                        # (H, H)
            b = P[:, c_ln + 3 * i:c_ln + 3 * i + 1]            # (H, 1) linear bias
            g = P[:, c_ln + 3 * i + 1:c_ln + 3 * i + 2]        # (H, 1) LN gamma
            be = P[:, c_ln + 3 * i + 2:c_ln + 3 * i + 3]       # (H, 1) LN beta
            a = jnp.tanh(jnp.dot(w, h, preferred_element_type=jnp.float32) + b)
            # LayerNorm over features == sublane reduction in this layout.
            # E[a^2]-mu^2 keeps the two XLU reductions independent (shorter critical path).
            mu = jnp.mean(a, axis=0, keepdims=True)            # (1, T)
            ex2 = jnp.mean(a * a, axis=0, keepdims=True)       # (1, T)
            var = jnp.maximum(ex2 - mu * mu, 0.0)
            h = (a - mu) * jax.lax.rsqrt(var + LN_EPS) * g + be + h   # + residual

        w_out = P[:n_out, c_wout:c_wout + H]                   # (n_out, H)
        b_out = P[:n_out, c_bout:c_bout + 1]                   # (n_out, 1)
        out = jnp.dot(w_out, h, preferred_element_type=jnp.float32) + b_out
        o_ref[...] = out.astype(o_ref.dtype)                   # (n_out, T) lane-dense store

    return kernel


def pack_params(p):
    """Pack all 16 PyTorch-layout parameter tensors into ONE lane-dense f32 slab (H, 256-ish)."""
    H, n_in = p["w_in"].shape
    n_out = p["w_out"].shape[0]
    assert n_out <= H, "slab packing assumes n_out <= n_hidden"
    w_out_rows = jnp.zeros((H, H), jnp.float32).at[:n_out, :].set(p["w_out"])
    ln = jnp.stack([p["b1"], p["g1"], p["be1"],
                    p["b2"], p["g2"], p["be2"],
                    p["b3"], p["g3"], p["be3"]], axis=1)                 # (H, 9)
    b_out_col = jnp.zeros((H, 1), jnp.float32).at[:n_out, 0].set(p["b_out"])
    slab = jnp.concatenate(
        [p["w1"], p["w2"], p["w3"],           # cols [0, 3H)
         w_out_rows,                          # cols [3H, 4H): W_out in rows 0..n_out-1
         p["w_in"], p["b_in"][:, None],       # cols [4H, 4H+n_in+1)
         ln,                                  # 3*n_blocks LayerNorm columns
         b_out_col],                          # final column: b_out in rows 0..n_out-1
        axis=1).astype(jnp.float32)
    width = _round_up(slab.shape[1], 128)     # lane-dense slab width
    if width != slab.shape[1]:
        slab = jnp.pad(slab, ((0, 0), (0, width - slab.shape[1])))
    return slab


def custom_pinn_forward_t(xT, params, *, batch_tile=None):
    """Features-on-rows entry point: xT (n_in, B) -> (n_out, B).
    Preferred for PINN training loops — avoids the wrapper transposes entirely."""
    n_in, B = xT.shape
    n_hidden = params["w_in"].shape[0]
    n_out = params["w_out"].shape[0]
    slab = pack_params(params)

    if batch_tile is None:
        batch_tile = _choose_batch_tile(B, _tensorcores_per_device())
    batch_tile = max(128, _round_up(int(batch_tile), 128))
    n_tiles = pl.cdiv(B, batch_tile)
    b_pad = n_tiles * batch_tile

    # append the bias ones-row, then zero-pad the (ragged) batch to a tile multiple
    x_aug = jnp.concatenate([xT.astype(jnp.float32),
                             jnp.ones((1, B), jnp.float32)], axis=0)
    if b_pad != B:
        x_aug = jnp.pad(x_aug, ((0, 0), (0, b_pad - B)))

    kernel = _make_kernel(n_in, n_hidden, n_out)
    out = pl.pallas_call(
        kernel,
        out_shape=jax.ShapeDtypeStruct((n_out, b_pad), xT.dtype),
        grid_spec=pltpu.PrefetchScalarGridSpec(
            num_scalar_prefetch=0,
            grid=(n_tiles,),
            in_specs=[
                pl.BlockSpec((n_in + 1, batch_tile), lambda i: (0, i)),
                # the whole parameter slab: constant block index -> fetched once, never re-DMA'd
                pl.BlockSpec(slab.shape, lambda i: (0, 0)),
            ],
            out_specs=pl.BlockSpec((n_out, batch_tile), lambda i: (0, i)),
        ),
        compiler_params=pltpu.CompilerParams(
            dimension_semantics=("parallel",)),
    )(x_aug, slab)
    return out[:, :B]


def custom_pinn_forward(x, params, *, batch_tile=None):
    """PyTorch-layout convenience wrapper: x (B, n_in) -> (B, n_out)."""
    return custom_pinn_forward_t(x.T, params, batch_tile=batch_tile).T


def init_params(key, n_input, n_output, n_hidden):
    """Deterministic init mimicking PyTorch Linear defaults, stored in PyTorch layout:
    weights (out_features, in_features), biases / LN params (features,)."""
    ks = jax.random.split(key, 10)

    def linear(kw, kb, fan_in, fan_out):
        bound = float(fan_in) ** -0.5
        w = jax.random.uniform(kw, (fan_out, fan_in), jnp.float32, -bound, bound)
        b = jax.random.uniform(kb, (fan_out,), jnp.float32, -bound, bound)
        return w, b

    w_in, b_in = linear(ks[0], ks[1], n_input, n_hidden)
    w1, b1 = linear(ks[2], ks[3], n_hidden, n_hidden)
    w2, b2 = linear(ks[4], ks[5], n_hidden, n_hidden)
    w3, b3 = linear(ks[6], ks[7], n_hidden, n_hidden)
    w_out, b_out = linear(ks[8], ks[9], n_hidden, n_output)

    ones = jnp.ones((n_hidden,), jnp.float32)
    zeros = jnp.zeros((n_hidden,), jnp.float32)
    return {
        "w_in": w_in, "b_in": b_in,
        "w1": w1, "b1": b1, "g1": ones, "be1": zeros,
        "w2": w2, "b2": b2, "g2": ones, "be2": zeros,
        "w3": w3, "b3": b3, "g3": ones, "be3": zeros,
        "w_out": w_out, "b_out": b_out,
    }


def reference_forward(x, p):
    """Pure-JAX reference matching the PyTorch module semantics."""
    def ln(a, g, beta):
        mu = jnp.mean(a, axis=-1, keepdims=True)
        var = jnp.mean((a - mu) ** 2, axis=-1, keepdims=True)
        return (a - mu) / jnp.sqrt(var + LN_EPS) * g + beta

    h = jnp.tanh(x @ p["w_in"].T + p["b_in"])
    res = h
    h = ln(jnp.tanh(h @ p["w1"].T + p["b1"]), p["g1"], p["be1"]) + res
    res = h
    h = ln(jnp.tanh(h @ p["w2"].T + p["b2"]), p["g2"], p["be2"]) + res
    res = h
    h = ln(jnp.tanh(h @ p["w3"].T + p["b3"]), p["g3"], p["be3"]) + res
    return h @ p["w_out"].T + p["b_out"]


if __name__ == "__main__":
    key = jax.random.PRNGKey(0)
    k_x, k_x2, k_p = jax.random.split(key, 3)

    N_INPUT, N_HIDDEN, N_OUTPUT = 3, 32, 2
    params = init_params(k_p, N_INPUT, N_OUTPUT, N_HIDDEN)

    # main case: 1024 collocation points, adaptive tiling
    B = 1024
    x = jax.random.normal(k_x, (B, N_INPUT), jnp.float32)
    out = jax.block_until_ready(custom_pinn_forward(x, params))
    ref = reference_forward(x, params)
    assert out.shape == (B, N_OUTPUT), out.shape
    assert jnp.allclose(out, ref, atol=1e-4, rtol=1e-4), \
        float(jnp.max(jnp.abs(out - ref)))

    # explicit 2-step "parallel" grid (dual-TensorCore-style tiling) must also be correct
    out_2t = jax.block_until_ready(custom_pinn_forward(x, params, batch_tile=512))
    assert jnp.allclose(out_2t, ref, atol=1e-4, rtol=1e-4), \
        float(jnp.max(jnp.abs(out_2t - ref)))

    # ragged batch: now pads only to the next multiple of 128 (256 here), not a full 512 tile
    B2 = 200
    x2 = jax.random.normal(k_x2, (B2, N_INPUT), jnp.float32)
    out2 = jax.block_until_ready(custom_pinn_forward(x2, params))
    ref2 = reference_forward(x2, params)
    assert out2.shape == (B2, N_OUTPUT), out2.shape
    assert jnp.allclose(out2, ref2, atol=1e-4, rtol=1e-4), \
        float(jnp.max(jnp.abs(out2 - ref2)))

    print("KERNEL_OK")
</pallas_src>

<mosaic_0001>
module attributes {stable_mosaic.version = 11 : i64} {
  func.func @kernel(%arg0: i32, %arg1: memref<4x1024xf32, #tpu.memory_space<vmem>>, %arg2: memref<32x256xf32, #tpu.memory_space<vmem>>, %arg3: memref<2x1024xf32, #tpu.memory_space<vmem>>) attributes {dimension_semantics = [#tpu.dimension_semantics<parallel>], iteration_bounds = array<i64: 1>, scalar_prefetch = 0 : i64, scratch_operands = 0 : i64, tpu.core_type = #tpu.core_type<tc>, window_params = [{transform_indices = @transform_0, window_bounds = array<i64: 4, 1024>}, {pipeline_mode = #tpu.pipeline_mode<synchronous>, transform_indices = @transform_1, window_bounds = array<i64: 32, 256>}, {transform_indices = @transform_2, window_bounds = array<i64: 2, 1024>}]} {
    %c0 = arith.constant 0 : index
    %c0_0 = arith.constant 0 : index
    %0 = vector.load %arg1[%c0, %c0_0] : memref<4x1024xf32, #tpu.memory_space<vmem>>, vector<4x1024xf32>
    %c0_1 = arith.constant 0 : index
    %c0_2 = arith.constant 0 : index
    %1 = vector.load %arg2[%c0_1, %c0_2] : memref<32x256xf32, #tpu.memory_space<vmem>>, vector<32x256xf32>
    %2 = vector.extract_strided_slice %1 {offsets = [0, 128], sizes = [32, 4], strides = [1, 1]} : vector<32x256xf32> to vector<32x4xf32>
    %cst = arith.constant dense<0.000000e+00> : vector<32x1024xf32>
    %3 = tpu.matmul %2, %0, %cst {dimension_numbers = #tpu.dot_dimension_numbers<[1], [0], [0], [1], [0, 0, 1, 1], [], []>} : vector<32x4xf32>, vector<4x1024xf32>, vector<32x1024xf32> -> vector<32x1024xf32>
    %4 = math.tanh %3 : vector<32x1024xf32>
    %5 = vector.extract_strided_slice %1 {offsets = [0, 0], sizes = [32, 32], strides = [1, 1]} : vector<32x256xf32> to vector<32x32xf32>
    %6 = vector.extract_strided_slice %1 {offsets = [0, 132], sizes = [32, 1], strides = [1, 1]} : vector<32x256xf32> to vector<32x1xf32>
    %7 = vector.extract_strided_slice %1 {offsets = [0, 133], sizes = [32, 1], strides = [1, 1]} : vector<32x256xf32> to vector<32x1xf32>
    %8 = vector.extract_strided_slice %1 {offsets = [0, 134], sizes = [32, 1], strides = [1, 1]} : vector<32x256xf32> to vector<32x1xf32>
    %cst_3 = arith.constant dense<0.000000e+00> : vector<32x1024xf32>
    %9 = tpu.matmul %5, %4, %cst_3 {dimension_numbers = #tpu.dot_dimension_numbers<[1], [0], [0], [1], [0, 0, 1, 1], [], []>} : vector<32x32xf32>, vector<32x1024xf32>, vector<32x1024xf32> -> vector<32x1024xf32>
    %10 = vector.broadcast %6 : vector<32x1xf32> to vector<32x1024xf32>
    %11 = arith.addf %9, %10 : vector<32x1024xf32>
    %12 = math.tanh %11 : vector<32x1024xf32>
    %cst_4 = arith.constant dense<0.000000e+00> : vector<1024xf32>
    %13 = vector.multi_reduction <add>, %12, %cst_4 [0] : vector<32x1024xf32> to vector<1024xf32>
    %14 = vector.shape_cast %13 : vector<1024xf32> to vector<1x1024xf32>
    %cst_5 = arith.constant 3.200000e+01 : f32
    %15 = vector.broadcast %cst_5 : f32 to vector<1x1024xf32>
    %16 = arith.divf %14, %15 : vector<1x1024xf32>
    %17 = arith.mulf %12, %12 : vector<32x1024xf32>
    %cst_6 = arith.constant dense<0.000000e+00> : vector<1024xf32>
    %18 = vector.multi_reduction <add>, %17, %cst_6 [0] : vector<32x1024xf32> to vector<1024xf32>
    %19 = vector.shape_cast %18 : vector<1024xf32> to vector<1x1024xf32>
    %cst_7 = arith.constant 3.200000e+01 : f32
    %20 = vector.broadcast %cst_7 : f32 to vector<1x1024xf32>
    %21 = arith.divf %19, %20 : vector<1x1024xf32>
    %22 = arith.mulf %16, %16 : vector<1x1024xf32>
    %23 = arith.subf %21, %22 : vector<1x1024xf32>
    %cst_8 = arith.constant 0.000000e+00 : f32
    %24 = vector.broadcast %cst_8 : f32 to vector<1x1024xf32>
    %25 = arith.maximumf %23, %24 : vector<1x1024xf32>
    %26 = vector.broadcast %16 : vector<1x1024xf32> to vector<32x1024xf32>
    %27 = arith.subf %12, %26 : vector<32x1024xf32>
    %cst_9 = arith.constant 9.99999974E-6 : f32
    %28 = vector.broadcast %cst_9 : f32 to vector<1x1024xf32>
    %29 = arith.addf %25, %28 : vector<1x1024xf32>
    %30 = math.rsqrt %29 : vector<1x1024xf32>
    %31 = vector.broadcast %30 : vector<1x1024xf32> to vector<32x1024xf32>
    %32 = arith.mulf %27, %31 : vector<32x1024xf32>
    %33 = vector.broadcast %7 : vector<32x1xf32> to vector<32x1024xf32>
    %34 = arith.mulf %32, %33 : vector<32x1024xf32>
    %35 = vector.broadcast %8 : vector<32x1xf32> to vector<32x1024xf32>
    %36 = arith.addf %34, %35 : vector<32x1024xf32>
    %37 = arith.addf %36, %4 : vector<32x1024xf32>
    %38 = vector.extract_strided_slice %1 {offsets = [0, 32], sizes = [32, 32], strides = [1, 1]} : vector<32x256xf32> to vector<32x32xf32>
    %39 = vector.extract_strided_slice %1 {offsets = [0, 135], sizes = [32, 1], strides = [1, 1]} : vector<32x256xf32> to vector<32x1xf32>
    %40 = vector.extract_strided_slice %1 {offsets = [0, 136], sizes = [32, 1], strides = [1, 1]} : vector<32x256xf32> to vector<32x1xf32>
    %41 = vector.extract_strided_slice %1 {offsets = [0, 137], sizes = [32, 1], strides = [1, 1]} : vector<32x256xf32> to vector<32x1xf32>
    %cst_10 = arith.constant dense<0.000000e+00> : vector<32x1024xf32>
    %42 = tpu.matmul %38, %37, %cst_10 {dimension_numbers = #tpu.dot_dimension_numbers<[1], [0], [0], [1], [0, 0, 1, 1], [], []>} : vector<32x32xf32>, vector<32x1024xf32>, vector<32x1024xf32> -> vector<32x1024xf32>
    %43 = vector.broadcast %39 : vector<32x1xf32> to vector<32x1024xf32>
    %44 = arith.addf %42, %43 : vector<32x1024xf32>
    %45 = math.tanh %44 : vector<32x1024xf32>
    %cst_11 = arith.constant dense<0.000000e+00> : vector<1024xf32>
    %46 = vector.multi_reduction <add>, %45, %cst_11 [0] : vector<32x1024xf32> to vector<1024xf32>
    %47 = vector.shape_cast %46 : vector<1024xf32> to vector<1x1024xf32>
    %cst_12 = arith.constant 3.200000e+01 : f32
    %48 = vector.broadcast %cst_12 : f32 to vector<1x1024xf32>
    %49 = arith.divf %47, %48 : vector<1x1024xf32>
    %50 = arith.mulf %45, %45 : vector<32x1024xf32>
    %cst_13 = arith.constant dense<0.000000e+00> : vector<1024xf32>
    %51 = vector.multi_reduction <add>, %50, %cst_13 [0] : vector<32x1024xf32> to vector<1024xf32>
    %52 = vector.shape_cast %51 : vector<1024xf32> to vector<1x1024xf32>
    %cst_14 = arith.constant 3.200000e+01 : f32
    %53 = vector.broadcast %cst_14 : f32 to vector<1x1024xf32>
    %54 = arith.divf %52, %53 : vector<1x1024xf32>
    %55 = arith.mulf %49, %49 : vector<1x1024xf32>
    %56 = arith.subf %54, %55 : vector<1x1024xf32>
    %cst_15 = arith.constant 0.000000e+00 : f32
    %57 = vector.broadcast %cst_15 : f32 to vector<1x1024xf32>
    %58 = arith.maximumf %56, %57 : vector<1x1024xf32>
    %59 = vector.broadcast %49 : vector<1x1024xf32> to vector<32x1024xf32>
    %60 = arith.subf %45, %59 : vector<32x1024xf32>
    %cst_16 = arith.constant 9.99999974E-6 : f32
    %61 = vector.broadcast %cst_16 : f32 to vector<1x1024xf32>
    %62 = arith.addf %58, %61 : vector<1x1024xf32>
    %63 = math.rsqrt %62 : vector<1x1024xf32>
    %64 = vector.broadcast %63 : vector<1x1024xf32> to vector<32x1024xf32>
    %65 = arith.mulf %60, %64 : vector<32x1024xf32>
    %66 = vector.broadcast %40 : vector<32x1xf32> to vector<32x1024xf32>
    %67 = arith.mulf %65, %66 : vector<32x1024xf32>
    %68 = vector.broadcast %41 : vector<32x1xf32> to vector<32x1024xf32>
    %69 = arith.addf %67, %68 : vector<32x1024xf32>
    %70 = arith.addf %69, %37 : vector<32x1024xf32>
    %71 = vector.extract_strided_slice %1 {offsets = [0, 64], sizes = [32, 32], strides = [1, 1]} : vector<32x256xf32> to vector<32x32xf32>
    %72 = vector.extract_strided_slice %1 {offsets = [0, 138], sizes = [32, 1], strides = [1, 1]} : vector<32x256xf32> to vector<32x1xf32>
    %73 = vector.extract_strided_slice %1 {offsets = [0, 139], sizes = [32, 1], strides = [1, 1]} : vector<32x256xf32> to vector<32x1xf32>
    %74 = vector.extract_strided_slice %1 {offsets = [0, 140], sizes = [32, 1], strides = [1, 1]} : vector<32x256xf32> to vector<32x1xf32>
    %cst_17 = arith.constant dense<0.000000e+00> : vector<32x1024xf32>
    %75 = tpu.matmul %71, %70, %cst_17 {dimension_numbers = #tpu.dot_dimension_numbers<[1], [0], [0], [1], [0, 0, 1, 1], [], []>} : vector<32x32xf32>, vector<32x1024xf32>, vector<32x1024xf32> -> vector<32x1024xf32>
    %76 = vector.broadcast %72 : vector<32x1xf32> to vector<32x1024xf32>
    %77 = arith.addf %75, %76 : vector<32x1024xf32>
    %78 = math.tanh %77 : vector<32x1024xf32>
    %cst_18 = arith.constant dense<0.000000e+00> : vector<1024xf32>
    %79 = vector.multi_reduction <add>, %78, %cst_18 [0] : vector<32x1024xf32> to vector<1024xf32>
    %80 = vector.shape_cast %79 : vector<1024xf32> to vector<1x1024xf32>
    %cst_19 = arith.constant 3.200000e+01 : f32
    %81 = vector.broadcast %cst_19 : f32 to vector<1x1024xf32>
    %82 = arith.divf %80, %81 : vector<1x1024xf32>
    %83 = arith.mulf %78, %78 : vector<32x1024xf32>
    %cst_20 = arith.constant dense<0.000000e+00> : vector<1024xf32>
    %84 = vector.multi_reduction <add>, %83, %cst_20 [0] : vector<32x1024xf32> to vector<1024xf32>
    %85 = vector.shape_cast %84 : vector<1024xf32> to vector<1x1024xf32>
    %cst_21 = arith.constant 3.200000e+01 : f32
    %86 = vector.broadcast %cst_21 : f32 to vector<1x1024xf32>
    %87 = arith.divf %85, %86 : vector<1x1024xf32>
    %88 = arith.mulf %82, %82 : vector<1x1024xf32>
    %89 = arith.subf %87, %88 : vector<1x1024xf32>
    %cst_22 = arith.constant 0.000000e+00 : f32
    %90 = vector.broadcast %cst_22 : f32 to vector<1x1024xf32>
    %91 = arith.maximumf %89, %90 : vector<1x1024xf32>
    %92 = vector.broadcast %82 : vector<1x1024xf32> to vector<32x1024xf32>
    %93 = arith.subf %78, %92 : vector<32x1024xf32>
    %cst_23 = arith.constant 9.99999974E-6 : f32
    %94 = vector.broadcast %cst_23 : f32 to vector<1x1024xf32>
    %95 = arith.addf %91, %94 : vector<1x1024xf32>
    %96 = math.rsqrt %95 : vector<1x1024xf32>
    %97 = vector.broadcast %96 : vector<1x1024xf32> to vector<32x1024xf32>
    %98 = arith.mulf %93, %97 : vector<32x1024xf32>
    %99 = vector.broadcast %73 : vector<32x1xf32> to vector<32x1024xf32>
    %100 = arith.mulf %98, %99 : vector<32x1024xf32>
    %101 = vector.broadcast %74 : vector<32x1xf32> to vector<32x1024xf32>
    %102 = arith.addf %100, %101 : vector<32x1024xf32>
    %103 = arith.addf %102, %70 : vector<32x1024xf32>
    %104 = vector.extract_strided_slice %1 {offsets = [0, 96], sizes = [2, 32], strides = [1, 1]} : vector<32x256xf32> to vector<2x32xf32>
    %105 = vector.extract_strided_slice %1 {offsets = [0, 141], sizes = [2, 1], strides = [1, 1]} : vector<32x256xf32> to vector<2x1xf32>
    %cst_24 = arith.constant dense<0.000000e+00> : vector<2x1024xf32>
    %106 = tpu.matmul %104, %103, %cst_24 {dimension_numbers = #tpu.dot_dimension_numbers<[1], [0], [0], [1], [0, 0, 1, 1], [], []>} : vector<2x32xf32>, vector<32x1024xf32>, vector<2x1024xf32> -> vector<2x1024xf32>
    %107 = vector.broadcast %105 : vector<2x1xf32> to vector<2x1024xf32>
    %108 = arith.addf %106, %107 : vector<2x1024xf32>
    %c0_25 = arith.constant 0 : index
    %c0_26 = arith.constant 0 : index
    %109 = vector.load %arg3[%c0_25, %c0_26] : memref<2x1024xf32, #tpu.memory_space<vmem>>, vector<2x1024xf32>
    tpu.vector_store %arg3[%c0_25, %c0_26], %108 {strides = array<i32>} : memref<2x1024xf32, #tpu.memory_space<vmem>>, vector<2x1024xf32>,
    return
  }
  func.func @transform_0(%arg0: i32) -> (i32, i32) {
    %c0_i32 = arith.constant 0 : i32
    %c0_i32_0 = arith.constant 0 : i32
    return %c0_i32, %arg0 : i32, i32
  }
  func.func @transform_1(%arg0: i32) -> (i32, i32) {
    %c0_i32 = arith.constant 0 : i32
    %c0_i32_0 = arith.constant 0 : i32
    %c0_i32_1 = arith.constant 0 : i32
    return %c0_i32, %c0_i32_0 : i32, i32
  }
  func.func @transform_2(%arg0: i32) -> (i32, i32) {
    %c0_i32 = arith.constant 0 : i32
    %c0_i32_0 = arith.constant 0 : i32
    return %c0_i32, %arg0 : i32, i32
  }
}

</mosaic_0001>

<llo_original>
// kernel: tpu_custom_call.1
$region0: #{tpu_custom_call.1}
  #allocation0 [shape = 'u32[]', space=smem, size = 0x4, offset = 0x4, fixed_abs, tag = 'smem constant byte address 0x4 - core index']
  #allocation1 [shape = 'u32[144,128]{1,0:T(1,128)}', space=vmem, size = 0x12000, scoped, tag = 'internal scratch']
  %s0 = inlined_call_operand.hbm [shape: f32[4,1024], index: 0, kind: input, shape index: {}]
  %s1 = inlined_call_operand.hbm [shape: f32[32,256], index: 1, kind: input, shape index: {}]
  %s2 = inlined_call_operand.hbm [shape: f32[2,1024], index: 2, kind: output, shape index: {}]
  %s3 = sld [smem:[#allocation0]]
  $region26: #{tpu_custom_call.1} parent=0
    _
  %s5 = ssub.s32 1, %s3
  %s6 = scalar_select 0, %s5, %s3
  $region1: #{tpu_custom_call.1} parent=0
    #allocation2 [shape = 'u8[16384]{0}', space=vmem, size = 0x4000, scoped, tag = 'input window, operand 0, single buffered']
    #allocation3 [shape = 's32[1]{0}', space=sflag, size = 0x4, scoped, tag = 'scoped memory for tpu_custom_call.1']
    #allocation4 [shape = 's32[1]{0}', space=sflag, size = 0x4, scoped, tag = 'scoped memory for tpu_custom_call.1']
    #allocation5 [shape = 'u8[32768]{0}', space=vmem, size = 0x8000, scoped, tag = 'input window, operand 1, single buffered']
    #allocation6 [shape = 's32[1]{0}', space=sflag, size = 0x4, scoped, tag = 'scoped memory for tpu_custom_call.1']
    #allocation7 [shape = 'u8[8192]{0}', space=vmem, size = 0x2000, scoped, tag = 'output window, operand 0, single buffered']
    %7 = vsyncpa [#allocation3], 0
    %8 = vsyncpa [#allocation6], 0
    %9 = vsyncpa [#allocation4], 0
    // Predicated region
    $region2: #{tpu_custom_call.1} parent=1 // pred_check
      _
    $region3: #{tpu_custom_call.1} parent=1 // pred_check_branch
      %11 = sbr.rel (0) target = $region5
    $region4: #{tpu_custom_call.1} parent=1 // pred_region
      %s13 = ssub.s32 512, 512
      %14 = vsyncadd [#allocation3], %s13
      %s16 = sshll.u32 [#allocation2], 4
      %s17 = int_to_ptr.vmem [resolvable:$true] %s16
      %19 = dma.hbm_to_vmem [thread:$0]  %s0, 512, %s17, [#allocation3]
    $region5: #{tpu_custom_call.1} parent=1 // pred_fallthru
      _
    // Predicated region
    $region6: #{tpu_custom_call.1} parent=1 // pred_check
      _
    $region7: #{tpu_custom_call.1} parent=1 // pred_check_branch
      %21 = sbr.rel (0) target = $region9
    $region8: #{tpu_custom_call.1} parent=1 // pred_region
      %s23 = ssub.s32 1024, 1024
      %24 = vsyncadd [#allocation6], %s23
      %s25 = sshll.u32 [#allocation5], 4
      %s26 = int_to_ptr.vmem [resolvable:$true] %s25
      %31 = dma.hbm_to_vmem [thread:$0]  %s1, 1024, %s26, [#allocation6], 256, 256, 16
    $region9: #{tpu_custom_call.1} parent=1 // pred_fallthru
      _
    // Predicated region
    $region10: #{tpu_custom_call.1} parent=1 // pred_check
      _
    $region11: #{tpu_custom_call.1} parent=1 // pred_check_branch
      %33 = sbr.rel (0) target = $region13
    $region12: #{tpu_custom_call.1} parent=1 // pred_region
      %34 = dma.done [#allocation3], 512
    $region13: #{tpu_custom_call.1} parent=1 // pred_fallthru
      _
    // Predicated region
    $region14: #{tpu_custom_call.1} parent=1 // pred_check
      _
    $region15: #{tpu_custom_call.1} parent=1 // pred_check_branch
      %36 = sbr.rel (0) target = $region17
    $region16: #{tpu_custom_call.1} parent=1 // pred_region
      %37 = dma.done [#allocation6], 1024
    $region17: #{tpu_custom_call.1} parent=1 // pred_fallthru
      _
    %v38 = vld [vmem:[#allocation2] sm:$0xff]
    %v39 = vld [vmem:[#allocation2 + $0x8] sm:$0xff]
    %v40 = vld [vmem:[#allocation2 + $0x10] sm:$0xff]
    %v41 = vld [vmem:[#allocation2 + $0x18] sm:$0xff]
    %v42 = vld [vmem:[#allocation5] sm:$0xff]
    %v43 = vld [vmem:[#allocation5 + $0x8] sm:$0xff]
    %v44 = vld [vmem:[#allocation5 + $0x10] sm:$0xff]
    %v45 = vld [vmem:[#allocation5 + $0x18] sm:$0xff]
    %v46 = vld [vmem:[#allocation5 + $0x20] sm:$0xff]
    %v47 = vld [vmem:[#allocation5 + $0x28] sm:$0xff]
    %v48 = vld [vmem:[#allocation5 + $0x30] sm:$0xff]
    %v49 = vld [vmem:[#allocation5 + $0x38] sm:$0xff]
    %v54 = vcombine.high %v38, %v38
    %v55 = vcombine.high %v39, %v39
    %v56 = vcombine.high %v40, %v40
    %v57 = vcombine.high %v41, %v41
    %vm58 = vcmask 31744
    %v60 = vsel %vm58, %v43, 0
    %v63 = vsel %vm58, %v45, 0
    %v66 = vsel %vm58, %v47, 0
    %v69 = vsel %vm58, %v49, 0
    %vm71 = vcmask 1043456
    %v72 = vsel %vm71, %v38, 0
    %v74 = vsel %vm71, %v54, 0
    %v76 = vsel %vm71, %v39, 0
    %v78 = vsel %vm71, %v55, 0
    %v80 = vsel %vm71, %v40, 0
    %v82 = vsel %vm71, %v56, 0
    %v84 = vsel %vm71, %v41, 0
    %v86 = vsel %vm71, %v57, 0
    %88 = vmatprep.subr.mxu0 %v74
    %89 = vmatpush1.msra.mxu0 %v72
    %90 = vmatprep.subr.mxu0 0.0
    %91 = vmatpush1.msra.mxu0 0.0
    %92 = vmatprep.subr.mxu0 0.0
    %93 = vmatpush1.msra.mxu0 0.0
    %94 = vmatprep.subr.mxu0 0.0
    %95 = vmatpush1.msra.mxu0 0.0
    %96 = vmatprep.subr.mxu0 0.0
    %97 = vmatpush1.msra.mxu0 0.0
    %98 = vmatprep.subr.mxu0 0.0
    %99 = vmatpush1.msra.mxu0 0.0
    %100 = vmatprep.subr.mxu0 0.0
    %101 = vmatpush1.msra.mxu0 0.0
    %102 = vmatprep.subr.mxu0 0.0
    %103 = vmatpush1.msra.mxu0 0.0
    %104 = vmatprep.subr.mxu0 0.0
    %105 = vmatpush1.msra.mxu0 0.0
    %106 = vmatprep.subr.mxu0 0.0
    %107 = vmatpush1.msra.mxu0 0.0
    %108 = vmatprep.subr.mxu0 0.0
    %109 = vmatpush1.msra.mxu0 0.0
    %110 = vmatprep.subr.mxu0 0.0
    %111 = vmatpush1.msra.mxu0 0.0
    %112 = vmatprep.subr.mxu0 0.0
    %113 = vmatpush1.msra.mxu0 0.0
    %114 = vmatprep.subr.mxu0 0.0
    %115 = vmatpush1.msra.mxu0 0.0
    %116 = vmatprep.subr.mxu0 0.0
    %117 = vmatpush1.msra.mxu0 0.0
    %118 = vmatprep.subr.mxu0 0.0
    %119 = vmatpush1.msra.mxu0 0.0
    %120 = vmatprep.subr.mxu0 0.0
    %121 = vmatpush1.msra.mxu0 0.0
    %122 = vmatprep.subr.mxu0 0.0
    %123 = vmatpush1.msra.mxu0 0.0
    %124 = vmatprep.subr.mxu0 0.0
    %125 = vmatpush1.msra.mxu0 0.0
    %126 = vmatprep.subr.mxu0 0.0
    %127 = vmatpush1.msra.mxu0 0.0
    %128 = vmatprep.subr.mxu0 0.0
    %129 = vmatpush1.msra.mxu0 0.0
    %130 = vmatprep.subr.mxu0 0.0
    %131 = vmatpush1.msra.mxu0 0.0
    %132 = vmatprep.subr.mxu0 0.0
    %133 = vmatpush1.msra.mxu0 0.0
    %134 = vmatprep.subr.mxu0 0.0
    %135 = vmatpush1.msra.mxu0 0.0
    %136 = vmatprep.subr.mxu0 0.0
    %137 = vmatpush1.msra.mxu0 0.0
    %138 = vmatprep.subr.mxu0 0.0
    %139 = vmatpush1.msra.mxu0 0.0
    %140 = vmatprep.subr.mxu0 0.0
    %141 = vmatpush1.msra.mxu0 0.0
    %142 = vmatprep.subr.mxu0 0.0
    %143 = vmatpush1.msra.mxu0 0.0
    %144 = vmatprep.subr.mxu0 0.0
    %145 = vmatpush1.msra.mxu0 0.0
    %146 = vmatprep.subr.mxu0 0.0
    %147 = vmatpush1.msra.mxu0 0.0
    %148 = vmatprep.subr.mxu0 0.0
    %149 = vmatpush1.msra.mxu0 0.0
    %150 = vmatprep.subr.mxu0 0.0
    %151 = vmatpush1.msra.mxu0 0.0
    %152 = vmatprep.mubr.f32.mxu0 0.0
    %153 = vmatmul.mubr.f32.gmra.mrb[0].mxu0 %v60
    %v154 = vpop.f32.mrb[0].mxu0
    %v155 = vadd.f32 0.0, %v154
    %v156 = vpop.f32.mrb[0].mxu0
    %v157 = vadd.f32 0.0, %v156
    %158 = vmatprep.mubr.f32.mxu0 0.0
    %159 = vmatmul.mubr.f32.gmra.mrb[0].mxu0 %v63
    %v160 = vpop.f32.mrb[0].mxu0
    %v161 = vadd.f32 0.0, %v160
    %v162 = vpop.f32.mrb[0].mxu0
    %v163 = vadd.f32 0.0, %v162
    %164 = vmatprep.mubr.f32.mxu0 0.0
    %165 = vmatmul.mubr.f32.gmra.mrb[0].mxu0 %v66
    %v166 = vpop.f32.mrb[0].mxu0
    %v167 = vadd.f32 0.0, %v166
    %v168 = vpop.f32.mrb[0].mxu0
    %v169 = vadd.f32 0.0, %v168
    %170 = vmatprep.mubr.f32.mxu0 0.0
    %171 = vmatmul.mubr.f32.gmra.mrb[0].mxu0 %v69
    %v172 = vpop.f32.mrb[0].mxu0
    %v173 = vadd.f32 0.0, %v172
    %v174 = vpop.f32.mrb[0].mxu0
    %v175 = vadd.f32 0.0, %v174
    %176 = vdwg.mxu0
    %177 = vmatprep.subr.mxu0 %v78
    %178 = vmatpush1.msra.mxu0 %v76
    %179 = vmatprep.subr.mxu0 0.0
    %180 = vmatpush1.msra.mxu0 0.0
    %181 = vmatprep.subr.mxu0 0.0
    %182 = vmatpush1.msra.mxu0 0.0
    %183 = vmatprep.subr.mxu0 0.0
    %184 = vmatpush1.msra.mxu0 0.0
    %185 = vmatprep.subr.mxu0 0.0
    %186 = vmatpush1.msra.mxu0 0.0
    %187 = vmatprep.subr.mxu0 0.0
    %188 = vmatpush1.msra.mxu0 0.0
    %189 = vmatprep.subr.mxu0 0.0
    %190 = vmatpush1.msra.mxu0 0.0
    %191 = vmatprep.subr.mxu0 0.0
    %192 = vmatpush1.msra.mxu0 0.0
    %193 = vmatprep.subr.mxu0 0.0
    %194 = vmatpush1.msra.mxu0 0.0
    %195 = vmatprep.subr.mxu0 0.0
    %196 = vmatpush1.msra.mxu0 0.0
    %197 = vmatprep.subr.mxu0 0.0
    %198 = vmatpush1.msra.mxu0 0.0
    %199 = vmatprep.subr.mxu0 0.0
    %200 = vmatpush1.msra.mxu0 0.0
    %201 = vmatprep.subr.mxu0 0.0
    %202 = vmatpush1.msra.mxu0 0.0
    %203 = vmatprep.subr.mxu0 0.0
    %204 = vmatpush1.msra.mxu0 0.0
    %205 = vmatprep.subr.mxu0 0.0
    %206 = vmatpush1.msra.mxu0 0.0
    %207 = vmatprep.subr.mxu0 0.0
    %208 = vmatpush1.msra.mxu0 0.0
    %209 = vmatprep.subr.mxu0 0.0
    %210 = vmatpush1.msra.mxu0 0.0
    %211 = vmatprep.subr.mxu0 0.0
    %212 = vmatpush1.msra.mxu0 0.0
    %213 = vmatprep.subr.mxu0 0.0
    %214 = vmatpush1.msra.mxu0 0.0
    %215 = vmatprep.subr.mxu0 0.0
    %216 = vmatpush1.msra.mxu0 0.0
    %217 = vmatprep.subr.mxu0 0.0
    %218 = vmatpush1.msra.mxu0 0.0
    %219 = vmatprep.subr.mxu0 0.0
    %220 = vmatpush1.msra.mxu0 0.0
    %221 = vmatprep.subr.mxu0 0.0
    %222 = vmatpush1.msra.mxu0 0.0
    %223 = vmatprep.subr.mxu0 0.0
    %224 = vmatpush1.msra.mxu0 0.0
    %225 = vmatprep.subr.mxu0 0.0
    %226 = vmatpush1.msra.mxu0 0.0
    %227 = vmatprep.subr.mxu0 0.0
    %228 = vmatpush1.msra.mxu0 0.0
    %229 = vmatprep.subr.mxu0 0.0
    %230 = vmatpush1.msra.mxu0 0.0
    %231 = vmatprep.subr.mxu0 0.0
    %232 = vmatpush1.msra.mxu0 0.0
    %233 = vmatprep.subr.mxu0 0.0
    %234 = vmatpush1.msra.mxu0 0.0
    %235 = vmatprep.subr.mxu0 0.0
    %236 = vmatpush1.msra.mxu0 0.0
    %237 = vmatprep.subr.mxu0 0.0
    %238 = vmatpush1.msra.mxu0 0.0
    %239 = vmatprep.subr.mxu0 0.0
    %240 = vmatpush1.msra.mxu0 0.0
    %241 = vmatprep.mubr.f32.mxu0 0.0
    %242 = vmatmul.mubr.f32.gmra.mrb[0].mxu0 %v60
    %v243 = vpop.f32.mrb[0].mxu0
    %v244 = vadd.f32 0.0, %v243
    %v245 = vpop.f32.mrb[0].mxu0
    %v246 = vadd.f32 0.0, %v245
    %247 = vmatprep.mubr.f32.mxu0 0.0
    %248 = vmatmul.mubr.f32.gmra.mrb[0].mxu0 %v63
    %v249 = vpop.f32.mrb[0].mxu0
    %v250 = vadd.f32 0.0, %v249
    %v251 = vpop.f32.mrb[0].mxu0
    %v252 = vadd.f32 0.0, %v251
    %253 = vmatprep.mubr.f32.mxu0 0.0
    %254 = vmatmul.mubr.f32.gmra.mrb[0].mxu0 %v66
    %v255 = vpop.f32.mrb[0].mxu0
    %v256 = vadd.f32 0.0, %v255
    %v257 = vpop.f32.mrb[0].mxu0
    %v258 = vadd.f32 0.0, %v257
    %259 = vmatprep.mubr.f32.mxu0 0.0
    %260 = vmatmul.mubr.f32.gmra.mrb[0].mxu0 %v69
    %v261 = vpop.f32.mrb[0].mxu0
    %v262 = vadd.f32 0.0, %v261
    %v263 = vpop.f32.mrb[0].mxu0
    %v264 = vadd.f32 0.0, %v263
    %265 = vdwg.mxu0
    %266 = vmatprep.subr.mxu0 %v82
    %267 = vmatpush1.msra.mxu0 %v80
    %268 = vmatprep.subr.mxu0 0.0
    %269 = vmatpush1.msra.mxu0 0.0
    %270 = vmatprep.subr.mxu0 0.0
    %271 = vmatpush1.msra.mxu0 0.0
    %272 = vmatprep.subr.mxu0 0.0
    %273 = vmatpush1.msra.mxu0 0.0
    %274 = vmatprep.subr.mxu0 0.0
    %275 = vmatpush1.msra.mxu0 0.0
    %276 = vmatprep.subr.mxu0 0.0
    %277 = vmatpush1.msra.mxu0 0.0
    %278 = vmatprep.subr.mxu0 0.0
    %279 = vmatpush1.msra.mxu0 0.0
    %280 = vmatprep.subr.mxu0 0.0
    %281 = vmatpush1.msra.mxu0 0.0
    %282 = vmatprep.subr.mxu0 0.0
    %283 = vmatpush1.msra.mxu0 0.0
    %284 = vmatprep.subr.mxu0 0.0
    %285 = vmatpush1.msra.mxu0 0.0
    %286 = vmatprep.subr.mxu0 0.0
    %287 = vmatpush1.msra.mxu0 0.0
    %288 = vmatprep.subr.mxu0 0.0
    %289 = vmatpush1.msra.mxu0 0.0
    %290 = vmatprep.subr.mxu0 0.0
    %291 = vmatpush1.msra.mxu0 0.0
    %292 = vmatprep.subr.mxu0 0.0
    %293 = vmatpush1.msra.mxu0 0.0
    %294 = vmatprep.subr.mxu0 0.0
    %295 = vmatpush1.msra.mxu0 0.0
    %296 = vmatprep.subr.mxu0 0.0
    %297 = vmatpush1.msra.mxu0 0.0
    %298 = vmatprep.subr.mxu0 0.0
    %299 = vmatpush1.msra.mxu0 0.0
    %300 = vmatprep.subr.mxu0 0.0
    %301 = vmatpush1.msra.mxu0 0.0
    %302 = vmatprep.subr.mxu0 0.0
    %303 = vmatpush1.msra.mxu0 0.0
    %304 = vmatprep.subr.mxu0 0.0
    %305 = vmatpush1.msra.mxu0 0.0
    %306 = vmatprep.subr.mxu0 0.0
    %307 = vmatpush1.msra.mxu0 0.0
    %308 = vmatprep.subr.mxu0 0.0
    %309 = vmatpush1.msra.mxu0 0.0
    %310 = vmatprep.subr.mxu0 0.0
    %311 = vmatpush1.msra.mxu0 0.0
    %312 = vmatprep.subr.mxu0 0.0
    %313 = vmatpush1.msra.mxu0 0.0
    %314 = vmatprep.subr.mxu0 0.0
    %315 = vmatpush1.msra.mxu0 0.0
    %316 = vmatprep.subr.mxu0 0.0
    %317 = vmatpush1.msra.mxu0 0.0
    %318 = vmatprep.subr.mxu0 0.0
    %319 = vmatpush1.msra.mxu0 0.0
    %320 = vmatprep.subr.mxu0 0.0
    %321 = vmatpush1.msra.mxu0 0.0
    %322 = vmatprep.subr.mxu0 0.0
    %323 = vmatpush1.msra.mxu0 0.0
    %324 = vmatprep.subr.mxu0 0.0
    %325 = vmatpush1.msra.mxu0 0.0
    %326 = vmatprep.subr.mxu0 0.0
    %327 = vmatpush1.msra.mxu0 0.0
    %328 = vmatprep.subr.mxu0 0.0
    %329 = vmatpush1.msra.mxu0 0.0
    %330 = vmatprep.mubr.f32.mxu0 0.0
    %331 = vmatmul.mubr.f32.gmra.mrb[0].mxu0 %v60
    %v332 = vpop.f32.mrb[0].mxu0
    %v333 = vadd.f32 0.0, %v332
    %v334 = vpop.f32.mrb[0].mxu0
    %v335 = vadd.f32 0.0, %v334
    %336 = vmatprep.mubr.f32.mxu0 0.0
    %337 = vmatmul.mubr.f32.gmra.mrb[0].mxu0 %v63
    %v338 = vpop.f32.mrb[0].mxu0
    %v339 = vadd.f32 0.0, %v338
    %v340 = vpop.f32.mrb[0].mxu0
    %v341 = vadd.f32 0.0, %v340
    %342 = vmatprep.mubr.f32.mxu0 0.0
    %343 = vmatmul.mubr.f32.gmra.mrb[0].mxu0 %v66
    %v344 = vpop.f32.mrb[0].mxu0
    %v345 = vadd.f32 0.0, %v344
    %v346 = vpop.f32.mrb[0].mxu0
    %v347 = vadd.f32 0.0, %v346
    %348 = vmatprep.mubr.f32.mxu0 0.0
    %349 = vmatmul.mubr.f32.gmra.mrb[0].mxu0 %v69
    %v350 = vpop.f32.mrb[0].mxu0
    %v351 = vadd.f32 0.0, %v350
    %v352 = vpop.f32.mrb[0].mxu0
    %v353 = vadd.f32 0.0, %v352
    %354 = vdwg.mxu0
    %355 = vmatprep.subr.mxu0 %v86
    %356 = vmatpush1.msra.mxu0 %v84
    %357 = vmatprep.subr.mxu0 0.0
    %358 = vmatpush1.msra.mxu0 0.0
    %359 = vmatprep.subr.mxu0 0.0
    %360 = vmatpush1.msra.mxu0 0.0
    %361 = vmatprep.subr.mxu0 0.0
    %362 = vmatpush1.msra.mxu0 0.0
    %363 = vmatprep.subr.mxu0 0.0
    %364 = vmatpush1.msra.mxu0 0.0
    %365 = vmatprep.subr.mxu0 0.0
    %366 = vmatpush1.msra.mxu0 0.0
    %367 = vmatprep.subr.mxu0 0.0
    %368 = vmatpush1.msra.mxu0 0.0
    %369 = vmatprep.subr.mxu0 0.0
    %370 = vmatpush1.msra.mxu0 0.0
    %371 = vmatprep.subr.mxu0 0.0
    %372 = vmatpush1.msra.mxu0 0.0
    %373 = vmatprep.subr.mxu0 0.0
    %374 = vmatpush1.msra.mxu0 0.0
    %375 = vmatprep.subr.mxu0 0.0
    %376 = vmatpush1.msra.mxu0 0.0
    %377 = vmatprep.subr.mxu0 0.0
    %378 = vmatpush1.msra.mxu0 0.0
    %379 = vmatprep.subr.mxu0 0.0
    %380 = vmatpush1.msra.mxu0 0.0
    %381 = vmatprep.subr.mxu0 0.0
    %382 = vmatpush1.msra.mxu0 0.0
    %383 = vmatprep.subr.mxu0 0.0
    %384 = vmatpush1.msra.mxu0 0.0
    %385 = vmatprep.subr.mxu0 0.0
    %386 = vmatpush1.msra.mxu0 0.0
    %387 = vmatprep.subr.mxu0 0.0
    %388 = vmatpush1.msra.mxu0 0.0
    %389 = vmatprep.subr.mxu0 0.0
    %390 = vmatpush1.msra.mxu0 0.0
    %391 = vmatprep.subr.mxu0 0.0
    %392 = vmatpush1.msra.mxu0 0.0
    %393 = vmatprep.subr.mxu0 0.0
    %394 = vmatpush1.msra.mxu0 0.0
    %395 = vmatprep.subr.mxu0 0.0
    %396 = vmatpush1.msra.mxu0 0.0
    %397 = vmatprep.subr.mxu0 0.0
    %398 = vmatpush1.msra.mxu0 0.0
    %399 = vmatprep.subr.mxu0 0.0
    %400 = vmatpush1.msra.mxu0 0.0
    %401 = vmatprep.subr.mxu0 0.0
    %402 = vmatpush1.msra.mxu0 0.0
    %403 = vmatprep.subr.mxu0 0.0
    %404 = vmatpush1.msra.mxu0 0.0
    %405 = vmatprep.subr.mxu0 0.0
    %406 = vmatpush1.msra.mxu0 0.0
    %407 = vmatprep.subr.mxu0 0.0
    %408 = vmatpush1.msra.mxu0 0.0
    %409 = vmatprep.subr.mxu0 0.0
    %410 = vmatpush1.msra.mxu0 0.0
    %411 = vmatprep.subr.mxu0 0.0
    %412 = vmatpush1.msra.mxu0 0.0
    %413 = vmatprep.subr.mxu0 0.0
    %414 = vmatpush1.msra.mxu0 0.0
    %415 = vmatprep.subr.mxu0 0.0
    %416 = vmatpush1.msra.mxu0 0.0
    %417 = vmatprep.subr.mxu0 0.0
    %418 = vmatpush1.msra.mxu0 0.0
    %419 = vmatprep.mubr.f32.mxu0 0.0
    %420 = vmatmul.mubr.f32.gmra.mrb[0].mxu0 %v60
    %v421 = vpop.f32.mrb[0].mxu0
    %v422 = vadd.f32 0.0, %v421
    %v423 = vpop.f32.mrb[0].mxu0
    %v424 = vadd.f32 0.0, %v423
    %425 = vmatprep.mubr.f32.mxu0 0.0
    %426 = vmatmul.mubr.f32.gmra.mrb[0].mxu0 %v63
    %v427 = vpop.f32.mrb[0].mxu0
    %v428 = vadd.f32 0.0, %v427
    %v429 = vpop.f32.mrb[0].mxu0
    %v430 = vadd.f32 0.0, %v429
    %431 = vmatprep.mubr.f32.mxu0 0.0
    %432 = vmatmul.mubr.f32.gmra.mrb[0].mxu0 %v66
    %v433 = vpop.f32.mrb[0].mxu0
    %v434 = vadd.f32 0.0, %v433
    %v435 = vpop.f32.mrb[0].mxu0
    %v436 = vadd.f32 0.0, %v435
    %437 = vmatprep.mubr.f32.mxu0 0.0
    %438 = vmatmul.mubr.f32.gmra.mrb[0].mxu0 %v69
    %v439 = vpop.f32.mrb[0].mxu0
    %v440 = vadd.f32 0.0, %v439
    %v441 = vpop.f32.mrb[0].mxu0
    %v442 = vadd.f32 0.0, %v441
    %443 = vdwg.mxu0
    %v444 = vtanh.pop %v155
    %v445 = vtanh.pop %v157
    %v446 = vtanh.pop %v244
    %v447 = vtanh.pop %v246
    %v448 = vtanh.pop %v333
    %v449 = vtanh.pop %v335
    %v450 = vtanh.pop %v422
    %v451 = vtanh.pop %v424
    %v452 = vtanh.pop %v161
    %v453 = vtanh.pop %v163
    %v454 = vtanh.pop %v250
    %v455 = vtanh.pop %v252
    %v456 = vtanh.pop %v339
    %v457 = vtanh.pop %v341
    %v458 = vtanh.pop %v428
    %v459 = vtanh.pop %v430
    %v460 = vtanh.pop %v167
    %v461 = vtanh.pop %v169
    %v462 = vtanh.pop %v256
    %v463 = vtanh.pop %v258
    %v464 = vtanh.pop %v345
    %v465 = vtanh.pop %v347
    %v466 = vtanh.pop %v434
    %v467 = vtanh.pop %v436
    %v468 = vtanh.pop %v173
    %v469 = vtanh.pop %v175
    %v470 = vtanh.pop %v262
    %v471 = vtanh.pop %v264
    %v472 = vtanh.pop %v351
    %v473 = vtanh.pop %v353
    %v474 = vtanh.pop %v440
    %v475 = vtanh.pop %v442
    %476 = vset.pattern.permute.xlu0 4
    %477 = vperm.xlu0 %476, %v43
    %v478 = vpop.permute.xlu0 %477
    %480 = vset.pattern.permute.xlu0 4
    %481 = vperm.xlu0 %480, %v45
    %v482 = vpop.permute.xlu0 %481
    %484 = vset.pattern.permute.xlu0 4
    %485 = vperm.xlu0 %484, %v47
    %v486 = vpop.permute.xlu0 %485
    %488 = vset.pattern.permute.xlu0 4
    %489 = vperm.xlu0 %488, %v49
    %v490 = vpop.permute.xlu0 %489
    %vm492 = vcmask 261120
    %v494 = vsel %vm492, %v42, 0
    %v497 = vsel %vm492, %v44, 0
    %v500 = vsel %vm492, %v46, 0
    %v503 = vsel %vm492, %v48, 0
    %505 = vmatprep.subr.mxu0 %v445
    %506 = vmatpush1.msra.mxu0 %v444
    %507 = vmatprep.subr.mxu0 %v453
    %508 = vmatpush1.msra.mxu0 %v452
    %509 = vmatprep.subr.mxu0 %v461
    %510 = vmatpush1.msra.mxu0 %v460
    %511 = vmatprep.subr.mxu0 %v469
    %512 = vmatpush1.msra.mxu0 %v468
    %513 = vmatprep.subr.mxu0 0.0
    %514 = vmatpush1.msra.mxu0 0.0
    %515 = vmatprep.subr.mxu0 0.0
    %516 = vmatpush1.msra.mxu0 0.0
    %517 = vmatprep.subr.mxu0 0.0
    %518 = vmatpush1.msra.mxu0 0.0
    %519 = vmatprep.subr.mxu0 0.0
    %520 = vmatpush1.msra.mxu0 0.0
    %521 = vmatprep.subr.mxu0 0.0
    %522 = vmatpush1.msra.mxu0 0.0
    %523 = vmatprep.subr.mxu0 0.0
    %524 = vmatpush1.msra.mxu0 0.0
    %525 = vmatprep.subr.mxu0 0.0
    %526 = vmatpush1.msra.mxu0 0.0
    %527 = vmatprep.subr.mxu0 0.0
    %528 = vmatpush1.msra.mxu0 0.0
    %529 = vmatprep.subr.mxu0 0.0
    %530 = vmatpush1.msra.mxu0 0.0
    %531 = vmatprep.subr.mxu0 0.0
    %532 = vmatpush1.msra.mxu0 0.0
    %533 = vmatprep.subr.mxu0 0.0
    %534 = vmatpush1.msra.mxu0 0.0
    %535 = vmatprep.subr.mxu0 0.0
    %536 = vmatpush1.msra.mxu0 0.0
    %537 = vmatprep.subr.mxu0 0.0
    %538 = vmatpush1.msra.mxu0 0.0
    %539 = vmatprep.subr.mxu0 0.0
    %540 = vmatpush1.msra.mxu0 0.0
    %541 = vmatprep.subr.mxu0 0.0
    %542 = vmatpush1.msra.mxu0 0.0
    %543 = vmatprep.subr.mxu0 0.0
    %544 = vmatpush1.msra.mxu0 0.0
    %545 = vmatprep.subr.mxu0 0.0
    %546 = vmatpush1.msra.mxu0 0.0
    %547 = vmatprep.subr.mxu0 0.0
    %548 = vmatpush1.msra.mxu0 0.0
    %549 = vmatprep.subr.mxu0 0.0
    %550 = vmatpush1.msra.mxu0 0.0
    %551 = vmatprep.subr.mxu0 0.0
    %552 = vmatpush1.msra.mxu0 0.0
    %553 = vmatprep.subr.mxu0 0.0
    %554 = vmatpush1.msra.mxu0 0.0
    %555 = vmatprep.subr.mxu0 0.0
    %556 = vmatpush1.msra.mxu0 0.0
    %557 = vmatprep.subr.mxu0 0.0
    %558 = vmatpush1.msra.mxu0 0.0
    %559 = vmatprep.subr.mxu0 0.0
    %560 = vmatpush1.msra.mxu0 0.0
    %561 = vmatprep.subr.mxu0 0.0
    %562 = vmatpush1.msra.mxu0 0.0
    %563 = vmatprep.subr.mxu0 0.0
    %564 = vmatpush1.msra.mxu0 0.0
    %565 = vmatprep.subr.mxu0 0.0
    %566 = vmatpush1.msra.mxu0 0.0
    %567 = vmatprep.subr.mxu0 0.0
    %568 = vmatpush1.msra.mxu0 0.0
    %569 = vmatprep.mubr.f32.mxu0 0.0
    %570 = vmatmul.mubr.f32.gmra.mrb[0].mxu0 %v494
    %v571 = vpop.f32.mrb[0].mxu0
    %v572 = vadd.f32 %v478, %v571
    %v573 = vpop.f32.mrb[0].mxu0
    %v574 = vadd.f32 %v478, %v573
    %575 = vmatprep.mubr.f32.mxu0 0.0
    %576 = vmatmul.mubr.f32.gmra.mrb[0].mxu0 %v497
    %v577 = vpop.f32.mrb[0].mxu0
    %v578 = vadd.f32 %v482, %v577
    %v579 = vpop.f32.mrb[0].mxu0
    %v580 = vadd.f32 %v482, %v579
    %581 = vmatprep.mubr.f32.mxu0 0.0
    %582 = vmatmul.mubr.f32.gmra.mrb[0].mxu0 %v500
    %v583 = vpop.f32.mrb[0].mxu0
    %v584 = vadd.f32 %v486, %v583
    %v585 = vpop.f32.mrb[0].mxu0
    %v586 = vadd.f32 %v486, %v585
    %587 = vmatprep.mubr.f32.mxu0 0.0
    %588 = vmatmul.mubr.f32.gmra.mrb[0].mxu0 %v503
    %v589 = vpop.f32.mrb[0].mxu0
    %v590 = vadd.f32 %v490, %v589
    %v591 = vpop.f32.mrb[0].mxu0
    %v592 = vadd.f32 %v490, %v591
    %593 = vdwg.mxu0
    %594 = vmatprep.subr.mxu0 %v447
    %595 = vmatpush1.msra.mxu0 %v446
    %596 = vmatprep.subr.mxu0 %v455
    %597 = vmatpush1.msra.mxu0 %v454
    %598 = vmatprep.subr.mxu0 %v463
    %599 = vmatpush1.msra.mxu0 %v462
    %600 = vmatprep.subr.mxu0 %v471
    %601 = vmatpush1.msra.mxu0 %v470
    %602 = vmatprep.subr.mxu0 0.0
    %603 = vmatpush1.msra.mxu0 0.0
    %604 = vmatprep.subr.mxu0 0.0
    %605 = vmatpush1.msra.mxu0 0.0
    %606 = vmatprep.subr.mxu0 0.0
    %607 = vmatpush1.msra.mxu0 0.0
    %608 = vmatprep.subr.mxu0 0.0
    %609 = vmatpush1.msra.mxu0 0.0
    %610 = vmatprep.subr.mxu0 0.0
    %611 = vmatpush1.msra.mxu0 0.0
    %612 = vmatprep.subr.mxu0 0.0
    %613 = vmatpush1.msra.mxu0 0.0
    %614 = vmatprep.subr.mxu0 0.0
    %615 = vmatpush1.msra.mxu0 0.0
    %616 = vmatprep.subr.mxu0 0.0
    %617 = vmatpush1.msra.mxu0 0.0
    %618 = vmatprep.subr.mxu0 0.0
    %619 = vmatpush1.msra.mxu0 0.0
    %620 = vmatprep.subr.mxu0 0.0
    %621 = vmatpush1.msra.mxu0 0.0
    %622 = vmatprep.subr.mxu0 0.0
    %623 = vmatpush1.msra.mxu0 0.0
    %624 = vmatprep.subr.mxu0 0.0
    %625 = vmatpush1.msra.mxu0 0.0
    %626 = vmatprep.subr.mxu0 0.0
    %627 = vmatpush1.msra.mxu0 0.0
    %628 = vmatprep.subr.mxu0 0.0
    %629 = vmatpush1.msra.mxu0 0.0
    %630 = vmatprep.subr.mxu0 0.0
    %631 = vmatpush1.msra.mxu0 0.0
    %632 = vmatprep.subr.mxu0 0.0
    %633 = vmatpush1.msra.mxu0 0.0
    %634 = vmatprep.subr.mxu0 0.0
    %635 = vmatpush1.msra.mxu0 0.0
    %636 = vmatprep.subr.mxu0 0.0
    %637 = vmatpush1.msra.mxu0 0.0
    %638 = vmatprep.subr.mxu0 0.0
    %639 = vmatpush1.msra.mxu0 0.0
    %640 = vmatprep.subr.mxu0 0.0
    %641 = vmatpush1.msra.mxu0 0.0
    %642 = vmatprep.subr.mxu0 0.0
    %643 = vmatpush1.msra.mxu0 0.0
    %644 = vmatprep.subr.mxu0 0.0
    %645 = vmatpush1.msra.mxu0 0.0
    %646 = vmatprep.subr.mxu0 0.0
    %647 = vmatpush1.msra.mxu0 0.0
    %648 = vmatprep.subr.mxu0 0.0
    %649 = vmatpush1.msra.mxu0 0.0
    %650 = vmatprep.subr.mxu0 0.0
    %651 = vmatpush1.msra.mxu0 0.0
    %652 = vmatprep.subr.mxu0 0.0
    %653 = vmatpush1.msra.mxu0 0.0
    %654 = vmatprep.subr.mxu0 0.0
    %655 = vmatpush1.msra.mxu0 0.0
    %656 = vmatprep.subr.mxu0 0.0
    %657 = vmatpush1.msra.mxu0 0.0
    %658 = vmatprep.mubr.f32.mxu0 0.0
    %659 = vmatmul.mubr.f32.gmra.mrb[0].mxu0 %v494
    %v660 = vpop.f32.mrb[0].mxu0
    %v661 = vadd.f32 %v478, %v660
    %v662 = vpop.f32.mrb[0].mxu0
    %v663 = vadd.f32 %v478, %v662
    %664 = vmatprep.mubr.f32.mxu0 0.0
    %665 = vmatmul.mubr.f32.gmra.mrb[0].mxu0 %v497
    %v666 = vpop.f32.mrb[0].mxu0
    %v667 = vadd.f32 %v482, %v666
    %v668 = vpop.f32.mrb[0].mxu0
    %v669 = vadd.f32 %v482, %v668
    %670 = vmatprep.mubr.f32.mxu0 0.0
    %671 = vmatmul.mubr.f32.gmra.mrb[0].mxu0 %v500
    %v672 = vpop.f32.mrb[0].mxu0
    %v673 = vadd.f32 %v486, %v672
    %v674 = vpop.f32.mrb[0].mxu0
    %v675 = vadd.f32 %v486, %v674
    %676 = vmatprep.mubr.f32.mxu0 0.0
    %677 = vmatmul.mubr.f32.gmra.mrb[0].mxu0 %v503
    %v678 = vpop.f32.mrb[0].mxu0
    %v679 = vadd.f32 %v490, %v678
    %v680 = vpop.f32.mrb[0].mxu0
    %v681 = vadd.f32 %v490, %v680
    %682 = vdwg.mxu0
    %683 = vmatprep.subr.mxu0 %v449
    %684 = vmatpush1.msra.mxu0 %v448
    %685 = vmatprep.subr.mxu0 %v457
    %686 = vmatpush1.msra.mxu0 %v456
    %687 = vmatprep.subr.mxu0 %v465
    %688 = vmatpush1.msra.mxu0 %v464
    %689 = vmatprep.subr.mxu0 %v473
    %690 = vmatpush1.msra.mxu0 %v472
    %691 = vmatprep.subr.mxu0 0.0
    %692 = vmatpush1.msra.mxu0 0.0
    %693 = vmatprep.subr.mxu0 0.0
    %694 = vmatpush1.msra.mxu0 0.0
    %695 = vmatprep.subr.mxu0 0.0
    %696 = vmatpush1.msra.mxu0 0.0
    %697 = vmatprep.subr.mxu0 0.0
    %698 = vmatpush1.msra.mxu0 0.0
    %699 = vmatprep.subr.mxu0 0.0
    %700 = vmatpush1.msra.mxu0 0.0
    %701 = vmatprep.subr.mxu0 0.0
    %702 = vmatpush1.msra.mxu0 0.0
    %703 = vmatprep.subr.mxu0 0.0
    %704 = vmatpush1.msra.mxu0 0.0
    %705 = vmatprep.subr.mxu0 0.0
    %706 = vmatpush1.msra.mxu0 0.0
    %707 = vmatprep.subr.mxu0 0.0
    %708 = vmatpush1.msra.mxu0 0.0
    %709 = vmatprep.subr.mxu0 0.0
    %710 = vmatpush1.msra.mxu0 0.0
    %711 = vmatprep.subr.mxu0 0.0
    %712 = vmatpush1.msra.mxu0 0.0
    %713 = vmatprep.subr.mxu0 0.0
    %714 = vmatpush1.msra.mxu0 0.0
    %715 = vmatprep.subr.mxu0 0.0
    %716 = vmatpush1.msra.mxu0 0.0
    %717 = vmatprep.subr.mxu0 0.0
    %718 = vmatpush1.msra.mxu0 0.0
    %719 = vmatprep.subr.mxu0 0.0
    %720 = vmatpush1.msra.mxu0 0.0
    %721 = vmatprep.subr.mxu0 0.0
    %722 = vmatpush1.msra.mxu0 0.0
    %723 = vmatprep.subr.mxu0 0.0
    %724 = vmatpush1.msra.mxu0 0.0
    %725 = vmatprep.subr.mxu0 0.0
    %726 = vmatpush1.msra.mxu0 0.0
    %727 = vmatprep.subr.mxu0 0.0
    %728 = vmatpush1.msra.mxu0 0.0
    %729 = vmatprep.subr.mxu0 0.0
    %730 = vmatpush1.msra.mxu0 0.0
    %731 = vmatprep.subr.mxu0 0.0
    %732 = vmatpush1.msra.mxu0 0.0
    %733 = vmatprep.subr.mxu0 0.0
    %734 = vmatpush1.msra.mxu0 0.0
    %735 = vmatprep.subr.mxu0 0.0
    %736 = vmatpush1.msra.mxu0 0.0
    %737 = vmatprep.subr.mxu0 0.0
    %738 = vmatpush1.msra.mxu0 0.0
    %739 = vmatprep.subr.mxu0 0.0
    %740 = vmatpush1.msra.mxu0 0.0
    %741 = vmatprep.subr.mxu0 0.0
    %742 = vmatpush1.msra.mxu0 0.0
    %743 = vmatprep.subr.mxu0 0.0
    %744 = vmatpush1.msra.mxu0 0.0
    %745 = vmatprep.subr.mxu0 0.0
    %746 = vmatpush1.msra.mxu0 0.0
    %747 = vmatprep.mubr.f32.mxu0 0.0
    %748 = vmatmul.mubr.f32.gmra.mrb[0].mxu0 %v494
    %v749 = vpop.f32.mrb[0].mxu0
    %v750 = vadd.f32 %v478, %v749
    %v751 = vpop.f32.mrb[0].mxu0
    %v752 = vadd.f32 %v478, %v751
    %753 = vmatprep.mubr.f32.mxu0 0.0
    %754 = vmatmul.mubr.f32.gmra.mrb[0].mxu0 %v497
    %v755 = vpop.f32.mrb[0].mxu0
    %v756 = vadd.f32 %v482, %v755
    %v757 = vpop.f32.mrb[0].mxu0
    %v758 = vadd.f32 %v482, %v757
    %759 = vmatprep.mubr.f32.mxu0 0.0
    %760 = vmatmul.mubr.f32.gmra.mrb[0].mxu0 %v500
    %v761 = vpop.f32.mrb[0].mxu0
    %v762 = vadd.f32 %v486, %v761
    %v763 = vpop.f32.mrb[0].mxu0
    %v764 = vadd.f32 %v486, %v763
    %765 = vmatprep.mubr.f32.mxu0 0.0
    %766 = vmatmul.mubr.f32.gmra.mrb[0].mxu0 %v503
    %v767 = vpop.f32.mrb[0].mxu0
    %v768 = vadd.f32 %v490, %v767
    %v769 = vpop.f32.mrb[0].mxu0
    %v770 = vadd.f32 %v490, %v769
    %771 = vdwg.mxu0
    %772 = vmatprep.subr.mxu0 %v451
    %773 = vmatpush1.msra.mxu0 %v450
    %774 = vmatprep.subr.mxu0 %v459
    %775 = vmatpush1.msra.mxu0 %v458
    %776 = vmatprep.subr.mxu0 %v467
    %777 = vmatpush1.msra.mxu0 %v466
    %778 = vmatprep.subr.mxu0 %v475
    %779 = vmatpush1.msra.mxu0 %v474
    %780 = vmatprep.subr.mxu0 0.0
    %781 = vmatpush1.msra.mxu0 0.0
    %782 = vmatprep.subr.mxu0 0.0
    %783 = vmatpush1.msra.mxu0 0.0
    %784 = vmatprep.subr.mxu0 0.0
    %785 = vmatpush1.msra.mxu0 0.0
    %786 = vmatprep.subr.mxu0 0.0
    %787 = vmatpush1.msra.mxu0 0.0
    %788 = vmatprep.subr.mxu0 0.0
    %789 = vmatpush1.msra.mxu0 0.0
    %790 = vmatprep.subr.mxu0 0.0
    %791 = vmatpush1.msra.mxu0 0.0
    %792 = vmatprep.subr.mxu0 0.0
    %793 = vmatpush1.msra.mxu0 0.0
    %794 = vmatprep.subr.mxu0 0.0
    %795 = vmatpush1.msra.mxu0 0.0
    %796 = vmatprep.subr.mxu0 0.0
    %797 = vmatpush1.msra.mxu0 0.0
    %798 = vmatprep.subr.mxu0 0.0
    %799 = vmatpush1.msra.mxu0 0.0
    %800 = vmatprep.subr.mxu0 0.0
    %801 = vmatpush1.msra.mxu0 0.0
    %802 = vmatprep.subr.mxu0 0.0
    %803 = vmatpush1.msra.mxu0 0.0
    %804 = vmatprep.subr.mxu0 0.0
    %805 = vmatpush1.msra.mxu0 0.0
    %806 = vmatprep.subr.mxu0 0.0
    %807 = vmatpush1.msra.mxu0 0.0
    %808 = vmatprep.subr.mxu0 0.0
    %809 = vmatpush1.msra.mxu0 0.0
    %810 = vmatprep.subr.mxu0 0.0
    %811 = vmatpush1.msra.mxu0 0.0
    %812 = vmatprep.subr.mxu0 0.0
    %813 = vmatpush1.msra.mxu0 0.0
    %814 = vmatprep.subr.mxu0 0.0
    %815 = vmatpush1.msra.mxu0 0.0
    %816 = vmatprep.subr.mxu0 0.0
    %817 = vmatpush1.msra.mxu0 0.0
    %818 = vmatprep.subr.mxu0 0.0
    %819 = vmatpush1.msra.mxu0 0.0
    %820 = vmatprep.subr.mxu0 0.0
    %821 = vmatpush1.msra.mxu0 0.0
    %822 = vmatprep.subr.mxu0 0.0
    %823 = vmatpush1.msra.mxu0 0.0
    %824 = vmatprep.subr.mxu0 0.0
    %825 = vmatpush1.msra.mxu0 0.0
    %826 = vmatprep.subr.mxu0 0.0
    %827 = vmatpush1.msra.mxu0 0.0
    %828 = vmatprep.subr.mxu0 0.0
    %829 = vmatpush1.msra.mxu0 0.0
    %830 = vmatprep.subr.mxu0 0.0
    %831 = vmatpush1.msra.mxu0 0.0
    %832 = vmatprep.subr.mxu0 0.0
    %833 = vmatpush1.msra.mxu0 0.0
    %834 = vmatprep.subr.mxu0 0.0
    %835 = vmatpush1.msra.mxu0 0.0
    %836 = vmatprep.mubr.f32.mxu0 0.0
    %837 = vmatmul.mubr.f32.gmra.mrb[0].mxu0 %v494
    %v838 = vpop.f32.mrb[0].mxu0
    %v839 = vadd.f32 %v478, %v838
    %v840 = vpop.f32.mrb[0].mxu0
    %v841 = vadd.f32 %v478, %v840
    %842 = vmatprep.mubr.f32.mxu0 0.0
    %843 = vmatmul.mubr.f32.gmra.mrb[0].mxu0 %v497
    %v844 = vpop.f32.mrb[0].mxu0
    %v845 = vadd.f32 %v482, %v844
    %v846 = vpop.f32.mrb[0].mxu0
    %v847 = vadd.f32 %v482, %v846
    %848 = vmatprep.mubr.f32.mxu0 0.0
    %849 = vmatmul.mubr.f32.gmra.mrb[0].mxu0 %v500
    %v850 = vpop.f32.mrb[0].mxu0
    %v851 = vadd.f32 %v486, %v850
    %v852 = vpop.f32.mrb[0].mxu0
    %v853 = vadd.f32 %v486, %v852
    %854 = vmatprep.mubr.f32.mxu0 0.0
    %855 = vmatmul.mubr.f32.gmra.mrb[0].mxu0 %v503
    %v856 = vpop.f32.mrb[0].mxu0
    %v857 = vadd.f32 %v490, %v856
    %v858 = vpop.f32.mrb[0].mxu0
    %v859 = vadd.f32 %v490, %v858
    %860 = vdwg.mxu0
    %v861 = vtanh.pop %v572
    %v862 = vtanh.pop %v574
    %v863 = vtanh.pop %v661
    %v864 = vtanh.pop %v663
    %v865 = vtanh.pop %v750
    %v866 = vtanh.pop %v752
    %v867 = vtanh.pop %v839
    %v868 = vtanh.pop %v841
    %v869 = vtanh.pop %v578
    %v870 = vtanh.pop %v580
    %v871 = vtanh.pop %v667
    %v872 = vtanh.pop %v669
    %v873 = vtanh.pop %v756
    %v874 = vtanh.pop %v758
    %v875 = vtanh.pop %v845
    %v876 = vtanh.pop %v847
    %v877 = vtanh.pop %v584
    %v878 = vtanh.pop %v586
    %v879 = vtanh.pop %v673
    %v880 = vtanh.pop %v675
    %v881 = vtanh.pop %v762
    %v882 = vtanh.pop %v764
    %v883 = vtanh.pop %v851
    %v884 = vtanh.pop %v853
    %v885 = vtanh.pop %v590
    %v886 = vtanh.pop %v592
    %v887 = vtanh.pop %v679
    %v888 = vtanh.pop %v681
    %v889 = vtanh.pop %v768
    %v890 = vtanh.pop %v770
    %v891 = vtanh.pop %v857
    %v892 = vtanh.pop %v859
    %v893 = vadd.f32 %v861, %v869
    %v894 = vadd.f32 %v893, %v877
    %v895 = vadd.f32 %v894, %v885
    %v896 = vrot.slane %v895, 4
    %v897 = vadd.f32 %v895, %v896
    %v898 = vrot.slane %v897, 2
    %v899 = vadd.f32 %v897, %v898
    %v900 = vrot.slane %v899, 1
    %v901 = vadd.f32 %v899, %v900
    %v902 = vadd.f32 %v862, %v870
    %v903 = vadd.f32 %v902, %v878
    %v904 = vadd.f32 %v903, %v886
    %v905 = vrot.slane %v904, 4
    %v906 = vadd.f32 %v904, %v905
    %v907 = vrot.slane %v906, 2
    %v908 = vadd.f32 %v906, %v907
    %v909 = vrot.slane %v908, 1
    %v910 = vadd.f32 %v908, %v909
    %v911 = vadd.f32 %v863, %v871
    %v912 = vadd.f32 %v911, %v879
    %v913 = vadd.f32 %v912, %v887
    %v914 = vrot.slane %v913, 4
    %v915 = vadd.f32 %v913, %v914
    %v916 = vrot.slane %v915, 2
    %v917 = vadd.f32 %v915, %v916
    %v918 = vrot.slane %v917, 1
    %v919 = vadd.f32 %v917, %v918
    %v920 = vadd.f32 %v864, %v872
    %v921 = vadd.f32 %v920, %v880
    %v922 = vadd.f32 %v921, %v888
    %v923 = vrot.slane %v922, 4
    %v924 = vadd.f32 %v922, %v923
    %v925 = vrot.slane %v924, 2
    %v926 = vadd.f32 %v924, %v925
    %v927 = vrot.slane %v926, 1
    %v928 = vadd.f32 %v926, %v927
    %v929 = vadd.f32 %v865, %v873
    %v930 = vadd.f32 %v929, %v881
    %v931 = vadd.f32 %v930, %v889
    %v932 = vrot.slane %v931, 4
    %v933 = vadd.f32 %v931, %v932
    %v934 = vrot.slane %v933, 2
    %v935 = vadd.f32 %v933, %v934
    %v936 = vrot.slane %v935, 1
    %v937 = vadd.f32 %v935, %v936
    %v938 = vadd.f32 %v866, %v874
    %v939 = vadd.f32 %v938, %v882
    %v940 = vadd.f32 %v939, %v890
    %v941 = vrot.slane %v940, 4
    %v942 = vadd.f32 %v940, %v941
    %v943 = vrot.slane %v942, 2
    %v944 = vadd.f32 %v942, %v943
    %v945 = vrot.slane %v944, 1
    %v946 = vadd.f32 %v944, %v945
    %v947 = vadd.f32 %v867, %v875
    %v948 = vadd.f32 %v947, %v883
    %v949 = vadd.f32 %v948, %v891
    %v950 = vrot.slane %v949, 4
    %v951 = vadd.f32 %v949, %v950
    %v952 = vrot.slane %v951, 2
    %v953 = vadd.f32 %v951, %v952
    %v954 = vrot.slane %v953, 1
    %v955 = vadd.f32 %v953, %v954
    %v956 = vadd.f32 %v868, %v876
    %v957 = vadd.f32 %v956, %v884
    %v958 = vadd.f32 %v957, %v892
    %v959 = vrot.slane %v958, 4
    %v960 = vadd.f32 %v958, %v959
    %v961 = vrot.slane %v960, 2
    %v962 = vadd.f32 %v960, %v961
    %v963 = vrot.slane %v962, 1
    %v964 = vadd.f32 %v962, %v963
    %v965 = vrcp.pop 32.0
    %v966 = vmul.f32 %v901, %v965
    %v967 = vmul.f32 %v910, %v965
    %v968 = vmul.f32 %v919, %v965
    %v969 = vmul.f32 %v928, %v965
    %v970 = vmul.f32 %v937, %v965
    %v971 = vmul.f32 %v946, %v965
    %v972 = vmul.f32 %v955, %v965
    %v973 = vmul.f32 %v964, %v965
    %v974 = vmul.f32 %v861, %v861
    %v975 = vmul.f32 %v862, %v862
    %v976 = vmul.f32 %v863, %v863
    %v977 = vmul.f32 %v864, %v864
    %v978 = vmul.f32 %v865, %v865
    %v979 = vmul.f32 %v866, %v866
    %v980 = vmul.f32 %v867, %v867
    %v981 = vmul.f32 %v868, %v868
    %v982 = vmul.f32 %v869, %v869
    %v983 = vmul.f32 %v870, %v870
    %v984 = vmul.f32 %v871, %v871
    %v985 = vmul.f32 %v872, %v872
    %v986 = vmul.f32 %v873, %v873
    %v987 = vmul.f32 %v874, %v874
    %v988 = vmul.f32 %v875, %v875
    %v989 = vmul.f32 %v876, %v876
    %v990 = vmul.f32 %v877, %v877
    %v991 = vmul.f32 %v878, %v878
    %v992 = vmul.f32 %v879, %v879
    %v993 = vmul.f32 %v880, %v880
    %v994 = vmul.f32 %v881, %v881
    %v995 = vmul.f32 %v882, %v882
    %v996 = vmul.f32 %v883, %v883
    %v997 = vmul.f32 %v884, %v884
    %v998 = vmul.f32 %v885, %v885
    %v999 = vmul.f32 %v886, %v886
    %v1000 = vmul.f32 %v887, %v887
    %v1001 = vmul.f32 %v888, %v888
    %v1002 = vmul.f32 %v889, %v889
    %v1003 = vmul.f32 %v890, %v890
    %v1004 = vmul.f32 %v891, %v891
    %v1005 = vmul.f32 %v892, %v892
    %v1006 = vadd.f32 %v974, %v982
    %v1007 = vadd.f32 %v1006, %v990
    %v1008 = vadd.f32 %v1007, %v998
    %v1009 = vrot.slane %v1008, 4
    %v1010 = vadd.f32 %v1008, %v1009
    %v1011 = vrot.slane %v1010, 2
    %v1012 = vadd.f32 %v1010, %v1011
    %v1013 = vrot.slane %v1012, 1
    %v1014 = vadd.f32 %v1012, %v1013
    %v1015 = vadd.f32 %v975, %v983
    %v1016 = vadd.f32 %v1015, %v991
    %v1017 = vadd.f32 %v1016, %v999
    %v1018 = vrot.slane %v1017, 4
    %v1019 = vadd.f32 %v1017, %v1018
    %v1020 = vrot.slane %v1019, 2
    %v1021 = vadd.f32 %v1019, %v1020
    %v1022 = vrot.slane %v1021, 1
    %v1023 = vadd.f32 %v1021, %v1022
    %v1024 = vadd.f32 %v976, %v984
    %v1025 = vadd.f32 %v1024, %v992
    %v1026 = vadd.f32 %v1025, %v1000
    %v1027 = vrot.slane %v1026, 4
    %v1028 = vadd.f32 %v1026, %v1027
    %v1029 = vrot.slane %v1028, 2
    %v1030 = vadd.f32 %v1028, %v1029
    %v1031 = vrot.slane %v1030, 1
    %v1032 = vadd.f32 %v1030, %v1031
    %v1033 = vadd.f32 %v977, %v985
    %v1034 = vadd.f32 %v1033, %v993
    %v1035 = vadd.f32 %v1034, %v1001
    %v1036 = vrot.slane %v1035, 4
    %v1037 = vadd.f32 %v1035, %v1036
    %v1038 = vrot.slane %v1037, 2
    %v1039 = vadd.f32 %v1037, %v1038
    %v1040 = vrot.slane %v1039, 1
    %v1041 = vadd.f32 %v1039, %v1040
    %v1042 = vadd.f32 %v978, %v986
    %v1043 = vadd.f32 %v1042, %v994
    %v1044 = vadd.f32 %v1043, %v1002
    %v1045 = vrot.slane %v1044, 4
    %v1046 = vadd.f32 %v1044, %v1045
    %v1047 = vrot.slane %v1046, 2
    %v1048 = vadd.f32 %v1046, %v1047
    %v1049 = vrot.slane %v1048, 1
    %v1050 = vadd.f32 %v1048, %v1049
    %v1051 = vadd.f32 %v979, %v987
    %v1052 = vadd.f32 %v1051, %v995
    %v1053 = vadd.f32 %v1052, %v1003
    %v1054 = vrot.slane %v1053, 4
    %v1055 = vadd.f32 %v1053, %v1054
    %v1056 = vrot.slane %v1055, 2
    %v1057 = vadd.f32 %v1055, %v1056
    %v1058 = vrot.slane %v1057, 1
    %v1059 = vadd.f32 %v1057, %v1058
    %v1060 = vadd.f32 %v980, %v988
    %v1061 = vadd.f32 %v1060, %v996
    %v1062 = vadd.f32 %v1061, %v1004
    %v1063 = vrot.slane %v1062, 4
    %v1064 = vadd.f32 %v1062, %v1063
    %v1065 = vrot.slane %v1064, 2
    %v1066 = vadd.f32 %v1064, %v1065
    %v1067 = vrot.slane %v1066, 1
    %v1068 = vadd.f32 %v1066, %v1067
    %v1069 = vadd.f32 %v981, %v989
    %v1070 = vadd.f32 %v1069, %v997
    %v1071 = vadd.f32 %v1070, %v1005
    %v1072 = vrot.slane %v1071, 4
    %v1073 = vadd.f32 %v1071, %v1072
    %v1074 = vrot.slane %v1073, 2
    %v1075 = vadd.f32 %v1073, %v1074
    %v1076 = vrot.slane %v1075, 1
    %v1077 = vadd.f32 %v1075, %v1076
    %v1078 = vmul.f32 %v1014, %v965
    %v1079 = vmul.f32 %v1023, %v965
    %v1080 = vmul.f32 %v1032, %v965
    %v1081 = vmul.f32 %v1041, %v965
    %v1082 = vmul.f32 %v1050, %v965
    %v1083 = vmul.f32 %v1059, %v965
    %v1084 = vmul.f32 %v1068, %v965
    %v1085 = vmul.f32 %v1077, %v965
    %v1086 = vmul.f32 %v966, %v966
    %v1087 = vmul.f32 %v967, %v967
    %v1088 = vmul.f32 %v968, %v968
    %v1089 = vmul.f32 %v969, %v969
    %v1090 = vmul.f32 %v970, %v970
    %v1091 = vmul.f32 %v971, %v971
    %v1092 = vmul.f32 %v972, %v972
    %v1093 = vmul.f32 %v973, %v973
    %v1094 = vsub.f32 %v1078, %v1086
    %v1095 = vsub.f32 %v1079, %v1087
    %v1096 = vsub.f32 %v1080, %v1088
    %v1097 = vsub.f32 %v1081, %v1089
    %v1098 = vsub.f32 %v1082, %v1090
    %v1099 = vsub.f32 %v1083, %v1091
    %v1100 = vsub.f32 %v1084, %v1092
    %v1101 = vsub.f32 %v1085, %v1093
    %v1102 = vmax.f32 %v1094, 0.0
    %v1103 = vmax.f32 %v1095, 0.0
    %v1104 = vmax.f32 %v1096, 0.0
    %v1105 = vmax.f32 %v1097, 0.0
    %v1106 = vmax.f32 %v1098, 0.0
    %v1107 = vmax.f32 %v1099, 0.0
    %v1108 = vmax.f32 %v1100, 0.0
    %v1109 = vmax.f32 %v1101, 0.0
    %v1110 = vsub.f32 %v861, %v966
    %v1111 = vsub.f32 %v862, %v967
    %v1112 = vsub.f32 %v863, %v968
    %v1113 = vsub.f32 %v864, %v969
    %v1114 = vsub.f32 %v865, %v970
    %v1115 = vsub.f32 %v866, %v971
    %v1116 = vsub.f32 %v867, %v972
    %v1117 = vsub.f32 %v868, %v973
    %v1118 = vsub.f32 %v869, %v966
    %v1119 = vsub.f32 %v870, %v967
    %v1120 = vsub.f32 %v871, %v968
    %v1121 = vsub.f32 %v872, %v969
    %v1122 = vsub.f32 %v873, %v970
    %v1123 = vsub.f32 %v874, %v971
    %v1124 = vsub.f32 %v875, %v972
    %v1125 = vsub.f32 %v876, %v973
    %v1126 = vsub.f32 %v877, %v966
    %v1127 = vsub.f32 %v878, %v967
    %v1128 = vsub.f32 %v879, %v968
    %v1129 = vsub.f32 %v880, %v969
    %v1130 = vsub.f32 %v881, %v970
    %v1131 = vsub.f32 %v882, %v971
    %v1132 = vsub.f32 %v883, %v972
    %v1133 = vsub.f32 %v884, %v973
    %v1134 = vsub.f32 %v885, %v966
    %v1135 = vsub.f32 %v886, %v967
    %v1136 = vsub.f32 %v887, %v968
    %v1137 = vsub.f32 %v888, %v969
    %v1138 = vsub.f32 %v889, %v970
    %v1139 = vsub.f32 %v890, %v971
    %v1140 = vsub.f32 %v891, %v972
    %v1141 = vsub.f32 %v892, %v973
    %v1142 = vadd.f32 %v1102, 1e-05
    %v1143 = vadd.f32 %v1103, 1e-05
    %v1144 = vadd.f32 %v1104, 1e-05
    %v1145 = vadd.f32 %v1105, 1e-05
    %v1146 = vadd.f32 %v1106, 1e-05
    %v1147 = vadd.f32 %v1107, 1e-05
    %v1148 = vadd.f32 %v1108, 1e-05
    %v1149 = vadd.f32 %v1109, 1e-05
    %v1150 = vrsqrt.pop %v1142
    %v1151 = vrsqrt.pop %v1143
    %v1152 = vrsqrt.pop %v1144
    %v1153 = vrsqrt.pop %v1145
    %v1154 = vrsqrt.pop %v1146
    %v1155 = vrsqrt.pop %v1147
    %v1156 = vrsqrt.pop %v1148
    %v1157 = vrsqrt.pop %v1149
    %v1158 = vmul.f32 %v1110, %v1150
    %v1159 = vmul.f32 %v1111, %v1151
    %v1160 = vmul.f32 %v1112, %v1152
    %v1161 = vmul.f32 %v1113, %v1153
    %v1162 = vmul.f32 %v1114, %v1154
    %v1163 = vmul.f32 %v1115, %v1155
    %v1164 = vmul.f32 %v1116, %v1156
    %v1165 = vmul.f32 %v1117, %v1157
    %v1166 = vmul.f32 %v1118, %v1150
    %v1167 = vmul.f32 %v1119, %v1151
    %v1168 = vmul.f32 %v1120, %v1152
    %v1169 = vmul.f32 %v1121, %v1153
    %v1170 = vmul.f32 %v1122, %v1154
    %v1171 = vmul.f32 %v1123, %v1155
    %v1172 = vmul.f32 %v1124, %v1156
    %v1173 = vmul.f32 %v1125, %v1157
    %v1174 = vmul.f32 %v1126, %v1150
    %v1175 = vmul.f32 %v1127, %v1151
    %v1176 = vmul.f32 %v1128, %v1152
    %v1177 = vmul.f32 %v1129, %v1153
    %v1178 = vmul.f32 %v1130, %v1154
    %v1179 = vmul.f32 %v1131, %v1155
    %v1180 = vmul.f32 %v1132, %v1156
    %v1181 = vmul.f32 %v1133, %v1157
    %v1182 = vmul.f32 %v1134, %v1150
    %v1183 = vmul.f32 %v1135, %v1151
    %v1184 = vmul.f32 %v1136, %v1152
    %v1185 = vmul.f32 %v1137, %v1153
    %v1186 = vmul.f32 %v1138, %v1154
    %v1187 = vmul.f32 %v1139, %v1155
    %v1188 = vmul.f32 %v1140, %v1156
    %v1189 = vmul.f32 %v1141, %v1157
    %1190 = vset.pattern.permute.xlu0 5
    %1191 = vperm.xlu0 %1190, %v43
    %v1192 = vpop.permute.xlu0 %1191
    %1194 = vset.pattern.permute.xlu0 5
    %1195 = vperm.xlu0 %1194, %v45
    %v1196 = vpop.permute.xlu0 %1195
    %1198 = vset.pattern.permute.xlu0 5
    %1199 = vperm.xlu0 %1198, %v47
    %v1200 = vpop.permute.xlu0 %1199
    %1202 = vset.pattern.permute.xlu0 5
    %1203 = vperm.xlu0 %1202, %v49
    %v1204 = vpop.permute.xlu0 %1203
    %v1206 = vmul.f32 %v1158, %v1192
    %v1207 = vmul.f32 %v1159, %v1192
    %v1208 = vmul.f32 %v1160, %v1192
    %v1209 = vmul.f32 %v1161, %v1192
    %v1210 = vmul.f32 %v1162, %v1192
    %v1211 = vmul.f32 %v1163, %v1192
    %v1212 = vmul.f32 %v1164, %v1192
    %v1213 = vmul.f32 %v1165, %v1192
    %v1214 = vmul.f32 %v1166, %v1196
    %v1215 = vmul.f32 %v1167, %v1196
    %v1216 = vmul.f32 %v1168, %v1196
    %v1217 = vmul.f32 %v1169, %v1196
    %v1218 = vmul.f32 %v1170, %v1196
    %v1219 = vmul.f32 %v1171, %v1196
    %v1220 = vmul.f32 %v1172, %v1196
    %v1221 = vmul.f32 %v1173, %v1196
    %v1222 = vmul.f32 %v1174, %v1200
    %v1223 = vmul.f32 %v1175, %v1200
    %v1224 = vmul.f32 %v1176, %v1200
    %v1225 = vmul.f32 %v1177, %v1200
    %v1226 = vmul.f32 %v1178, %v1200
    %v1227 = vmul.f32 %v1179, %v1200
    %v1228 = vmul.f32 %v1180, %v1200
    %v1229 = vmul.f32 %v1181, %v1200
    %v1230 = vmul.f32 %v1182, %v1204
    %v1231 = vmul.f32 %v1183, %v1204
    %v1232 = vmul.f32 %v1184, %v1204
    %v1233 = vmul.f32 %v1185, %v1204
    %v1234 = vmul.f32 %v1186, %v1204
    %v1235 = vmul.f32 %v1187, %v1204
    %v1236 = vmul.f32 %v1188, %v1204
    %v1237 = vmul.f32 %v1189, %v1204
    %1238 = vset.pattern.permute.xlu0 6
    %1239 = vperm.xlu0 %1238, %v43
    %v1240 = vpop.permute.xlu0 %1239
    %1242 = vset.pattern.permute.xlu0 6
    %1243 = vperm.xlu0 %1242, %v45
    %v1244 = vpop.permute.xlu0 %1243
    %1246 = vset.pattern.permute.xlu0 6
    %1247 = vperm.xlu0 %1246, %v47
    %v1248 = vpop.permute.xlu0 %1247
    %1250 = vset.pattern.permute.xlu0 6
    %1251 = vperm.xlu0 %1250, %v49
    %v1252 = vpop.permute.xlu0 %1251
    %v1254 = vadd.f32 %v1206, %v1240
    %v1255 = vadd.f32 %v1207, %v1240
    %v1256 = vadd.f32 %v1208, %v1240
    %v1257 = vadd.f32 %v1209, %v1240
    %v1258 = vadd.f32 %v1210, %v1240
    %v1259 = vadd.f32 %v1211, %v1240
    %v1260 = vadd.f32 %v1212, %v1240
    %v1261 = vadd.f32 %v1213, %v1240
    %v1262 = vadd.f32 %v1214, %v1244
    %v1263 = vadd.f32 %v1215, %v1244
    %v1264 = vadd.f32 %v1216, %v1244
    %v1265 = vadd.f32 %v1217, %v1244
    %v1266 = vadd.f32 %v1218, %v1244
    %v1267 = vadd.f32 %v1219, %v1244
    %v1268 = vadd.f32 %v1220, %v1244
    %v1269 = vadd.f32 %v1221, %v1244
    %v1270 = vadd.f32 %v1222, %v1248
    %v1271 = vadd.f32 %v1223, %v1248
    %v1272 = vadd.f32 %v1224, %v1248
    %v1273 = vadd.f32 %v1225, %v1248
    %v1274 = vadd.f32 %v1226, %v1248
    %v1275 = vadd.f32 %v1227, %v1248
    %v1276 = vadd.f32 %v1228, %v1248
    %v1277 = vadd.f32 %v1229, %v1248
    %v1278 = vadd.f32 %v1230, %v1252
    %v1279 = vadd.f32 %v1231, %v1252
    %v1280 = vadd.f32 %v1232, %v1252
    %v1281 = vadd.f32 %v1233, %v1252
    %v1282 = vadd.f32 %v1234, %v1252
    %v1283 = vadd.f32 %v1235, %v1252
    %v1284 = vadd.f32 %v1236, %v1252
    %v1285 = vadd.f32 %v1237, %v1252
    %v1286 = vadd.f32 %v1254, %v444
    %v1287 = vadd.f32 %v1255, %v445
    %v1288 = vadd.f32 %v1256, %v446
    %v1289 = vadd.f32 %v1257, %v447
    %v1290 = vadd.f32 %v1258, %v448
    %v1291 = vadd.f32 %v1259, %v449
    %v1292 = vadd.f32 %v1260, %v450
    %v1293 = vadd.f32 %v1261, %v451
    %v1294 = vadd.f32 %v1262, %v452
    %v1295 = vadd.f32 %v1263, %v453
    %v1296 = vadd.f32 %v1264, %v454
    %v1297 = vadd.f32 %v1265, %v455
    %v1298 = vadd.f32 %v1266, %v456
    %v1299 = vadd.f32 %v1267, %v457
    %v1300 = vadd.f32 %v1268, %v458
    %v1301 = vadd.f32 %v1269, %v459
    %v1302 = vadd.f32 %v1270, %v460
    %v1303 = vadd.f32 %v1271, %v461
    %v1304 = vadd.f32 %v1272, %v462
    %v1305 = vadd.f32 %v1273, %v463
    %v1306 = vadd.f32 %v1274, %v464
    %v1307 = vadd.f32 %v1275, %v465
    %v1308 = vadd.f32 %v1276, %v466
    %v1309 = vadd.f32 %v1277, %v467
    %v1310 = vadd.f32 %v1278, %v468
    %v1311 = vadd.f32 %v1279, %v469
    %v1312 = vadd.f32 %v1280, %v470
    %v1313 = vadd.f32 %v1281, %v471
    %v1314 = vadd.f32 %v1282, %v472
    %v1315 = vadd.f32 %v1283, %v473
    %v1316 = vadd.f32 %v1284, %v474
    %v1317 = vadd.f32 %v1285, %v475
    %1318 = vset.pattern.permute.xlu0 7
    %1319 = vperm.xlu0 %1318, %v43
    %v1320 = vpop.permute.xlu0 %1319
    %1322 = vset.pattern.permute.xlu0 7
    %1323 = vperm.xlu0 %1322, %v45
    %v1324 = vpop.permute.xlu0 %1323
    %1326 = vset.pattern.permute.xlu0 7
    %1327 = vperm.xlu0 %1326, %v47
    %v1328 = vpop.permute.xlu0 %1327
    %1330 = vset.pattern.permute.xlu0 7
    %1331 = vperm.xlu0 %1330, %v49
    %v1332 = vpop.permute.xlu0 %1331
    %1334 = vrot.lane.b32.xlu0 %v42, 96
    %v1335 = vpop.permute.xlu0 %1334
    %1336 = vrot.lane.b32.xlu0 %v44, 96
    %v1337 = vpop.permute.xlu0 %1336
    %1338 = vrot.lane.b32.xlu0 %v46, 96
    %v1339 = vpop.permute.xlu0 %1338
    %1340 = vrot.lane.b32.xlu0 %v48, 96
    %v1341 = vpop.permute.xlu0 %1340
    %v1342 = vsel %vm492, %v1335, 0
    %v1344 = vsel %vm492, %v1337, 0
    %v1346 = vsel %vm492, %v1339, 0
    %v1348 = vsel %vm492, %v1341, 0
    %1350 = vmatprep.subr.mxu0 %v1287
    %1351 = vmatpush1.msra.mxu0 %v1286
    %1352 = vmatprep.subr.mxu0 %v1295
    %1353 = vmatpush1.msra.mxu0 %v1294
    %1354 = vmatprep.subr.mxu0 %v1303
    %1355 = vmatpush1.msra.mxu0 %v1302
    %1356 = vmatprep.subr.mxu0 %v1311
    %1357 = vmatpush1.msra.mxu0 %v1310
    %1358 = vmatprep.subr.mxu0 0.0
    %1359 = vmatpush1.msra.mxu0 0.0
    %1360 = vmatprep.subr.mxu0 0.0
    %1361 = vmatpush1.msra.mxu0 0.0
    %1362 = vmatprep.subr.mxu0 0.0
    %1363 = vmatpush1.msra.mxu0 0.0
    %1364 = vmatprep.subr.mxu0 0.0
    %1365 = vmatpush1.msra.mxu0 0.0
    %1366 = vmatprep.subr.mxu0 0.0
    %1367 = vmatpush1.msra.mxu0 0.0
    %1368 = vmatprep.subr.mxu0 0.0
    %1369 = vmatpush1.msra.mxu0 0.0
    %1370 = vmatprep.subr.mxu0 0.0
    %1371 = vmatpush1.msra.mxu0 0.0
    %1372 = vmatprep.subr.mxu0 0.0
    %1373 = vmatpush1.msra.mxu0 0.0
    %1374 = vmatprep.subr.mxu0 0.0
    %1375 = vmatpush1.msra.mxu0 0.0
    %1376 = vmatprep.subr.mxu0 0.0
    %1377 = vmatpush1.msra.mxu0 0.0
    %1378 = vmatprep.subr.mxu0 0.0
    %1379 = vmatpush1.msra.mxu0 0.0
    %1380 = vmatprep.subr.mxu0 0.0
    %1381 = vmatpush1.msra.mxu0 0.0
    %1382 = vmatprep.subr.mxu0 0.0
    %1383 = vmatpush1.msra.mxu0 0.0
    %1384 = vmatprep.subr.mxu0 0.0
    %1385 = vmatpush1.msra.mxu0 0.0
    %1386 = vmatprep.subr.mxu0 0.0
    %1387 = vmatpush1.msra.mxu0 0.0
    %1388 = vmatprep.subr.mxu0 0.0
    %1389 = vmatpush1.msra.mxu0 0.0
    %1390 = vmatprep.subr.mxu0 0.0
    %1391 = vmatpush1.msra.mxu0 0.0
    %1392 = vmatprep.subr.mxu0 0.0
    %1393 = vmatpush1.msra.mxu0 0.0
    %1394 = vmatprep.subr.mxu0 0.0
    %1395 = vmatpush1.msra.mxu0 0.0
    %1396 = vmatprep.subr.mxu0 0.0
    %1397 = vmatpush1.msra.mxu0 0.0
    %1398 = vmatprep.subr.mxu0 0.0
    %1399 = vmatpush1.msra.mxu0 0.0
    %1400 = vmatprep.subr.mxu0 0.0
    %1401 = vmatpush1.msra.mxu0 0.0
    %1402 = vmatprep.subr.mxu0 0.0
    %1403 = vmatpush1.msra.mxu0 0.0
    %1404 = vmatprep.subr.mxu0 0.0
    %1405 = vmatpush1.msra.mxu0 0.0
    %1406 = vmatprep.subr.mxu0 0.0
    %1407 = vmatpush1.msra.mxu0 0.0
    %1408 = vmatprep.subr.mxu0 0.0
    %1409 = vmatpush1.msra.mxu0 0.0
    %1410 = vmatprep.subr.mxu0 0.0
    %1411 = vmatpush1.msra.mxu0 0.0
    %1412 = vmatprep.subr.mxu0 0.0
    %1413 = vmatpush1.msra.mxu0 0.0
    %1414 = vmatprep.mubr.f32.mxu0 0.0
    %1415 = vmatmul.mubr.f32.gmra.mrb[0].mxu0 %v1342
    %v1416 = vpop.f32.mrb[0].mxu0
    %v1417 = vadd.f32 %v1320, %v1416
    %v1418 = vpop.f32.mrb[0].mxu0
    %v1419 = vadd.f32 %v1320, %v1418
    %1420 = vmatprep.mubr.f32.mxu0 0.0
    %1421 = vmatmul.mubr.f32.gmra.mrb[0].mxu0 %v1344
    %v1422 = vpop.f32.mrb[0].mxu0
    %v1423 = vadd.f32 %v1324, %v1422
    %v1424 = vpop.f32.mrb[0].mxu0
    %v1425 = vadd.f32 %v1324, %v1424
    %1426 = vmatprep.mubr.f32.mxu0 0.0
    %1427 = vmatmul.mubr.f32.gmra.mrb[0].mxu0 %v1346
    %v1428 = vpop.f32.mrb[0].mxu0
    %v1429 = vadd.f32 %v1328, %v1428
    %v1430 = vpop.f32.mrb[0].mxu0
    %v1431 = vadd.f32 %v1328, %v1430
    %1432 = vmatprep.mubr.f32.mxu0 0.0
    %1433 = vmatmul.mubr.f32.gmra.mrb[0].mxu0 %v1348
    %v1434 = vpop.f32.mrb[0].mxu0
    %v1435 = vadd.f32 %v1332, %v1434
    %v1436 = vpop.f32.mrb[0].mxu0
    %v1437 = vadd.f32 %v1332, %v1436
    %1438 = vdwg.mxu0
    %1439 = vmatprep.subr.mxu0 %v1289
    %1440 = vmatpush1.msra.mxu0 %v1288
    %1441 = vmatprep.subr.mxu0 %v1297
    %1442 = vmatpush1.msra.mxu0 %v1296
    %1443 = vmatprep.subr.mxu0 %v1305
    %1444 = vmatpush1.msra.mxu0 %v1304
    %1445 = vmatprep.subr.mxu0 %v1313
    %1446 = vmatpush1.msra.mxu0 %v1312
    %1447 = vmatprep.subr.mxu0 0.0
    %1448 = vmatpush1.msra.mxu0 0.0
    %1449 = vmatprep.subr.mxu0 0.0
    %1450 = vmatpush1.msra.mxu0 0.0
    %1451 = vmatprep.subr.mxu0 0.0
    %1452 = vmatpush1.msra.mxu0 0.0
    %1453 = vmatprep.subr.mxu0 0.0
    %1454 = vmatpush1.msra.mxu0 0.0
    %1455 = vmatprep.subr.mxu0 0.0
    %1456 = vmatpush1.msra.mxu0 0.0
    %1457 = vmatprep.subr.mxu0 0.0
    %1458 = vmatpush1.msra.mxu0 0.0
    %1459 = vmatprep.subr.mxu0 0.0
    %1460 = vmatpush1.msra.mxu0 0.0
    %1461 = vmatprep.subr.mxu0 0.0
    %1462 = vmatpush1.msra.mxu0 0.0
    %1463 = vmatprep.subr.mxu0 0.0
    %1464 = vmatpush1.msra.mxu0 0.0
    %1465 = vmatprep.subr.mxu0 0.0
    %1466 = vmatpush1.msra.mxu0 0.0
    %1467 = vmatprep.subr.mxu0 0.0
    %1468 = vmatpush1.msra.mxu0 0.0
    %1469 = vmatprep.subr.mxu0 0.0
    %1470 = vmatpush1.msra.mxu0 0.0
    %1471 = vmatprep.subr.mxu0 0.0
    %1472 = vmatpush1.msra.mxu0 0.0
    %1473 = vmatprep.subr.mxu0 0.0
    %1474 = vmatpush1.msra.mxu0 0.0
    %1475 = vmatprep.subr.mxu0 0.0
    %1476 = vmatpush1.msra.mxu0 0.0
    %1477 = vmatprep.subr.mxu0 0.0
    %1478 = vmatpush1.msra.mxu0 0.0
    %1479 = vmatprep.subr.mxu0 0.0
    %1480 = vmatpush1.msra.mxu0 0.0
    %1481 = vmatprep.subr.mxu0 0.0
    %1482 = vmatpush1.msra.mxu0 0.0
    %1483 = vmatprep.subr.mxu0 0.0
    %1484 = vmatpush1.msra.mxu0 0.0
    %1485 = vmatprep.subr.mxu0 0.0
    %1486 = vmatpush1.msra.mxu0 0.0
    %1487 = vmatprep.subr.mxu0 0.0
    %1488 = vmatpush1.msra.mxu0 0.0
    %1489 = vmatprep.subr.mxu0 0.0
    %1490 = vmatpush1.msra.mxu0 0.0
    %1491 = vmatprep.subr.mxu0 0.0
    %1492 = vmatpush1.msra.mxu0 0.0
    %1493 = vmatprep.subr.mxu0 0.0
    %1494 = vmatpush1.msra.mxu0 0.0
    %1495 = vmatprep.subr.mxu0 0.0
    %1496 = vmatpush1.msra.mxu0 0.0
    %1497 = vmatprep.subr.mxu0 0.0
    %1498 = vmatpush1.msra.mxu0 0.0
    %1499 = vmatprep.subr.mxu0 0.0
    %1500 = vmatpush1.msra.mxu0 0.0
    %1501 = vmatprep.subr.mxu0 0.0
    %1502 = vmatpush1.msra.mxu0 0.0
    %1503 = vmatprep.mubr.f32.mxu0 0.0
    %1504 = vmatmul.mubr.f32.gmra.mrb[0].mxu0 %v1342
    %v1505 = vpop.f32.mrb[0].mxu0
    %v1506 = vadd.f32 %v1320, %v1505
    %v1507 = vpop.f32.mrb[0].mxu0
    %v1508 = vadd.f32 %v1320, %v1507
    %1509 = vmatprep.mubr.f32.mxu0 0.0
    %1510 = vmatmul.mubr.f32.gmra.mrb[0].mxu0 %v1344
    %v1511 = vpop.f32.mrb[0].mxu0
    %v1512 = vadd.f32 %v1324, %v1511
    %v1513 = vpop.f32.mrb[0].mxu0
    %v1514 = vadd.f32 %v1324, %v1513
    %1515 = vmatprep.mubr.f32.mxu0 0.0
    %1516 = vmatmul.mubr.f32.gmra.mrb[0].mxu0 %v1346
    %v1517 = vpop.f32.mrb[0].mxu0
    %v1518 = vadd.f32 %v1328, %v1517
    %v1519 = vpop.f32.mrb[0].mxu0
    %v1520 = vadd.f32 %v1328, %v1519
    %1521 = vmatprep.mubr.f32.mxu0 0.0
    %1522 = vmatmul.mubr.f32.gmra.mrb[0].mxu0 %v1348
    %v1523 = vpop.f32.mrb[0].mxu0
    %v1524 = vadd.f32 %v1332, %v1523
    %v1525 = vpop.f32.mrb[0].mxu0
    %v1526 = vadd.f32 %v1332, %v1525
    %1527 = vdwg.mxu0
    %1528 = vmatprep.subr.mxu0 %v1291
    %1529 = vmatpush1.msra.mxu0 %v1290
    %1530 = vmatprep.subr.mxu0 %v1299
    %1531 = vmatpush1.msra.mxu0 %v1298
    %1532 = vmatprep.subr.mxu0 %v1307
    %1533 = vmatpush1.msra.mxu0 %v1306
    %1534 = vmatprep.subr.mxu0 %v1315
    %1535 = vmatpush1.msra.mxu0 %v1314
    %1536 = vmatprep.subr.mxu0 0.0
    %1537 = vmatpush1.msra.mxu0 0.0
    %1538 = vmatprep.subr.mxu0 0.0
    %1539 = vmatpush1.msra.mxu0 0.0
    %1540 = vmatprep.subr.mxu0 0.0
    %1541 = vmatpush1.msra.mxu0 0.0
    %1542 = vmatprep.subr.mxu0 0.0
    %1543 = vmatpush1.msra.mxu0 0.0
    %1544 = vmatprep.subr.mxu0 0.0
    %1545 = vmatpush1.msra.mxu0 0.0
    %1546 = vmatprep.subr.mxu0 0.0
    %1547 = vmatpush1.msra.mxu0 0.0
    %1548 = vmatprep.subr.mxu0 0.0
    %1549 = vmatpush1.msra.mxu0 0.0
    %1550 = vmatprep.subr.mxu0 0.0
    %1551 = vmatpush1.msra.mxu0 0.0
    %1552 = vmatprep.subr.mxu0 0.0
    %1553 = vmatpush1.msra.mxu0 0.0
    %1554 = vmatprep.subr.mxu0 0.0
    %1555 = vmatpush1.msra.mxu0 0.0
    %1556 = vmatprep.subr.mxu0 0.0
    %1557 = vmatpush1.msra.mxu0 0.0
    %1558 = vmatprep.subr.mxu0 0.0
    %1559 = vmatpush1.msra.mxu0 0.0
    %1560 = vmatprep.subr.mxu0 0.0
    %1561 = vmatpush1.msra.mxu0 0.0
    %1562 = vmatprep.subr.mxu0 0.0
    %1563 = vmatpush1.msra.mxu0 0.0
    %1564 = vmatprep.subr.mxu0 0.0
    %1565 = vmatpush1.msra.mxu0 0.0
    %1566 = vmatprep.subr.mxu0 0.0
    %1567 = vmatpush1.msra.mxu0 0.0
    %1568 = vmatprep.subr.mxu0 0.0
    %1569 = vmatpush1.msra.mxu0 0.0
    %1570 = vmatprep.subr.mxu0 0.0
    %1571 = vmatpush1.msra.mxu0 0.0
    %1572 = vmatprep.subr.mxu0 0.0
    %1573 = vmatpush1.msra.mxu0 0.0
    %1574 = vmatprep.subr.mxu0 0.0
    %1575 = vmatpush1.msra.mxu0 0.0
    %1576 = vmatprep.subr.mxu0 0.0
    %1577 = vmatpush1.msra.mxu0 0.0
    %1578 = vmatprep.subr.mxu0 0.0
    %1579 = vmatpush1.msra.mxu0 0.0
    %1580 = vmatprep.subr.mxu0 0.0
    %1581 = vmatpush1.msra.mxu0 0.0
    %1582 = vmatprep.subr.mxu0 0.0
    %1583 = vmatpush1.msra.mxu0 0.0
    %1584 = vmatprep.subr.mxu0 0.0
    %1585 = vmatpush1.msra.mxu0 0.0
    %1586 = vmatprep.subr.mxu0 0.0
    %1587 = vmatpush1.msra.mxu0 0.0
    %1588 = vmatprep.subr.mxu0 0.0
    %1589 = vmatpush1.msra.mxu0 0.0
    %1590 = vmatprep.subr.mxu0 0.0
    %1591 = vmatpush1.msra.mxu0 0.0
    %1592 = vmatprep.mubr.f32.mxu0 0.0
    %1593 = vmatmul.mubr.f32.gmra.mrb[0].mxu0 %v1342
    %v1594 = vpop.f32.mrb[0].mxu0
    %v1595 = vadd.f32 %v1320, %v1594
    %v1596 = vpop.f32.mrb[0].mxu0
    %v1597 = vadd.f32 %v1320, %v1596
    %1598 = vmatprep.mubr.f32.mxu0 0.0
    %1599 = vmatmul.mubr.f32.gmra.mrb[0].mxu0 %v1344
    %v1600 = vpop.f32.mrb[0].mxu0
    %v1601 = vadd.f32 %v1324, %v1600
    %v1602 = vpop.f32.mrb[0].mxu0
    %v1603 = vadd.f32 %v1324, %v1602
    %1604 = vmatprep.mubr.f32.mxu0 0.0
    %1605 = vmatmul.mubr.f32.gmra.mrb[0].mxu0 %v1346
    %v1606 = vpop.f32.mrb[0].mxu0
    %v1607 = vadd.f32 %v1328, %v1606
    %v1608 = vpop.f32.mrb[0].mxu0
    %v1609 = vadd.f32 %v1328, %v1608
    %1610 = vmatprep.mubr.f32.mxu0 0.0
    %1611 = vmatmul.mubr.f32.gmra.mrb[0].mxu0 %v1348
    %v1612 = vpop.f32.mrb[0].mxu0
    %v1613 = vadd.f32 %v1332, %v1612
    %v1614 = vpop.f32.mrb[0].mxu0
    %v1615 = vadd.f32 %v1332, %v1614
    %1616 = vdwg.mxu0
    %1617 = vmatprep.subr.mxu0 %v1293
    %1618 = vmatpush1.msra.mxu0 %v1292
    %1619 = vmatprep.subr.mxu0 %v1301
    %1620 = vmatpush1.msra.mxu0 %v1300
    %1621 = vmatprep.subr.mxu0 %v1309
    %1622 = vmatpush1.msra.mxu0 %v1308
    %1623 = vmatprep.subr.mxu0 %v1317
    %1624 = vmatpush1.msra.mxu0 %v1316
    %1625 = vmatprep.subr.mxu0 0.0
    %1626 = vmatpush1.msra.mxu0 0.0
    %1627 = vmatprep.subr.mxu0 0.0
    %1628 = vmatpush1.msra.mxu0 0.0
    %1629 = vmatprep.subr.mxu0 0.0
    %1630 = vmatpush1.msra.mxu0 0.0
    %1631 = vmatprep.subr.mxu0 0.0
    %1632 = vmatpush1.msra.mxu0 0.0
    %1633 = vmatprep.subr.mxu0 0.0
    %1634 = vmatpush1.msra.mxu0 0.0
    %1635 = vmatprep.subr.mxu0 0.0
    %1636 = vmatpush1.msra.mxu0 0.0
    %1637 = vmatprep.subr.mxu0 0.0
    %1638 = vmatpush1.msra.mxu0 0.0
    %1639 = vmatprep.subr.mxu0 0.0
    %1640 = vmatpush1.msra.mxu0 0.0
    %1641 = vmatprep.subr.mxu0 0.0
    %1642 = vmatpush1.msra.mxu0 0.0
    %1643 = vmatprep.subr.mxu0 0.0
    %1644 = vmatpush1.msra.mxu0 0.0
    %1645 = vmatprep.subr.mxu0 0.0
    %1646 = vmatpush1.msra.mxu0 0.0
    %1647 = vmatprep.subr.mxu0 0.0
    %1648 = vmatpush1.msra.mxu0 0.0
    %1649 = vmatprep.subr.mxu0 0.0
    %1650 = vmatpush1.msra.mxu0 0.0
    %1651 = vmatprep.subr.mxu0 0.0
    %1652 = vmatpush1.msra.mxu0 0.0
    %1653 = vmatprep.subr.mxu0 0.0
    %1654 = vmatpush1.msra.mxu0 0.0
    %1655 = vmatprep.subr.mxu0 0.0
    %1656 = vmatpush1.msra.mxu0 0.0
    %1657 = vmatprep.subr.mxu0 0.0
    %1658 = vmatpush1.msra.mxu0 0.0
    %1659 = vmatprep.subr.mxu0 0.0
    %1660 = vmatpush1.msra.mxu0 0.0
    %1661 = vmatprep.subr.mxu0 0.0
    %1662 = vmatpush1.msra.mxu0 0.0
    %1663 = vmatprep.subr.mxu0 0.0
    %1664 = vmatpush1.msra.mxu0 0.0
    %1665 = vmatprep.subr.mxu0 0.0
    %1666 = vmatpush1.msra.mxu0 0.0
    %1667 = vmatprep.subr.mxu0 0.0
    %1668 = vmatpush1.msra.mxu0 0.0
    %1669 = vmatprep.subr.mxu0 0.0
    %1670 = vmatpush1.msra.mxu0 0.0
    %1671 = vmatprep.subr.mxu0 0.0
    %1672 = vmatpush1.msra.mxu0 0.0
    %1673 = vmatprep.subr.mxu0 0.0
    %1674 = vmatpush1.msra.mxu0 0.0
    %1675 = vmatprep.subr.mxu0 0.0
    %1676 = vmatpush1.msra.mxu0 0.0
    %1677 = vmatprep.subr.mxu0 0.0
    %1678 = vmatpush1.msra.mxu0 0.0
    %1679 = vmatprep.subr.mxu0 0.0
    %1680 = vmatpush1.msra.mxu0 0.0
    %1681 = vmatprep.mubr.f32.mxu0 0.0
    %1682 = vmatmul.mubr.f32.gmra.mrb[0].mxu0 %v1342
    %v1683 = vpop.f32.mrb[0].mxu0
    %v1684 = vadd.f32 %v1320, %v1683
    %v1685 = vpop.f32.mrb[0].mxu0
    %v1686 = vadd.f32 %v1320, %v1685
    %1687 = vmatprep.mubr.f32.mxu0 0.0
    %1688 = vmatmul.mubr.f32.gmra.mrb[0].mxu0 %v1344
    %v1689 = vpop.f32.mrb[0].mxu0
    %v1690 = vadd.f32 %v1324, %v1689
    %v1691 = vpop.f32.mrb[0].mxu0
    %v1692 = vadd.f32 %v1324, %v1691
    %1693 = vmatprep.mubr.f32.mxu0 0.0
    %1694 = vmatmul.mubr.f32.gmra.mrb[0].mxu0 %v1346
    %v1695 = vpop.f32.mrb[0].mxu0
    %v1696 = vadd.f32 %v1328, %v1695
    %v1697 = vpop.f32.mrb[0].mxu0
    %v1698 = vadd.f32 %v1328, %v1697
    %1699 = vmatprep.mubr.f32.mxu0 0.0
    %1700 = vmatmul.mubr.f32.gmra.mrb[0].mxu0 %v1348
    %v1701 = vpop.f32.mrb[0].mxu0
    %v1702 = vadd.f32 %v1332, %v1701
    %v1703 = vpop.f32.mrb[0].mxu0
    %v1704 = vadd.f32 %v1332, %v1703
    %1705 = vdwg.mxu0
    %v1706 = vtanh.pop %v1417
    %v1707 = vtanh.pop %v1419
    %v1708 = vtanh.pop %v1506
    %v1709 = vtanh.pop %v1508
    %v1710 = vtanh.pop %v1595
    %v1711 = vtanh.pop %v1597
    %v1712 = vtanh.pop %v1684
    %v1713 = vtanh.pop %v1686
    %v1714 = vtanh.pop %v1423
    %v1715 = vtanh.pop %v1425
    %v1716 = vtanh.pop %v1512
    %v1717 = vtanh.pop %v1514
    %v1718 = vtanh.pop %v1601
    %v1719 = vtanh.pop %v1603
    %v1720 = vtanh.pop %v1690
    %v1721 = vtanh.pop %v1692
    %v1722 = vtanh.pop %v1429
    %v1723 = vtanh.pop %v1431
    %v1724 = vtanh.pop %v1518
    %v1725 = vtanh.pop %v1520
    %v1726 = vtanh.pop %v1607
    %v1727 = vtanh.pop %v1609
    %v1728 = vtanh.pop %v1696
    %v1729 = vtanh.pop %v1698
    %v1730 = vtanh.pop %v1435
    %v1731 = vtanh.pop %v1437
    %v1732 = vtanh.pop %v1524
    %v1733 = vtanh.pop %v1526
    %v1734 = vtanh.pop %v1613
    %v1735 = vtanh.pop %v1615
    %v1736 = vtanh.pop %v1702
    %v1737 = vtanh.pop %v1704
    %v1738 = vadd.f32 %v1706, %v1714
    %v1739 = vadd.f32 %v1738, %v1722
    %v1740 = vadd.f32 %v1739, %v1730
    %v1741 = vrot.slane %v1740, 4
    %v1742 = vadd.f32 %v1740, %v1741
    %v1743 = vrot.slane %v1742, 2
    %v1744 = vadd.f32 %v1742, %v1743
    %v1745 = vrot.slane %v1744, 1
    %v1746 = vadd.f32 %v1744, %v1745
    %v1747 = vadd.f32 %v1707, %v1715
    %v1748 = vadd.f32 %v1747, %v1723
    %v1749 = vadd.f32 %v1748, %v1731
    %v1750 = vrot.slane %v1749, 4
    %v1751 = vadd.f32 %v1749, %v1750
    %v1752 = vrot.slane %v1751, 2
    %v1753 = vadd.f32 %v1751, %v1752
    %v1754 = vrot.slane %v1753, 1
    %v1755 = vadd.f32 %v1753, %v1754
    %v1756 = vadd.f32 %v1708, %v1716
    %v1757 = vadd.f32 %v1756, %v1724
    %v1758 = vadd.f32 %v1757, %v1732
    %v1759 = vrot.slane %v1758, 4
    %v1760 = vadd.f32 %v1758, %v1759
    %v1761 = vrot.slane %v1760, 2
    %v1762 = vadd.f32 %v1760, %v1761
    %v1763 = vrot.slane %v1762, 1
    %v1764 = vadd.f32 %v1762, %v1763
    %v1765 = vadd.f32 %v1709, %v1717
    %v1766 = vadd.f32 %v1765, %v1725
    %v1767 = vadd.f32 %v1766, %v1733
    %v1768 = vrot.slane %v1767, 4
    %v1769 = vadd.f32 %v1767, %v1768
    %v1770 = vrot.slane %v1769, 2
    %v1771 = vadd.f32 %v1769, %v1770
    %v1772 = vrot.slane %v1771, 1
    %v1773 = vadd.f32 %v1771, %v1772
    %v1774 = vadd.f32 %v1710, %v1718
    %v1775 = vadd.f32 %v1774, %v1726
    %v1776 = vadd.f32 %v1775, %v1734
    %v1777 = vrot.slane %v1776, 4
    %v1778 = vadd.f32 %v1776, %v1777
    %v1779 = vrot.slane %v1778, 2
    %v1780 = vadd.f32 %v1778, %v1779
    %v1781 = vrot.slane %v1780, 1
    %v1782 = vadd.f32 %v1780, %v1781
    %v1783 = vadd.f32 %v1711, %v1719
    %v1784 = vadd.f32 %v1783, %v1727
    %v1785 = vadd.f32 %v1784, %v1735
    %v1786 = vrot.slane %v1785, 4
    %v1787 = vadd.f32 %v1785, %v1786
    %v1788 = vrot.slane %v1787, 2
    %v1789 = vadd.f32 %v1787, %v1788
    %v1790 = vrot.slane %v1789, 1
    %v1791 = vadd.f32 %v1789, %v1790
    %v1792 = vadd.f32 %v1712, %v1720
    %v1793 = vadd.f32 %v1792, %v1728
    %v1794 = vadd.f32 %v1793, %v1736
    %v1795 = vrot.slane %v1794, 4
    %v1796 = vadd.f32 %v1794, %v1795
    %v1797 = vrot.slane %v1796, 2
    %v1798 = vadd.f32 %v1796, %v1797
    %v1799 = vrot.slane %v1798, 1
    %v1800 = vadd.f32 %v1798, %v1799
    %v1801 = vadd.f32 %v1713, %v1721
    %v1802 = vadd.f32 %v1801, %v1729
    %v1803 = vadd.f32 %v1802, %v1737
    %v1804 = vrot.slane %v1803, 4
    %v1805 = vadd.f32 %v1803, %v1804
    %v1806 = vrot.slane %v1805, 2
    %v1807 = vadd.f32 %v1805, %v1806
    %v1808 = vrot.slane %v1807, 1
    %v1809 = vadd.f32 %v1807, %v1808
    %v1810 = vmul.f32 %v1746, %v965
    %v1811 = vmul.f32 %v1755, %v965
    %v1812 = vmul.f32 %v1764, %v965
    %v1813 = vmul.f32 %v1773, %v965
    %v1814 = vmul.f32 %v1782, %v965
    %v1815 = vmul.f32 %v1791, %v965
    %v1816 = vmul.f32 %v1800, %v965
    %v1817 = vmul.f32 %v1809, %v965
    %v1818 = vmul.f32 %v1706, %v1706
    %v1819 = vmul.f32 %v1707, %v1707
    %v1820 = vmul.f32 %v1708, %v1708
    %v1821 = vmul.f32 %v1709, %v1709
    %v1822 = vmul.f32 %v1710, %v1710
    %v1823 = vmul.f32 %v1711, %v1711
    %v1824 = vmul.f32 %v1712, %v1712
    %v1825 = vmul.f32 %v1713, %v1713
    %v1826 = vmul.f32 %v1714, %v1714
    %v1827 = vmul.f32 %v1715, %v1715
    %v1828 = vmul.f32 %v1716, %v1716
    %v1829 = vmul.f32 %v1717, %v1717
    %v1830 = vmul.f32 %v1718, %v1718
    %v1831 = vmul.f32 %v1719, %v1719
    %v1832 = vmul.f32 %v1720, %v1720
    %v1833 = vmul.f32 %v1721, %v1721
    %v1834 = vmul.f32 %v1722, %v1722
    %v1835 = vmul.f32 %v1723, %v1723
    %v1836 = vmul.f32 %v1724, %v1724
    %v1837 = vmul.f32 %v1725, %v1725
    %v1838 = vmul.f32 %v1726, %v1726
    %v1839 = vmul.f32 %v1727, %v1727
    %v1840 = vmul.f32 %v1728, %v1728
    %v1841 = vmul.f32 %v1729, %v1729
    %v1842 = vmul.f32 %v1730, %v1730
    %v1843 = vmul.f32 %v1731, %v1731
    %v1844 = vmul.f32 %v1732, %v1732
    %v1845 = vmul.f32 %v1733, %v1733
    %v1846 = vmul.f32 %v1734, %v1734
    %v1847 = vmul.f32 %v1735, %v1735
    %v1848 = vmul.f32 %v1736, %v1736
    %v1849 = vmul.f32 %v1737, %v1737
    %v1850 = vadd.f32 %v1818, %v1826
    %v1851 = vadd.f32 %v1850, %v1834
    %v1852 = vadd.f32 %v1851, %v1842
    %v1853 = vrot.slane %v1852, 4
    %v1854 = vadd.f32 %v1852, %v1853
    %v1855 = vrot.slane %v1854, 2
    %v1856 = vadd.f32 %v1854, %v1855
    %v1857 = vrot.slane %v1856, 1
    %v1858 = vadd.f32 %v1856, %v1857
    %v1859 = vadd.f32 %v1819, %v1827
    %v1860 = vadd.f32 %v1859, %v1835
    %v1861 = vadd.f32 %v1860, %v1843
    %v1862 = vrot.slane %v1861, 4
    %v1863 = vadd.f32 %v1861, %v1862
    %v1864 = vrot.slane %v1863, 2
    %v1865 = vadd.f32 %v1863, %v1864
    %v1866 = vrot.slane %v1865, 1
    %v1867 = vadd.f32 %v1865, %v1866
    %v1868 = vadd.f32 %v1820, %v1828
    %v1869 = vadd.f32 %v1868, %v1836
    %v1870 = vadd.f32 %v1869, %v1844
    %v1871 = vrot.slane %v1870, 4
    %v1872 = vadd.f32 %v1870, %v1871
    %v1873 = vrot.slane %v1872, 2
    %v1874 = vadd.f32 %v1872, %v1873
    %v1875 = vrot.slane %v1874, 1
    %v1876 = vadd.f32 %v1874, %v1875
    %v1877 = vadd.f32 %v1821, %v1829
    %v1878 = vadd.f32 %v1877, %v1837
    %v1879 = vadd.f32 %v1878, %v1845
    %v1880 = vrot.slane %v1879, 4
    %v1881 = vadd.f32 %v1879, %v1880
    %v1882 = vrot.slane %v1881, 2
    %v1883 = vadd.f32 %v1881, %v1882
    %v1884 = vrot.slane %v1883, 1
    %v1885 = vadd.f32 %v1883, %v1884
    %v1886 = vadd.f32 %v1822, %v1830
    %v1887 = vadd.f32 %v1886, %v1838
    %v1888 = vadd.f32 %v1887, %v1846
    %v1889 = vrot.slane %v1888, 4
    %v1890 = vadd.f32 %v1888, %v1889
    %v1891 = vrot.slane %v1890, 2
    %v1892 = vadd.f32 %v1890, %v1891
    %v1893 = vrot.slane %v1892, 1
    %v1894 = vadd.f32 %v1892, %v1893
    %v1895 = vadd.f32 %v1823, %v1831
    %v1896 = vadd.f32 %v1895, %v1839
    %v1897 = vadd.f32 %v1896, %v1847
    %v1898 = vrot.slane %v1897, 4
    %v1899 = vadd.f32 %v1897, %v1898
    %v1900 = vrot.slane %v1899, 2
    %v1901 = vadd.f32 %v1899, %v1900
    %v1902 = vrot.slane %v1901, 1
    %v1903 = vadd.f32 %v1901, %v1902
    %v1904 = vadd.f32 %v1824, %v1832
    %v1905 = vadd.f32 %v1904, %v1840
    %v1906 = vadd.f32 %v1905, %v1848
    %v1907 = vrot.slane %v1906, 4
    %v1908 = vadd.f32 %v1906, %v1907
    %v1909 = vrot.slane %v1908, 2
    %v1910 = vadd.f32 %v1908, %v1909
    %v1911 = vrot.slane %v1910, 1
    %v1912 = vadd.f32 %v1910, %v1911
    %v1913 = vadd.f32 %v1825, %v1833
    %v1914 = vadd.f32 %v1913, %v1841
    %v1915 = vadd.f32 %v1914, %v1849
    %v1916 = vrot.slane %v1915, 4
    %v1917 = vadd.f32 %v1915, %v1916
    %v1918 = vrot.slane %v1917, 2
    %v1919 = vadd.f32 %v1917, %v1918
    %v1920 = vrot.slane %v1919, 1
    %v1921 = vadd.f32 %v1919, %v1920
    %v1922 = vmul.f32 %v1858, %v965
    %v1923 = vmul.f32 %v1867, %v965
    %v1924 = vmul.f32 %v1876, %v965
    %v1925 = vmul.f32 %v1885, %v965
    %v1926 = vmul.f32 %v1894, %v965
    %v1927 = vmul.f32 %v1903, %v965
    %v1928 = vmul.f32 %v1912, %v965
    %v1929 = vmul.f32 %v1921, %v965
    %v1930 = vmul.f32 %v1810, %v1810
    %v1931 = vmul.f32 %v1811, %v1811
    %v1932 = vmul.f32 %v1812, %v1812
    %v1933 = vmul.f32 %v1813, %v1813
    %v1934 = vmul.f32 %v1814, %v1814
    %v1935 = vmul.f32 %v1815, %v1815
    %v1936 = vmul.f32 %v1816, %v1816
    %v1937 = vmul.f32 %v1817, %v1817
    %v1938 = vsub.f32 %v1922, %v1930
    %v1939 = vsub.f32 %v1923, %v1931
    %v1940 = vsub.f32 %v1924, %v1932
    %v1941 = vsub.f32 %v1925, %v1933
    %v1942 = vsub.f32 %v1926, %v1934
    %v1943 = vsub.f32 %v1927, %v1935
    %v1944 = vsub.f32 %v1928, %v1936
    %v1945 = vsub.f32 %v1929, %v1937
    %v1946 = vmax.f32 %v1938, 0.0
    %v1947 = vmax.f32 %v1939, 0.0
    %v1948 = vmax.f32 %v1940, 0.0
    %v1949 = vmax.f32 %v1941, 0.0
    %v1950 = vmax.f32 %v1942, 0.0
    %v1951 = vmax.f32 %v1943, 0.0
    %v1952 = vmax.f32 %v1944, 0.0
    %v1953 = vmax.f32 %v1945, 0.0
    %v1954 = vsub.f32 %v1706, %v1810
    %v1955 = vsub.f32 %v1707, %v1811
    %v1956 = vsub.f32 %v1708, %v1812
    %v1957 = vsub.f32 %v1709, %v1813
    %v1958 = vsub.f32 %v1710, %v1814
    %v1959 = vsub.f32 %v1711, %v1815
    %v1960 = vsub.f32 %v1712, %v1816
    %v1961 = vsub.f32 %v1713, %v1817
    %v1962 = vsub.f32 %v1714, %v1810
    %v1963 = vsub.f32 %v1715, %v1811
    %v1964 = vsub.f32 %v1716, %v1812
    %v1965 = vsub.f32 %v1717, %v1813
    %v1966 = vsub.f32 %v1718, %v1814
    %v1967 = vsub.f32 %v1719, %v1815
    %v1968 = vsub.f32 %v1720, %v1816
    %v1969 = vsub.f32 %v1721, %v1817
    %v1970 = vsub.f32 %v1722, %v1810
    %v1971 = vsub.f32 %v1723, %v1811
    %v1972 = vsub.f32 %v1724, %v1812
    %v1973 = vsub.f32 %v1725, %v1813
    %v1974 = vsub.f32 %v1726, %v1814
    %v1975 = vsub.f32 %v1727, %v1815
    %v1976 = vsub.f32 %v1728, %v1816
    %v1977 = vsub.f32 %v1729, %v1817
    %v1978 = vsub.f32 %v1730, %v1810
    %v1979 = vsub.f32 %v1731, %v1811
    %v1980 = vsub.f32 %v1732, %v1812
    %v1981 = vsub.f32 %v1733, %v1813
    %v1982 = vsub.f32 %v1734, %v1814
    %v1983 = vsub.f32 %v1735, %v1815
    %v1984 = vsub.f32 %v1736, %v1816
    %v1985 = vsub.f32 %v1737, %v1817
    %v1986 = vadd.f32 %v1946, 1e-05
    %v1987 = vadd.f32 %v1947, 1e-05
    %v1988 = vadd.f32 %v1948, 1e-05
    %v1989 = vadd.f32 %v1949, 1e-05
    %v1990 = vadd.f32 %v1950, 1e-05
    %v1991 = vadd.f32 %v1951, 1e-05
    %v1992 = vadd.f32 %v1952, 1e-05
    %v1993 = vadd.f32 %v1953, 1e-05
    %v1994 = vrsqrt.pop %v1986
    %v1995 = vrsqrt.pop %v1987
    %v1996 = vrsqrt.pop %v1988
    %v1997 = vrsqrt.pop %v1989
    %v1998 = vrsqrt.pop %v1990
    %v1999 = vrsqrt.pop %v1991
    %v2000 = vrsqrt.pop %v1992
    %v2001 = vrsqrt.pop %v1993
    %v2002 = vmul.f32 %v1954, %v1994
    %v2003 = vmul.f32 %v1955, %v1995
    %v2004 = vmul.f32 %v1956, %v1996
    %v2005 = vmul.f32 %v1957, %v1997
    %v2006 = vmul.f32 %v1958, %v1998
    %v2007 = vmul.f32 %v1959, %v1999
    %v2008 = vmul.f32 %v1960, %v2000
    %v2009 = vmul.f32 %v1961, %v2001
    %v2010 = vmul.f32 %v1962, %v1994
    %v2011 = vmul.f32 %v1963, %v1995
    %v2012 = vmul.f32 %v1964, %v1996
    %v2013 = vmul.f32 %v1965, %v1997
    %v2014 = vmul.f32 %v1966, %v1998
    %v2015 = vmul.f32 %v1967, %v1999
    %v2016 = vmul.f32 %v1968, %v2000
    %v2017 = vmul.f32 %v1969, %v2001
    %v2018 = vmul.f32 %v1970, %v1994
    %v2019 = vmul.f32 %v1971, %v1995
    %v2020 = vmul.f32 %v1972, %v1996
    %v2021 = vmul.f32 %v1973, %v1997
    %v2022 = vmul.f32 %v1974, %v1998
    %v2023 = vmul.f32 %v1975, %v1999
    %v2024 = vmul.f32 %v1976, %v2000
    %v2025 = vmul.f32 %v1977, %v2001
    %v2026 = vmul.f32 %v1978, %v1994
    %v2027 = vmul.f32 %v1979, %v1995
    %v2028 = vmul.f32 %v1980, %v1996
    %v2029 = vmul.f32 %v1981, %v1997
    %v2030 = vmul.f32 %v1982, %v1998
    %v2031 = vmul.f32 %v1983, %v1999
    %v2032 = vmul.f32 %v1984, %v2000
    %v2033 = vmul.f32 %v1985, %v2001
    %2034 = vset.pattern.permute.xlu0 8
    %2035 = vperm.xlu0 %2034, %v43
    %v2036 = vpop.permute.xlu0 %2035
    %2038 = vset.pattern.permute.xlu0 8
    %2039 = vperm.xlu0 %2038, %v45
    %v2040 = vpop.permute.xlu0 %2039
    %2042 = vset.pattern.permute.xlu0 8
    %2043 = vperm.xlu0 %2042, %v47
    %v2044 = vpop.permute.xlu0 %2043
    %2046 = vset.pattern.permute.xlu0 8
    %2047 = vperm.xlu0 %2046, %v49
    %v2048 = vpop.permute.xlu0 %2047
    %v2050 = vmul.f32 %v2002, %v2036
    %v2051 = vmul.f32 %v2003, %v2036
    %v2052 = vmul.f32 %v2004, %v2036
    %v2053 = vmul.f32 %v2005, %v2036
    %v2054 = vmul.f32 %v2006, %v2036
    %v2055 = vmul.f32 %v2007, %v2036
    %v2056 = vmul.f32 %v2008, %v2036
    %v2057 = vmul.f32 %v2009, %v2036
    %v2058 = vmul.f32 %v2010, %v2040
    %v2059 = vmul.f32 %v2011, %v2040
    %v2060 = vmul.f32 %v2012, %v2040
    %v2061 = vmul.f32 %v2013, %v2040
    %v2062 = vmul.f32 %v2014, %v2040
    %v2063 = vmul.f32 %v2015, %v2040
    %v2064 = vmul.f32 %v2016, %v2040
    %v2065 = vmul.f32 %v2017, %v2040
    %v2066 = vmul.f32 %v2018, %v2044
    %v2067 = vmul.f32 %v2019, %v2044
    %v2068 = vmul.f32 %v2020, %v2044
    %v2069 = vmul.f32 %v2021, %v2044
    %v2070 = vmul.f32 %v2022, %v2044
    %v2071 = vmul.f32 %v2023, %v2044
    %v2072 = vmul.f32 %v2024, %v2044
    %v2073 = vmul.f32 %v2025, %v2044
    %v2074 = vmul.f32 %v2026, %v2048
    %v2075 = vmul.f32 %v2027, %v2048
    %v2076 = vmul.f32 %v2028, %v2048
    %v2077 = vmul.f32 %v2029, %v2048
    %v2078 = vmul.f32 %v2030, %v2048
    %v2079 = vmul.f32 %v2031, %v2048
    %v2080 = vmul.f32 %v2032, %v2048
    %v2081 = vmul.f32 %v2033, %v2048
    %2082 = vset.pattern.permute.xlu0 9
    %2083 = vperm.xlu0 %2082, %v43
    %v2084 = vpop.permute.xlu0 %2083
    %2086 = vset.pattern.permute.xlu0 9
    %2087 = vperm.xlu0 %2086, %v45
    %v2088 = vpop.permute.xlu0 %2087
    %2090 = vset.pattern.permute.xlu0 9
    %2091 = vperm.xlu0 %2090, %v47
    %v2092 = vpop.permute.xlu0 %2091
    %2094 = vset.pattern.permute.xlu0 9
    %2095 = vperm.xlu0 %2094, %v49
    %v2096 = vpop.permute.xlu0 %2095
    %v2098 = vadd.f32 %v2050, %v2084
    %v2099 = vadd.f32 %v2051, %v2084
    %v2100 = vadd.f32 %v2052, %v2084
    %v2101 = vadd.f32 %v2053, %v2084
    %v2102 = vadd.f32 %v2054, %v2084
    %v2103 = vadd.f32 %v2055, %v2084
    %v2104 = vadd.f32 %v2056, %v2084
    %v2105 = vadd.f32 %v2057, %v2084
    %v2106 = vadd.f32 %v2058, %v2088
    %v2107 = vadd.f32 %v2059, %v2088
    %v2108 = vadd.f32 %v2060, %v2088
    %v2109 = vadd.f32 %v2061, %v2088
    %v2110 = vadd.f32 %v2062, %v2088
    %v2111 = vadd.f32 %v2063, %v2088
    %v2112 = vadd.f32 %v2064, %v2088
    %v2113 = vadd.f32 %v2065, %v2088
    %v2114 = vadd.f32 %v2066, %v2092
    %v2115 = vadd.f32 %v2067, %v2092
    %v2116 = vadd.f32 %v2068, %v2092
    %v2117 = vadd.f32 %v2069, %v2092
    %v2118 = vadd.f32 %v2070, %v2092
    %v2119 = vadd.f32 %v2071, %v2092
    %v2120 = vadd.f32 %v2072, %v2092
    %v2121 = vadd.f32 %v2073, %v2092
    %v2122 = vadd.f32 %v2074, %v2096
    %v2123 = vadd.f32 %v2075, %v2096
    %v2124 = vadd.f32 %v2076, %v2096
    %v2125 = vadd.f32 %v2077, %v2096
    %v2126 = vadd.f32 %v2078, %v2096
    %v2127 = vadd.f32 %v2079, %v2096
    %v2128 = vadd.f32 %v2080, %v2096
    %v2129 = vadd.f32 %v2081, %v2096
    %v2130 = vadd.f32 %v2098, %v1286
    %v2131 = vadd.f32 %v2099, %v1287
    %v2132 = vadd.f32 %v2100, %v1288
    %v2133 = vadd.f32 %v2101, %v1289
    %v2134 = vadd.f32 %v2102, %v1290
    %v2135 = vadd.f32 %v2103, %v1291
    %v2136 = vadd.f32 %v2104, %v1292
    %v2137 = vadd.f32 %v2105, %v1293
    %v2138 = vadd.f32 %v2106, %v1294
    %v2139 = vadd.f32 %v2107, %v1295
    %v2140 = vadd.f32 %v2108, %v1296
    %v2141 = vadd.f32 %v2109, %v1297
    %v2142 = vadd.f32 %v2110, %v1298
    %v2143 = vadd.f32 %v2111, %v1299
    %v2144 = vadd.f32 %v2112, %v1300
    %v2145 = vadd.f32 %v2113, %v1301
    %v2146 = vadd.f32 %v2114, %v1302
    %v2147 = vadd.f32 %v2115, %v1303
    %v2148 = vadd.f32 %v2116, %v1304
    %v2149 = vadd.f32 %v2117, %v1305
    %v2150 = vadd.f32 %v2118, %v1306
    %v2151 = vadd.f32 %v2119, %v1307
    %v2152 = vadd.f32 %v2120, %v1308
    %v2153 = vadd.f32 %v2121, %v1309
    %v2154 = vadd.f32 %v2122, %v1310
    %v2155 = vadd.f32 %v2123, %v1311
    %v2156 = vadd.f32 %v2124, %v1312
    %v2157 = vadd.f32 %v2125, %v1313
    %v2158 = vadd.f32 %v2126, %v1314
    %v2159 = vadd.f32 %v2127, %v1315
    %v2160 = vadd.f32 %v2128, %v1316
    %v2161 = vadd.f32 %v2129, %v1317
    %2162 = vset.pattern.permute.xlu0 10
    %2163 = vperm.xlu0 %2162, %v43
    %v2164 = vpop.permute.xlu0 %2163
    %2166 = vset.pattern.permute.xlu0 10
    %2167 = vperm.xlu0 %2166, %v45
    %v2168 = vpop.permute.xlu0 %2167
    %2170 = vset.pattern.permute.xlu0 10
    %2171 = vperm.xlu0 %2170, %v47
    %v2172 = vpop.permute.xlu0 %2171
    %2174 = vset.pattern.permute.xlu0 10
    %2175 = vperm.xlu0 %2174, %v49
    %v2176 = vpop.permute.xlu0 %2175
    %2178 = vrot.lane.b32.xlu0 %v42, 64
    %v2179 = vpop.permute.xlu0 %2178
    %2180 = vrot.lane.b32.xlu0 %v44, 64
    %v2181 = vpop.permute.xlu0 %2180
    %2182 = vrot.lane.b32.xlu0 %v46, 64
    %v2183 = vpop.permute.xlu0 %2182
    %2184 = vrot.lane.b32.xlu0 %v48, 64
    %v2185 = vpop.permute.xlu0 %2184
    %v2186 = vsel %vm492, %v2179, 0
    %v2188 = vsel %vm492, %v2181, 0
    %v2190 = vsel %vm492, %v2183, 0
    %v2192 = vsel %vm492, %v2185, 0
    %2194 = vmatprep.subr.mxu0 %v2131
    %2195 = vmatpush1.msra.mxu0 %v2130
    %2196 = vmatprep.subr.mxu0 %v2139
    %2197 = vmatpush1.msra.mxu0 %v2138
    %2198 = vmatprep.subr.mxu0 %v2147
    %2199 = vmatpush1.msra.mxu0 %v2146
    %2200 = vmatprep.subr.mxu0 %v2155
    %2201 = vmatpush1.msra.mxu0 %v2154
    %2202 = vmatprep.subr.mxu0 0.0
    %2203 = vmatpush1.msra.mxu0 0.0
    %2204 = vmatprep.subr.mxu0 0.0
    %2205 = vmatpush1.msra.mxu0 0.0
    %2206 = vmatprep.subr.mxu0 0.0
    %2207 = vmatpush1.msra.mxu0 0.0
    %2208 = vmatprep.subr.mxu0 0.0
    %2209 = vmatpush1.msra.mxu0 0.0
    %2210 = vmatprep.subr.mxu0 0.0
    %2211 = vmatpush1.msra.mxu0 0.0
    %2212 = vmatprep.subr.mxu0 0.0
    %2213 = vmatpush1.msra.mxu0 0.0
    %2214 = vmatprep.subr.mxu0 0.0
    %2215 = vmatpush1.msra.mxu0 0.0
    %2216 = vmatprep.subr.mxu0 0.0
    %2217 = vmatpush1.msra.mxu0 0.0
    %2218 = vmatprep.subr.mxu0 0.0
    %2219 = vmatpush1.msra.mxu0 0.0
    %2220 = vmatprep.subr.mxu0 0.0
    %2221 = vmatpush1.msra.mxu0 0.0
    %2222 = vmatprep.subr.mxu0 0.0
    %2223 = vmatpush1.msra.mxu0 0.0
    %2224 = vmatprep.subr.mxu0 0.0
    %2225 = vmatpush1.msra.mxu0 0.0
    %2226 = vmatprep.subr.mxu0 0.0
    %2227 = vmatpush1.msra.mxu0 0.0
    %2228 = vmatprep.subr.mxu0 0.0
    %2229 = vmatpush1.msra.mxu0 0.0
    %2230 = vmatprep.subr.mxu0 0.0
    %2231 = vmatpush1.msra.mxu0 0.0
    %2232 = vmatprep.subr.mxu0 0.0
    %2233 = vmatpush1.msra.mxu0 0.0
    %2234 = vmatprep.subr.mxu0 0.0
    %2235 = vmatpush1.msra.mxu0 0.0
    %2236 = vmatprep.subr.mxu0 0.0
    %2237 = vmatpush1.msra.mxu0 0.0
    %2238 = vmatprep.subr.mxu0 0.0
    %2239 = vmatpush1.msra.mxu0 0.0
    %2240 = vmatprep.subr.mxu0 0.0
    %2241 = vmatpush1.msra.mxu0 0.0
    %2242 = vmatprep.subr.mxu0 0.0
    %2243 = vmatpush1.msra.mxu0 0.0
    %2244 = vmatprep.subr.mxu0 0.0
    %2245 = vmatpush1.msra.mxu0 0.0
    %2246 = vmatprep.subr.mxu0 0.0
    %2247 = vmatpush1.msra.mxu0 0.0
    %2248 = vmatprep.subr.mxu0 0.0
    %2249 = vmatpush1.msra.mxu0 0.0
    %2250 = vmatprep.subr.mxu0 0.0
    %2251 = vmatpush1.msra.mxu0 0.0
    %2252 = vmatprep.subr.mxu0 0.0
    %2253 = vmatpush1.msra.mxu0 0.0
    %2254 = vmatprep.subr.mxu0 0.0
    %2255 = vmatpush1.msra.mxu0 0.0
    %2256 = vmatprep.subr.mxu0 0.0
    %2257 = vmatpush1.msra.mxu0 0.0
    %2258 = vmatprep.mubr.f32.mxu0 0.0
    %2259 = vmatmul.mubr.f32.gmra.mrb[0].mxu0 %v2186
    %v2260 = vpop.f32.mrb[0].mxu0
    %v2261 = vadd.f32 %v2164, %v2260
    %v2262 = vpop.f32.mrb[0].mxu0
    %v2263 = vadd.f32 %v2164, %v2262
    %2264 = vmatprep.mubr.f32.mxu0 0.0
    %2265 = vmatmul.mubr.f32.gmra.mrb[0].mxu0 %v2188
    %v2266 = vpop.f32.mrb[0].mxu0
    %v2267 = vadd.f32 %v2168, %v2266
    %v2268 = vpop.f32.mrb[0].mxu0
    %v2269 = vadd.f32 %v2168, %v2268
    %2270 = vmatprep.mubr.f32.mxu0 0.0
    %2271 = vmatmul.mubr.f32.gmra.mrb[0].mxu0 %v2190
    %v2272 = vpop.f32.mrb[0].mxu0
    %v2273 = vadd.f32 %v2172, %v2272
    %v2274 = vpop.f32.mrb[0].mxu0
    %v2275 = vadd.f32 %v2172, %v2274
    %2276 = vmatprep.mubr.f32.mxu0 0.0
    %2277 = vmatmul.mubr.f32.gmra.mrb[0].mxu0 %v2192
    %v2278 = vpop.f32.mrb[0].mxu0
    %v2279 = vadd.f32 %v2176, %v2278
    %v2280 = vpop.f32.mrb[0].mxu0
    %v2281 = vadd.f32 %v2176, %v2280
    %2282 = vdwg.mxu0
    %2283 = vmatprep.subr.mxu0 %v2133
    %2284 = vmatpush1.msra.mxu0 %v2132
    %2285 = vmatprep.subr.mxu0 %v2141
    %2286 = vmatpush1.msra.mxu0 %v2140
    %2287 = vmatprep.subr.mxu0 %v2149
    %2288 = vmatpush1.msra.mxu0 %v2148
    %2289 = vmatprep.subr.mxu0 %v2157
    %2290 = vmatpush1.msra.mxu0 %v2156
    %2291 = vmatprep.subr.mxu0 0.0
    %2292 = vmatpush1.msra.mxu0 0.0
    %2293 = vmatprep.subr.mxu0 0.0
    %2294 = vmatpush1.msra.mxu0 0.0
    %2295 = vmatprep.subr.mxu0 0.0
    %2296 = vmatpush1.msra.mxu0 0.0
    %2297 = vmatprep.subr.mxu0 0.0
    %2298 = vmatpush1.msra.mxu0 0.0
    %2299 = vmatprep.subr.mxu0 0.0
    %2300 = vmatpush1.msra.mxu0 0.0
    %2301 = vmatprep.subr.mxu0 0.0
    %2302 = vmatpush1.msra.mxu0 0.0
    %2303 = vmatprep.subr.mxu0 0.0
    %2304 = vmatpush1.msra.mxu0 0.0
    %2305 = vmatprep.subr.mxu0 0.0
    %2306 = vmatpush1.msra.mxu0 0.0
    %2307 = vmatprep.subr.mxu0 0.0
    %2308 = vmatpush1.msra.mxu0 0.0
    %2309 = vmatprep.subr.mxu0 0.0
    %2310 = vmatpush1.msra.mxu0 0.0
    %2311 = vmatprep.subr.mxu0 0.0
    %2312 = vmatpush1.msra.mxu0 0.0
    %2313 = vmatprep.subr.mxu0 0.0
    %2314 = vmatpush1.msra.mxu0 0.0
    %2315 = vmatprep.subr.mxu0 0.0
    %2316 = vmatpush1.msra.mxu0 0.0
    %2317 = vmatprep.subr.mxu0 0.0
    %2318 = vmatpush1.msra.mxu0 0.0
    %2319 = vmatprep.subr.mxu0 0.0
    %2320 = vmatpush1.msra.mxu0 0.0
    %2321 = vmatprep.subr.mxu0 0.0
    %2322 = vmatpush1.msra.mxu0 0.0
    %2323 = vmatprep.subr.mxu0 0.0
    %2324 = vmatpush1.msra.mxu0 0.0
    %2325 = vmatprep.subr.mxu0 0.0
    %2326 = vmatpush1.msra.mxu0 0.0
    %2327 = vmatprep.subr.mxu0 0.0
    %2328 = vmatpush1.msra.mxu0 0.0
    %2329 = vmatprep.subr.mxu0 0.0
    %2330 = vmatpush1.msra.mxu0 0.0
    %2331 = vmatprep.subr.mxu0 0.0
    %2332 = vmatpush1.msra.mxu0 0.0
    %2333 = vmatprep.subr.mxu0 0.0
    %2334 = vmatpush1.msra.mxu0 0.0
    %2335 = vmatprep.subr.mxu0 0.0
    %2336 = vmatpush1.msra.mxu0 0.0
    %2337 = vmatprep.subr.mxu0 0.0
    %2338 = vmatpush1.msra.mxu0 0.0
    %2339 = vmatprep.subr.mxu0 0.0
    %2340 = vmatpush1.msra.mxu0 0.0
    %2341 = vmatprep.subr.mxu0 0.0
    %2342 = vmatpush1.msra.mxu0 0.0
    %2343 = vmatprep.subr.mxu0 0.0
    %2344 = vmatpush1.msra.mxu0 0.0
    %2345 = vmatprep.subr.mxu0 0.0
    %2346 = vmatpush1.msra.mxu0 0.0
    %2347 = vmatprep.mubr.f32.mxu0 0.0
    %2348 = vmatmul.mubr.f32.gmra.mrb[0].mxu0 %v2186
    %v2349 = vpop.f32.mrb[0].mxu0
    %v2350 = vadd.f32 %v2164, %v2349
    %v2351 = vpop.f32.mrb[0].mxu0
    %v2352 = vadd.f32 %v2164, %v2351
    %2353 = vmatprep.mubr.f32.mxu0 0.0
    %2354 = vmatmul.mubr.f32.gmra.mrb[0].mxu0 %v2188
    %v2355 = vpop.f32.mrb[0].mxu0
    %v2356 = vadd.f32 %v2168, %v2355
    %v2357 = vpop.f32.mrb[0].mxu0
    %v2358 = vadd.f32 %v2168, %v2357
    %2359 = vmatprep.mubr.f32.mxu0 0.0
    %2360 = vmatmul.mubr.f32.gmra.mrb[0].mxu0 %v2190
    %v2361 = vpop.f32.mrb[0].mxu0
    %v2362 = vadd.f32 %v2172, %v2361
    %v2363 = vpop.f32.mrb[0].mxu0
    %v2364 = vadd.f32 %v2172, %v2363
    %2365 = vmatprep.mubr.f32.mxu0 0.0
    %2366 = vmatmul.mubr.f32.gmra.mrb[0].mxu0 %v2192
    %v2367 = vpop.f32.mrb[0].mxu0
    %v2368 = vadd.f32 %v2176, %v2367
    %v2369 = vpop.f32.mrb[0].mxu0
    %v2370 = vadd.f32 %v2176, %v2369
    %2371 = vdwg.mxu0
    %2372 = vmatprep.subr.mxu0 %v2135
    %2373 = vmatpush1.msra.mxu0 %v2134
    %2374 = vmatprep.subr.mxu0 %v2143
    %2375 = vmatpush1.msra.mxu0 %v2142
    %2376 = vmatprep.subr.mxu0 %v2151
    %2377 = vmatpush1.msra.mxu0 %v2150
    %2378 = vmatprep.subr.mxu0 %v2159
    %2379 = vmatpush1.msra.mxu0 %v2158
    %2380 = vmatprep.subr.mxu0 0.0
    %2381 = vmatpush1.msra.mxu0 0.0
    %2382 = vmatprep.subr.mxu0 0.0
    %2383 = vmatpush1.msra.mxu0 0.0
    %2384 = vmatprep.subr.mxu0 0.0
    %2385 = vmatpush1.msra.mxu0 0.0
    %2386 = vmatprep.subr.mxu0 0.0
    %2387 = vmatpush1.msra.mxu0 0.0
    %2388 = vmatprep.subr.mxu0 0.0
    %2389 = vmatpush1.msra.mxu0 0.0
    %2390 = vmatprep.subr.mxu0 0.0
    %2391 = vmatpush1.msra.mxu0 0.0
    %2392 = vmatprep.subr.mxu0 0.0
    %2393 = vmatpush1.msra.mxu0 0.0
    %2394 = vmatprep.subr.mxu0 0.0
    %2395 = vmatpush1.msra.mxu0 0.0
    %2396 = vmatprep.subr.mxu0 0.0
    %2397 = vmatpush1.msra.mxu0 0.0
    %2398 = vmatprep.subr.mxu0 0.0
    %2399 = vmatpush1.msra.mxu0 0.0
    %2400 = vmatprep.subr.mxu0 0.0
    %2401 = vmatpush1.msra.mxu0 0.0
    %2402 = vmatprep.subr.mxu0 0.0
    %2403 = vmatpush1.msra.mxu0 0.0
    %2404 = vmatprep.subr.mxu0 0.0
    %2405 = vmatpush1.msra.mxu0 0.0
    %2406 = vmatprep.subr.mxu0 0.0
    %2407 = vmatpush1.msra.mxu0 0.0
    %2408 = vmatprep.subr.mxu0 0.0
    %2409 = vmatpush1.msra.mxu0 0.0
    %2410 = vmatprep.subr.mxu0 0.0
    %2411 = vmatpush1.msra.mxu0 0.0
    %2412 = vmatprep.subr.mxu0 0.0
    %2413 = vmatpush1.msra.mxu0 0.0
    %2414 = vmatprep.subr.mxu0 0.0
    %2415 = vmatpush1.msra.mxu0 0.0
    %2416 = vmatprep.subr.mxu0 0.0
    %2417 = vmatpush1.msra.mxu0 0.0
    %2418 = vmatprep.subr.mxu0 0.0
    %2419 = vmatpush1.msra.mxu0 0.0
    %2420 = vmatprep.subr.mxu0 0.0
    %2421 = vmatpush1.msra.mxu0 0.0
    %2422 = vmatprep.subr.mxu0 0.0
    %2423 = vmatpush1.msra.mxu0 0.0
    %2424 = vmatprep.subr.mxu0 0.0
    %2425 = vmatpush1.msra.mxu0 0.0
    %2426 = vmatprep.subr.mxu0 0.0
    %2427 = vmatpush1.msra.mxu0 0.0
    %2428 = vmatprep.subr.mxu0 0.0
    %2429 = vmatpush1.msra.mxu0 0.0
    %2430 = vmatprep.subr.mxu0 0.0
    %2431 = vmatpush1.msra.mxu0 0.0
    %2432 = vmatprep.subr.mxu0 0.0
    %2433 = vmatpush1.msra.mxu0 0.0
    %2434 = vmatprep.subr.mxu0 0.0
    %2435 = vmatpush1.msra.mxu0 0.0
    %2436 = vmatprep.mubr.f32.mxu0 0.0
    %2437 = vmatmul.mubr.f32.gmra.mrb[0].mxu0 %v2186
    %v2438 = vpop.f32.mrb[0].mxu0
    %v2439 = vadd.f32 %v2164, %v2438
    %v2440 = vpop.f32.mrb[0].mxu0
    %v2441 = vadd.f32 %v2164, %v2440
    %2442 = vmatprep.mubr.f32.mxu0 0.0
    %2443 = vmatmul.mubr.f32.gmra.mrb[0].mxu0 %v2188
    %v2444 = vpop.f32.mrb[0].mxu0
    %v2445 = vadd.f32 %v2168, %v2444
    %v2446 = vpop.f32.mrb[0].mxu0
    %v2447 = vadd.f32 %v2168, %v2446
    %2448 = vmatprep.mubr.f32.mxu0 0.0
    %2449 = vmatmul.mubr.f32.gmra.mrb[0].mxu0 %v2190
    %v2450 = vpop.f32.mrb[0].mxu0
    %v2451 = vadd.f32 %v2172, %v2450
    %v2452 = vpop.f32.mrb[0].mxu0
    %v2453 = vadd.f32 %v2172, %v2452
    %2454 = vmatprep.mubr.f32.mxu0 0.0
    %2455 = vmatmul.mubr.f32.gmra.mrb[0].mxu0 %v2192
    %v2456 = vpop.f32.mrb[0].mxu0
    %v2457 = vadd.f32 %v2176, %v2456
    %v2458 = vpop.f32.mrb[0].mxu0
    %v2459 = vadd.f32 %v2176, %v2458
    %2460 = vdwg.mxu0
    %2461 = vmatprep.subr.mxu0 %v2137
    %2462 = vmatpush1.msra.mxu0 %v2136
    %2463 = vmatprep.subr.mxu0 %v2145
    %2464 = vmatpush1.msra.mxu0 %v2144
    %2465 = vmatprep.subr.mxu0 %v2153
    %2466 = vmatpush1.msra.mxu0 %v2152
    %2467 = vmatprep.subr.mxu0 %v2161
    %2468 = vmatpush1.msra.mxu0 %v2160
    %2469 = vmatprep.subr.mxu0 0.0
    %2470 = vmatpush1.msra.mxu0 0.0
    %2471 = vmatprep.subr.mxu0 0.0
    %2472 = vmatpush1.msra.mxu0 0.0
    %2473 = vmatprep.subr.mxu0 0.0
    %2474 = vmatpush1.msra.mxu0 0.0
    %2475 = vmatprep.subr.mxu0 0.0
    %2476 = vmatpush1.msra.mxu0 0.0
    %2477 = vmatprep.subr.mxu0 0.0
    %2478 = vmatpush1.msra.mxu0 0.0
    %2479 = vmatprep.subr.mxu0 0.0
    %2480 = vmatpush1.msra.mxu0 0.0
    %2481 = vmatprep.subr.mxu0 0.0
    %2482 = vmatpush1.msra.mxu0 0.0
    %2483 = vmatprep.subr.mxu0 0.0
    %2484 = vmatpush1.msra.mxu0 0.0
    %2485 = vmatprep.subr.mxu0 0.0
    %2486 = vmatpush1.msra.mxu0 0.0
    %2487 = vmatprep.subr.mxu0 0.0
    %2488 = vmatpush1.msra.mxu0 0.0
    %2489 = vmatprep.subr.mxu0 0.0
    %2490 = vmatpush1.msra.mxu0 0.0
    %2491 = vmatprep.subr.mxu0 0.0
    %2492 = vmatpush1.msra.mxu0 0.0
    %2493 = vmatprep.subr.mxu0 0.0
    %2494 = vmatpush1.msra.mxu0 0.0
    %2495 = vmatprep.subr.mxu0 0.0
    %2496 = vmatpush1.msra.mxu0 0.0
    %2497 = vmatprep.subr.mxu0 0.0
    %2498 = vmatpush1.msra.mxu0 0.0
    %2499 = vmatprep.subr.mxu0 0.0
    %2500 = vmatpush1.msra.mxu0 0.0
    %2501 = vmatprep.subr.mxu0 0.0
    %2502 = vmatpush1.msra.mxu0 0.0
    %2503 = vmatprep.subr.mxu0 0.0
    %2504 = vmatpush1.msra.mxu0 0.0
    %2505 = vmatprep.subr.mxu0 0.0
    %2506 = vmatpush1.msra.mxu0 0.0
    %2507 = vmatprep.subr.mxu0 0.0
    %2508 = vmatpush1.msra.mxu0 0.0
    %2509 = vmatprep.subr.mxu0 0.0
    %2510 = vmatpush1.msra.mxu0 0.0
    %2511 = vmatprep.subr.mxu0 0.0
    %2512 = vmatpush1.msra.mxu0 0.0
    %2513 = vmatprep.subr.mxu0 0.0
    %2514 = vmatpush1.msra.mxu0 0.0
    %2515 = vmatprep.subr.mxu0 0.0
    %2516 = vmatpush1.msra.mxu0 0.0
    %2517 = vmatprep.subr.mxu0 0.0
    %2518 = vmatpush1.msra.mxu0 0.0
    %2519 = vmatprep.subr.mxu0 0.0
    %2520 = vmatpush1.msra.mxu0 0.0
    %2521 = vmatprep.subr.mxu0 0.0
    %2522 = vmatpush1.msra.mxu0 0.0
    %2523 = vmatprep.subr.mxu0 0.0
    %2524 = vmatpush1.msra.mxu0 0.0
    %2525 = vmatprep.mubr.f32.mxu0 0.0
    %2526 = vmatmul.mubr.f32.gmra.mrb[0].mxu0 %v2186
    %v2527 = vpop.f32.mrb[0].mxu0
    %v2528 = vadd.f32 %v2164, %v2527
    %v2529 = vpop.f32.mrb[0].mxu0
    %v2530 = vadd.f32 %v2164, %v2529
    %2531 = vmatprep.mubr.f32.mxu0 0.0
    %2532 = vmatmul.mubr.f32.gmra.mrb[0].mxu0 %v2188
    %v2533 = vpop.f32.mrb[0].mxu0
    %v2534 = vadd.f32 %v2168, %v2533
    %v2535 = vpop.f32.mrb[0].mxu0
    %v2536 = vadd.f32 %v2168, %v2535
    %2537 = vmatprep.mubr.f32.mxu0 0.0
    %2538 = vmatmul.mubr.f32.gmra.mrb[0].mxu0 %v2190
    %v2539 = vpop.f32.mrb[0].mxu0
    %v2540 = vadd.f32 %v2172, %v2539
    %v2541 = vpop.f32.mrb[0].mxu0
    %v2542 = vadd.f32 %v2172, %v2541
    %2543 = vmatprep.mubr.f32.mxu0 0.0
    %2544 = vmatmul.mubr.f32.gmra.mrb[0].mxu0 %v2192
    %v2545 = vpop.f32.mrb[0].mxu0
    %v2546 = vadd.f32 %v2176, %v2545
    %v2547 = vpop.f32.mrb[0].mxu0
    %v2548 = vadd.f32 %v2176, %v2547
    %2549 = vdwg.mxu0
    %v2550 = vtanh.pop %v2261
    %v2551 = vtanh.pop %v2263
    %v2552 = vtanh.pop %v2350
    %v2553 = vtanh.pop %v2352
    %v2554 = vtanh.pop %v2439
    %v2555 = vtanh.pop %v2441
    %v2556 = vtanh.pop %v2528
    %v2557 = vtanh.pop %v2530
    %v2558 = vtanh.pop %v2267
    %v2559 = vtanh.pop %v2269
    %v2560 = vtanh.pop %v2356
    %v2561 = vtanh.pop %v2358
    %v2562 = vtanh.pop %v2445
    %v2563 = vtanh.pop %v2447
    %v2564 = vtanh.pop %v2534
    %v2565 = vtanh.pop %v2536
    %v2566 = vtanh.pop %v2273
    %v2567 = vtanh.pop %v2275
    %v2568 = vtanh.pop %v2362
    %v2569 = vtanh.pop %v2364
    %v2570 = vtanh.pop %v2451
    %v2571 = vtanh.pop %v2453
    %v2572 = vtanh.pop %v2540
    %v2573 = vtanh.pop %v2542
    %v2574 = vtanh.pop %v2279
    %v2575 = vtanh.pop %v2281
    %v2576 = vtanh.pop %v2368
    %v2577 = vtanh.pop %v2370
    %v2578 = vtanh.pop %v2457
    %v2579 = vtanh.pop %v2459
    %v2580 = vtanh.pop %v2546
    %v2581 = vtanh.pop %v2548
    %v2582 = vadd.f32 %v2550, %v2558
    %v2583 = vadd.f32 %v2582, %v2566
    %v2584 = vadd.f32 %v2583, %v2574
    %v2585 = vrot.slane %v2584, 4
    %v2586 = vadd.f32 %v2584, %v2585
    %v2587 = vrot.slane %v2586, 2
    %v2588 = vadd.f32 %v2586, %v2587
    %v2589 = vrot.slane %v2588, 1
    %v2590 = vadd.f32 %v2588, %v2589
    %v2591 = vadd.f32 %v2551, %v2559
    %v2592 = vadd.f32 %v2591, %v2567
    %v2593 = vadd.f32 %v2592, %v2575
    %v2594 = vrot.slane %v2593, 4
    %v2595 = vadd.f32 %v2593, %v2594
    %v2596 = vrot.slane %v2595, 2
    %v2597 = vadd.f32 %v2595, %v2596
    %v2598 = vrot.slane %v2597, 1
    %v2599 = vadd.f32 %v2597, %v2598
    %v2600 = vadd.f32 %v2552, %v2560
    %v2601 = vadd.f32 %v2600, %v2568
    %v2602 = vadd.f32 %v2601, %v2576
    %v2603 = vrot.slane %v2602, 4
    %v2604 = vadd.f32 %v2602, %v2603
    %v2605 = vrot.slane %v2604, 2
    %v2606 = vadd.f32 %v2604, %v2605
    %v2607 = vrot.slane %v2606, 1
    %v2608 = vadd.f32 %v2606, %v2607
    %v2609 = vadd.f32 %v2553, %v2561
    %v2610 = vadd.f32 %v2609, %v2569
    %v2611 = vadd.f32 %v2610, %v2577
    %v2612 = vrot.slane %v2611, 4
    %v2613 = vadd.f32 %v2611, %v2612
    %v2614 = vrot.slane %v2613, 2
    %v2615 = vadd.f32 %v2613, %v2614
    %v2616 = vrot.slane %v2615, 1
    %v2617 = vadd.f32 %v2615, %v2616
    %v2618 = vadd.f32 %v2554, %v2562
    %v2619 = vadd.f32 %v2618, %v2570
    %v2620 = vadd.f32 %v2619, %v2578
    %v2621 = vrot.slane %v2620, 4
    %v2622 = vadd.f32 %v2620, %v2621
    %v2623 = vrot.slane %v2622, 2
    %v2624 = vadd.f32 %v2622, %v2623
    %v2625 = vrot.slane %v2624, 1
    %v2626 = vadd.f32 %v2624, %v2625
    %v2627 = vadd.f32 %v2555, %v2563
    %v2628 = vadd.f32 %v2627, %v2571
    %v2629 = vadd.f32 %v2628, %v2579
    %v2630 = vrot.slane %v2629, 4
    %v2631 = vadd.f32 %v2629, %v2630
    %v2632 = vrot.slane %v2631, 2
    %v2633 = vadd.f32 %v2631, %v2632
    %v2634 = vrot.slane %v2633, 1
    %v2635 = vadd.f32 %v2633, %v2634
    %v2636 = vadd.f32 %v2556, %v2564
    %v2637 = vadd.f32 %v2636, %v2572
    %v2638 = vadd.f32 %v2637, %v2580
    %v2639 = vrot.slane %v2638, 4
    %v2640 = vadd.f32 %v2638, %v2639
    %v2641 = vrot.slane %v2640, 2
    %v2642 = vadd.f32 %v2640, %v2641
    %v2643 = vrot.slane %v2642, 1
    %v2644 = vadd.f32 %v2642, %v2643
    %v2645 = vadd.f32 %v2557, %v2565
    %v2646 = vadd.f32 %v2645, %v2573
    %v2647 = vadd.f32 %v2646, %v2581
    %v2648 = vrot.slane %v2647, 4
    %v2649 = vadd.f32 %v2647, %v2648
    %v2650 = vrot.slane %v2649, 2
    %v2651 = vadd.f32 %v2649, %v2650
    %v2652 = vrot.slane %v2651, 1
    %v2653 = vadd.f32 %v2651, %v2652
    %v2654 = vmul.f32 %v2590, %v965
    %v2655 = vmul.f32 %v2599, %v965
    %v2656 = vmul.f32 %v2608, %v965
    %v2657 = vmul.f32 %v2617, %v965
    %v2658 = vmul.f32 %v2626, %v965
    %v2659 = vmul.f32 %v2635, %v965
    %v2660 = vmul.f32 %v2644, %v965
    %v2661 = vmul.f32 %v2653, %v965
    %v2662 = vmul.f32 %v2550, %v2550
    %v2663 = vmul.f32 %v2551, %v2551
    %v2664 = vmul.f32 %v2552, %v2552
    %v2665 = vmul.f32 %v2553, %v2553
    %v2666 = vmul.f32 %v2554, %v2554
    %v2667 = vmul.f32 %v2555, %v2555
    %v2668 = vmul.f32 %v2556, %v2556
    %v2669 = vmul.f32 %v2557, %v2557
    %v2670 = vmul.f32 %v2558, %v2558
    %v2671 = vmul.f32 %v2559, %v2559
    %v2672 = vmul.f32 %v2560, %v2560
    %v2673 = vmul.f32 %v2561, %v2561
    %v2674 = vmul.f32 %v2562, %v2562
    %v2675 = vmul.f32 %v2563, %v2563
    %v2676 = vmul.f32 %v2564, %v2564
    %v2677 = vmul.f32 %v2565, %v2565
    %v2678 = vmul.f32 %v2566, %v2566
    %v2679 = vmul.f32 %v2567, %v2567
    %v2680 = vmul.f32 %v2568, %v2568
    %v2681 = vmul.f32 %v2569, %v2569
    %v2682 = vmul.f32 %v2570, %v2570
    %v2683 = vmul.f32 %v2571, %v2571
    %v2684 = vmul.f32 %v2572, %v2572
    %v2685 = vmul.f32 %v2573, %v2573
    %v2686 = vmul.f32 %v2574, %v2574
    %v2687 = vmul.f32 %v2575, %v2575
    %v2688 = vmul.f32 %v2576, %v2576
    %v2689 = vmul.f32 %v2577, %v2577
    %v2690 = vmul.f32 %v2578, %v2578
    %v2691 = vmul.f32 %v2579, %v2579
    %v2692 = vmul.f32 %v2580, %v2580
    %v2693 = vmul.f32 %v2581, %v2581
    %v2694 = vadd.f32 %v2662, %v2670
    %v2695 = vadd.f32 %v2694, %v2678
    %v2696 = vadd.f32 %v2695, %v2686
    %v2697 = vrot.slane %v2696, 4
    %v2698 = vadd.f32 %v2696, %v2697
    %v2699 = vrot.slane %v2698, 2
    %v2700 = vadd.f32 %v2698, %v2699
    %v2701 = vrot.slane %v2700, 1
    %v2702 = vadd.f32 %v2700, %v2701
    %v2703 = vadd.f32 %v2663, %v2671
    %v2704 = vadd.f32 %v2703, %v2679
    %v2705 = vadd.f32 %v2704, %v2687
    %v2706 = vrot.slane %v2705, 4
    %v2707 = vadd.f32 %v2705, %v2706
    %v2708 = vrot.slane %v2707, 2
    %v2709 = vadd.f32 %v2707, %v2708
    %v2710 = vrot.slane %v2709, 1
    %v2711 = vadd.f32 %v2709, %v2710
    %v2712 = vadd.f32 %v2664, %v2672
    %v2713 = vadd.f32 %v2712, %v2680
    %v2714 = vadd.f32 %v2713, %v2688
    %v2715 = vrot.slane %v2714, 4
    %v2716 = vadd.f32 %v2714, %v2715
    %v2717 = vrot.slane %v2716, 2
    %v2718 = vadd.f32 %v2716, %v2717
    %v2719 = vrot.slane %v2718, 1
    %v2720 = vadd.f32 %v2718, %v2719
    %v2721 = vadd.f32 %v2665, %v2673
    %v2722 = vadd.f32 %v2721, %v2681
    %v2723 = vadd.f32 %v2722, %v2689
    %v2724 = vrot.slane %v2723, 4
    %v2725 = vadd.f32 %v2723, %v2724
    %v2726 = vrot.slane %v2725, 2
    %v2727 = vadd.f32 %v2725, %v2726
    %v2728 = vrot.slane %v2727, 1
    %v2729 = vadd.f32 %v2727, %v2728
    %v2730 = vadd.f32 %v2666, %v2674
    %v2731 = vadd.f32 %v2730, %v2682
    %v2732 = vadd.f32 %v2731, %v2690
    %v2733 = vrot.slane %v2732, 4
    %v2734 = vadd.f32 %v2732, %v2733
    %v2735 = vrot.slane %v2734, 2
    %v2736 = vadd.f32 %v2734, %v2735
    %v2737 = vrot.slane %v2736, 1
    %v2738 = vadd.f32 %v2736, %v2737
    %v2739 = vadd.f32 %v2667, %v2675
    %v2740 = vadd.f32 %v2739, %v2683
    %v2741 = vadd.f32 %v2740, %v2691
    %v2742 = vrot.slane %v2741, 4
    %v2743 = vadd.f32 %v2741, %v2742
    %v2744 = vrot.slane %v2743, 2
    %v2745 = vadd.f32 %v2743, %v2744
    %v2746 = vrot.slane %v2745, 1
    %v2747 = vadd.f32 %v2745, %v2746
    %v2748 = vadd.f32 %v2668, %v2676
    %v2749 = vadd.f32 %v2748, %v2684
    %v2750 = vadd.f32 %v2749, %v2692
    %v2751 = vrot.slane %v2750, 4
    %v2752 = vadd.f32 %v2750, %v2751
    %v2753 = vrot.slane %v2752, 2
    %v2754 = vadd.f32 %v2752, %v2753
    %v2755 = vrot.slane %v2754, 1
    %v2756 = vadd.f32 %v2754, %v2755
    %v2757 = vadd.f32 %v2669, %v2677
    %v2758 = vadd.f32 %v2757, %v2685
    %v2759 = vadd.f32 %v2758, %v2693
    %v2760 = vrot.slane %v2759, 4
    %v2761 = vadd.f32 %v2759, %v2760
    %v2762 = vrot.slane %v2761, 2
    %v2763 = vadd.f32 %v2761, %v2762
    %v2764 = vrot.slane %v2763, 1
    %v2765 = vadd.f32 %v2763, %v2764
    %v2766 = vmul.f32 %v2702, %v965
    %v2767 = vmul.f32 %v2711, %v965
    %v2768 = vmul.f32 %v2720, %v965
    %v2769 = vmul.f32 %v2729, %v965
    %v2770 = vmul.f32 %v2738, %v965
    %v2771 = vmul.f32 %v2747, %v965
    %v2772 = vmul.f32 %v2756, %v965
    %v2773 = vmul.f32 %v2765, %v965
    %v2774 = vmul.f32 %v2654, %v2654
    %v2775 = vmul.f32 %v2655, %v2655
    %v2776 = vmul.f32 %v2656, %v2656
    %v2777 = vmul.f32 %v2657, %v2657
    %v2778 = vmul.f32 %v2658, %v2658
    %v2779 = vmul.f32 %v2659, %v2659
    %v2780 = vmul.f32 %v2660, %v2660
    %v2781 = vmul.f32 %v2661, %v2661
    %v2782 = vsub.f32 %v2766, %v2774
    %v2783 = vsub.f32 %v2767, %v2775
    %v2784 = vsub.f32 %v2768, %v2776
    %v2785 = vsub.f32 %v2769, %v2777
    %v2786 = vsub.f32 %v2770, %v2778
    %v2787 = vsub.f32 %v2771, %v2779
    %v2788 = vsub.f32 %v2772, %v2780
    %v2789 = vsub.f32 %v2773, %v2781
    %v2790 = vmax.f32 %v2782, 0.0
    %v2791 = vmax.f32 %v2783, 0.0
    %v2792 = vmax.f32 %v2784, 0.0
    %v2793 = vmax.f32 %v2785, 0.0
    %v2794 = vmax.f32 %v2786, 0.0
    %v2795 = vmax.f32 %v2787, 0.0
    %v2796 = vmax.f32 %v2788, 0.0
    %v2797 = vmax.f32 %v2789, 0.0
    %v2798 = vsub.f32 %v2550, %v2654
    %v2799 = vsub.f32 %v2551, %v2655
    %v2800 = vsub.f32 %v2552, %v2656
    %v2801 = vsub.f32 %v2553, %v2657
    %v2802 = vsub.f32 %v2554, %v2658
    %v2803 = vsub.f32 %v2555, %v2659
    %v2804 = vsub.f32 %v2556, %v2660
    %v2805 = vsub.f32 %v2557, %v2661
    %v2806 = vsub.f32 %v2558, %v2654
    %v2807 = vsub.f32 %v2559, %v2655
    %v2808 = vsub.f32 %v2560, %v2656
    %v2809 = vsub.f32 %v2561, %v2657
    %v2810 = vsub.f32 %v2562, %v2658
    %v2811 = vsub.f32 %v2563, %v2659
    %v2812 = vsub.f32 %v2564, %v2660
    %v2813 = vsub.f32 %v2565, %v2661
    %v2814 = vsub.f32 %v2566, %v2654
    %v2815 = vsub.f32 %v2567, %v2655
    %v2816 = vsub.f32 %v2568, %v2656
    %v2817 = vsub.f32 %v2569, %v2657
    %v2818 = vsub.f32 %v2570, %v2658
    %v2819 = vsub.f32 %v2571, %v2659
    %v2820 = vsub.f32 %v2572, %v2660
    %v2821 = vsub.f32 %v2573, %v2661
    %v2822 = vsub.f32 %v2574, %v2654
    %v2823 = vsub.f32 %v2575, %v2655
    %v2824 = vsub.f32 %v2576, %v2656
    %v2825 = vsub.f32 %v2577, %v2657
    %v2826 = vsub.f32 %v2578, %v2658
    %v2827 = vsub.f32 %v2579, %v2659
    %v2828 = vsub.f32 %v2580, %v2660
    %v2829 = vsub.f32 %v2581, %v2661
    %v2830 = vadd.f32 %v2790, 1e-05
    %v2831 = vadd.f32 %v2791, 1e-05
    %v2832 = vadd.f32 %v2792, 1e-05
    %v2833 = vadd.f32 %v2793, 1e-05
    %v2834 = vadd.f32 %v2794, 1e-05
    %v2835 = vadd.f32 %v2795, 1e-05
    %v2836 = vadd.f32 %v2796, 1e-05
    %v2837 = vadd.f32 %v2797, 1e-05
    %v2838 = vrsqrt.pop %v2830
    %v2839 = vrsqrt.pop %v2831
    %v2840 = vrsqrt.pop %v2832
    %v2841 = vrsqrt.pop %v2833
    %v2842 = vrsqrt.pop %v2834
    %v2843 = vrsqrt.pop %v2835
    %v2844 = vrsqrt.pop %v2836
    %v2845 = vrsqrt.pop %v2837
    %v2846 = vmul.f32 %v2798, %v2838
    %v2847 = vmul.f32 %v2799, %v2839
    %v2848 = vmul.f32 %v2800, %v2840
    %v2849 = vmul.f32 %v2801, %v2841
    %v2850 = vmul.f32 %v2802, %v2842
    %v2851 = vmul.f32 %v2803, %v2843
    %v2852 = vmul.f32 %v2804, %v2844
    %v2853 = vmul.f32 %v2805, %v2845
    %v2854 = vmul.f32 %v2806, %v2838
    %v2855 = vmul.f32 %v2807, %v2839
    %v2856 = vmul.f32 %v2808, %v2840
    %v2857 = vmul.f32 %v2809, %v2841
    %v2858 = vmul.f32 %v2810, %v2842
    %v2859 = vmul.f32 %v2811, %v2843
    %v2860 = vmul.f32 %v2812, %v2844
    %v2861 = vmul.f32 %v2813, %v2845
    %v2862 = vmul.f32 %v2814, %v2838
    %v2863 = vmul.f32 %v2815, %v2839
    %v2864 = vmul.f32 %v2816, %v2840
    %v2865 = vmul.f32 %v2817, %v2841
    %v2866 = vmul.f32 %v2818, %v2842
    %v2867 = vmul.f32 %v2819, %v2843
    %v2868 = vmul.f32 %v2820, %v2844
    %v2869 = vmul.f32 %v2821, %v2845
    %v2870 = vmul.f32 %v2822, %v2838
    %v2871 = vmul.f32 %v2823, %v2839
    %v2872 = vmul.f32 %v2824, %v2840
    %v2873 = vmul.f32 %v2825, %v2841
    %v2874 = vmul.f32 %v2826, %v2842
    %v2875 = vmul.f32 %v2827, %v2843
    %v2876 = vmul.f32 %v2828, %v2844
    %v2877 = vmul.f32 %v2829, %v2845
    %2878 = vset.pattern.permute.xlu0 11
    %2879 = vperm.xlu0 %2878, %v43
    %v2880 = vpop.permute.xlu0 %2879
    %2882 = vset.pattern.permute.xlu0 11
    %2883 = vperm.xlu0 %2882, %v45
    %v2884 = vpop.permute.xlu0 %2883
    %2886 = vset.pattern.permute.xlu0 11
    %2887 = vperm.xlu0 %2886, %v47
    %v2888 = vpop.permute.xlu0 %2887
    %2890 = vset.pattern.permute.xlu0 11
    %2891 = vperm.xlu0 %2890, %v49
    %v2892 = vpop.permute.xlu0 %2891
    %v2894 = vmul.f32 %v2846, %v2880
    %v2895 = vmul.f32 %v2847, %v2880
    %v2896 = vmul.f32 %v2848, %v2880
    %v2897 = vmul.f32 %v2849, %v2880
    %v2898 = vmul.f32 %v2850, %v2880
    %v2899 = vmul.f32 %v2851, %v2880
    %v2900 = vmul.f32 %v2852, %v2880
    %v2901 = vmul.f32 %v2853, %v2880
    %v2902 = vmul.f32 %v2854, %v2884
    %v2903 = vmul.f32 %v2855, %v2884
    %v2904 = vmul.f32 %v2856, %v2884
    %v2905 = vmul.f32 %v2857, %v2884
    %v2906 = vmul.f32 %v2858, %v2884
    %v2907 = vmul.f32 %v2859, %v2884
    %v2908 = vmul.f32 %v2860, %v2884
    %v2909 = vmul.f32 %v2861, %v2884
    %v2910 = vmul.f32 %v2862, %v2888
    %v2911 = vmul.f32 %v2863, %v2888
    %v2912 = vmul.f32 %v2864, %v2888
    %v2913 = vmul.f32 %v2865, %v2888
    %v2914 = vmul.f32 %v2866, %v2888
    %v2915 = vmul.f32 %v2867, %v2888
    %v2916 = vmul.f32 %v2868, %v2888
    %v2917 = vmul.f32 %v2869, %v2888
    %v2918 = vmul.f32 %v2870, %v2892
    %v2919 = vmul.f32 %v2871, %v2892
    %v2920 = vmul.f32 %v2872, %v2892
    %v2921 = vmul.f32 %v2873, %v2892
    %v2922 = vmul.f32 %v2874, %v2892
    %v2923 = vmul.f32 %v2875, %v2892
    %v2924 = vmul.f32 %v2876, %v2892
    %v2925 = vmul.f32 %v2877, %v2892
    %2926 = vset.pattern.permute.xlu0 12
    %2927 = vperm.xlu0 %2926, %v43
    %v2928 = vpop.permute.xlu0 %2927
    %2930 = vset.pattern.permute.xlu0 12
    %2931 = vperm.xlu0 %2930, %v45
    %v2932 = vpop.permute.xlu0 %2931
    %2934 = vset.pattern.permute.xlu0 12
    %2935 = vperm.xlu0 %2934, %v47
    %v2936 = vpop.permute.xlu0 %2935
    %2938 = vset.pattern.permute.xlu0 12
    %2939 = vperm.xlu0 %2938, %v49
    %v2940 = vpop.permute.xlu0 %2939
    %v2942 = vadd.f32 %v2894, %v2928
    %v2943 = vadd.f32 %v2895, %v2928
    %v2944 = vadd.f32 %v2896, %v2928
    %v2945 = vadd.f32 %v2897, %v2928
    %v2946 = vadd.f32 %v2898, %v2928
    %v2947 = vadd.f32 %v2899, %v2928
    %v2948 = vadd.f32 %v2900, %v2928
    %v2949 = vadd.f32 %v2901, %v2928
    %v2950 = vadd.f32 %v2902, %v2932
    %v2951 = vadd.f32 %v2903, %v2932
    %v2952 = vadd.f32 %v2904, %v2932
    %v2953 = vadd.f32 %v2905, %v2932
    %v2954 = vadd.f32 %v2906, %v2932
    %v2955 = vadd.f32 %v2907, %v2932
    %v2956 = vadd.f32 %v2908, %v2932
    %v2957 = vadd.f32 %v2909, %v2932
    %v2958 = vadd.f32 %v2910, %v2936
    %v2959 = vadd.f32 %v2911, %v2936
    %v2960 = vadd.f32 %v2912, %v2936
    %v2961 = vadd.f32 %v2913, %v2936
    %v2962 = vadd.f32 %v2914, %v2936
    %v2963 = vadd.f32 %v2915, %v2936
    %v2964 = vadd.f32 %v2916, %v2936
    %v2965 = vadd.f32 %v2917, %v2936
    %v2966 = vadd.f32 %v2918, %v2940
    %v2967 = vadd.f32 %v2919, %v2940
    %v2968 = vadd.f32 %v2920, %v2940
    %v2969 = vadd.f32 %v2921, %v2940
    %v2970 = vadd.f32 %v2922, %v2940
    %v2971 = vadd.f32 %v2923, %v2940
    %v2972 = vadd.f32 %v2924, %v2940
    %v2973 = vadd.f32 %v2925, %v2940
    %v2974 = vadd.f32 %v2942, %v2130
    %v2975 = vadd.f32 %v2943, %v2131
    %v2976 = vadd.f32 %v2944, %v2132
    %v2977 = vadd.f32 %v2945, %v2133
    %v2978 = vadd.f32 %v2946, %v2134
    %v2979 = vadd.f32 %v2947, %v2135
    %v2980 = vadd.f32 %v2948, %v2136
    %v2981 = vadd.f32 %v2949, %v2137
    %v2982 = vadd.f32 %v2950, %v2138
    %v2983 = vadd.f32 %v2951, %v2139
    %v2984 = vadd.f32 %v2952, %v2140
    %v2985 = vadd.f32 %v2953, %v2141
    %v2986 = vadd.f32 %v2954, %v2142
    %v2987 = vadd.f32 %v2955, %v2143
    %v2988 = vadd.f32 %v2956, %v2144
    %v2989 = vadd.f32 %v2957, %v2145
    %v2990 = vadd.f32 %v2958, %v2146
    %v2991 = vadd.f32 %v2959, %v2147
    %v2992 = vadd.f32 %v2960, %v2148
    %v2993 = vadd.f32 %v2961, %v2149
    %v2994 = vadd.f32 %v2962, %v2150
    %v2995 = vadd.f32 %v2963, %v2151
    %v2996 = vadd.f32 %v2964, %v2152
    %v2997 = vadd.f32 %v2965, %v2153
    %v2998 = vadd.f32 %v2966, %v2154
    %v2999 = vadd.f32 %v2967, %v2155
    %v3000 = vadd.f32 %v2968, %v2156
    %v3001 = vadd.f32 %v2969, %v2157
    %v3002 = vadd.f32 %v2970, %v2158
    %v3003 = vadd.f32 %v2971, %v2159
    %v3004 = vadd.f32 %v2972, %v2160
    %v3005 = vadd.f32 %v2973, %v2161
    %3006 = vset.pattern.permute.xlu0 13
    %3007 = vperm.xlu0 %3006, %v43
    %v3008 = vpop.permute.xlu0 %3007
    %3010 = vrot.lane.b32.xlu0 %v42, 32
    %v3011 = vpop.permute.xlu0 %3010
    %v3012 = vsel %vm492, %v3011, 0
    %3014 = vmatprep.subr.mxu0 %v2975
    %3015 = vmatpush1.msra.mxu0 %v2974
    %3016 = vmatprep.subr.mxu0 %v2983
    %3017 = vmatpush1.msra.mxu0 %v2982
    %3018 = vmatprep.subr.mxu0 %v2991
    %3019 = vmatpush1.msra.mxu0 %v2990
    %3020 = vmatprep.subr.mxu0 %v2999
    %3021 = vmatpush1.msra.mxu0 %v2998
    %3022 = vmatprep.subr.mxu0 0.0
    %3023 = vmatpush1.msra.mxu0 0.0
    %3024 = vmatprep.subr.mxu0 0.0
    %3025 = vmatpush1.msra.mxu0 0.0
    %3026 = vmatprep.subr.mxu0 0.0
    %3027 = vmatpush1.msra.mxu0 0.0
    %3028 = vmatprep.subr.mxu0 0.0
    %3029 = vmatpush1.msra.mxu0 0.0
    %3030 = vmatprep.subr.mxu0 0.0
    %3031 = vmatpush1.msra.mxu0 0.0
    %3032 = vmatprep.subr.mxu0 0.0
    %3033 = vmatpush1.msra.mxu0 0.0
    %3034 = vmatprep.subr.mxu0 0.0
    %3035 = vmatpush1.msra.mxu0 0.0
    %3036 = vmatprep.subr.mxu0 0.0
    %3037 = vmatpush1.msra.mxu0 0.0
    %3038 = vmatprep.subr.mxu0 0.0
    %3039 = vmatpush1.msra.mxu0 0.0
    %3040 = vmatprep.subr.mxu0 0.0
    %3041 = vmatpush1.msra.mxu0 0.0
    %3042 = vmatprep.subr.mxu0 0.0
    %3043 = vmatpush1.msra.mxu0 0.0
    %3044 = vmatprep.subr.mxu0 0.0
    %3045 = vmatpush1.msra.mxu0 0.0
    %3046 = vmatprep.subr.mxu0 0.0
    %3047 = vmatpush1.msra.mxu0 0.0
    %3048 = vmatprep.subr.mxu0 0.0
    %3049 = vmatpush1.msra.mxu0 0.0
    %3050 = vmatprep.subr.mxu0 0.0
    %3051 = vmatpush1.msra.mxu0 0.0
    %3052 = vmatprep.subr.mxu0 0.0
    %3053 = vmatpush1.msra.mxu0 0.0
    %3054 = vmatprep.subr.mxu0 0.0
    %3055 = vmatpush1.msra.mxu0 0.0
    %3056 = vmatprep.subr.mxu0 0.0
    %3057 = vmatpush1.msra.mxu0 0.0
    %3058 = vmatprep.subr.mxu0 0.0
    %3059 = vmatpush1.msra.mxu0 0.0
    %3060 = vmatprep.subr.mxu0 0.0
    %3061 = vmatpush1.msra.mxu0 0.0
    %3062 = vmatprep.subr.mxu0 0.0
    %3063 = vmatpush1.msra.mxu0 0.0
    %3064 = vmatprep.subr.mxu0 0.0
    %3065 = vmatpush1.msra.mxu0 0.0
    %3066 = vmatprep.subr.mxu0 0.0
    %3067 = vmatpush1.msra.mxu0 0.0
    %3068 = vmatprep.subr.mxu0 0.0
    %3069 = vmatpush1.msra.mxu0 0.0
    %3070 = vmatprep.subr.mxu0 0.0
    %3071 = vmatpush1.msra.mxu0 0.0
    %3072 = vmatprep.subr.mxu0 0.0
    %3073 = vmatpush1.msra.mxu0 0.0
    %3074 = vmatprep.subr.mxu0 0.0
    %3075 = vmatpush1.msra.mxu0 0.0
    %3076 = vmatprep.subr.mxu0 0.0
    %3077 = vmatpush1.msra.mxu0 0.0
    %3078 = vmatprep.mubr.f32.mxu0 0.0
    %3079 = vmatmul.mubr.f32.gmra.mrb[0].mxu0 %v3012
    %v3080 = vpop.f32.mrb[0].mxu0
    %v3081 = vadd.f32 %v3008, %v3080
    %v3082 = vpop.f32.mrb[0].mxu0
    %v3083 = vadd.f32 %v3008, %v3082
    %3084 = vdwg.mxu0
    %3085 = vmatprep.subr.mxu0 %v2977
    %3086 = vmatpush1.msra.mxu0 %v2976
    %3087 = vmatprep.subr.mxu0 %v2985
    %3088 = vmatpush1.msra.mxu0 %v2984
    %3089 = vmatprep.subr.mxu0 %v2993
    %3090 = vmatpush1.msra.mxu0 %v2992
    %3091 = vmatprep.subr.mxu0 %v3001
    %3092 = vmatpush1.msra.mxu0 %v3000
    %3093 = vmatprep.subr.mxu0 0.0
    %3094 = vmatpush1.msra.mxu0 0.0
    %3095 = vmatprep.subr.mxu0 0.0
    %3096 = vmatpush1.msra.mxu0 0.0
    %3097 = vmatprep.subr.mxu0 0.0
    %3098 = vmatpush1.msra.mxu0 0.0
    %3099 = vmatprep.subr.mxu0 0.0
    %3100 = vmatpush1.msra.mxu0 0.0
    %3101 = vmatprep.subr.mxu0 0.0
    %3102 = vmatpush1.msra.mxu0 0.0
    %3103 = vmatprep.subr.mxu0 0.0
    %3104 = vmatpush1.msra.mxu0 0.0
    %3105 = vmatprep.subr.mxu0 0.0
    %3106 = vmatpush1.msra.mxu0 0.0
    %3107 = vmatprep.subr.mxu0 0.0
    %3108 = vmatpush1.msra.mxu0 0.0
    %3109 = vmatprep.subr.mxu0 0.0
    %3110 = vmatpush1.msra.mxu0 0.0
    %3111 = vmatprep.subr.mxu0 0.0
    %3112 = vmatpush1.msra.mxu0 0.0
    %3113 = vmatprep.subr.mxu0 0.0
    %3114 = vmatpush1.msra.mxu0 0.0
    %3115 = vmatprep.subr.mxu0 0.0
    %3116 = vmatpush1.msra.mxu0 0.0
    %3117 = vmatprep.subr.mxu0 0.0
    %3118 = vmatpush1.msra.mxu0 0.0
    %3119 = vmatprep.subr.mxu0 0.0
    %3120 = vmatpush1.msra.mxu0 0.0
    %3121 = vmatprep.subr.mxu0 0.0
    %3122 = vmatpush1.msra.mxu0 0.0
    %3123 = vmatprep.subr.mxu0 0.0
    %3124 = vmatpush1.msra.mxu0 0.0
    %3125 = vmatprep.subr.mxu0 0.0
    %3126 = vmatpush1.msra.mxu0 0.0
    %3127 = vmatprep.subr.mxu0 0.0
    %3128 = vmatpush1.msra.mxu0 0.0
    %3129 = vmatprep.subr.mxu0 0.0
    %3130 = vmatpush1.msra.mxu0 0.0
    %3131 = vmatprep.subr.mxu0 0.0
    %3132 = vmatpush1.msra.mxu0 0.0
    %3133 = vmatprep.subr.mxu0 0.0
    %3134 = vmatpush1.msra.mxu0 0.0
    %3135 = vmatprep.subr.mxu0 0.0
    %3136 = vmatpush1.msra.mxu0 0.0
    %3137 = vmatprep.subr.mxu0 0.0
    %3138 = vmatpush1.msra.mxu0 0.0
    %3139 = vmatprep.subr.mxu0 0.0
    %3140 = vmatpush1.msra.mxu0 0.0
    %3141 = vmatprep.subr.mxu0 0.0
    %3142 = vmatpush1.msra.mxu0 0.0
    %3143 = vmatprep.subr.mxu0 0.0
    %3144 = vmatpush1.msra.mxu0 0.0
    %3145 = vmatprep.subr.mxu0 0.0
    %3146 = vmatpush1.msra.mxu0 0.0
    %3147 = vmatprep.subr.mxu0 0.0
    %3148 = vmatpush1.msra.mxu0 0.0
    %3149 = vmatprep.mubr.f32.mxu0 0.0
    %3150 = vmatmul.mubr.f32.gmra.mrb[0].mxu0 %v3012
    %v3151 = vpop.f32.mrb[0].mxu0
    %v3152 = vadd.f32 %v3008, %v3151
    %v3153 = vpop.f32.mrb[0].mxu0
    %v3154 = vadd.f32 %v3008, %v3153
    %3155 = vdwg.mxu0
    %3156 = vmatprep.subr.mxu0 %v2979
    %3157 = vmatpush1.msra.mxu0 %v2978
    %3158 = vmatprep.subr.mxu0 %v2987
    %3159 = vmatpush1.msra.mxu0 %v2986
    %3160 = vmatprep.subr.mxu0 %v2995
    %3161 = vmatpush1.msra.mxu0 %v2994
    %3162 = vmatprep.subr.mxu0 %v3003
    %3163 = vmatpush1.msra.mxu0 %v3002
    %3164 = vmatprep.subr.mxu0 0.0
    %3165 = vmatpush1.msra.mxu0 0.0
    %3166 = vmatprep.subr.mxu0 0.0
    %3167 = vmatpush1.msra.mxu0 0.0
    %3168 = vmatprep.subr.mxu0 0.0
    %3169 = vmatpush1.msra.mxu0 0.0
    %3170 = vmatprep.subr.mxu0 0.0
    %3171 = vmatpush1.msra.mxu0 0.0
    %3172 = vmatprep.subr.mxu0 0.0
    %3173 = vmatpush1.msra.mxu0 0.0
    %3174 = vmatprep.subr.mxu0 0.0
    %3175 = vmatpush1.msra.mxu0 0.0
    %3176 = vmatprep.subr.mxu0 0.0
    %3177 = vmatpush1.msra.mxu0 0.0
    %3178 = vmatprep.subr.mxu0 0.0
    %3179 = vmatpush1.msra.mxu0 0.0
    %3180 = vmatprep.subr.mxu0 0.0
    %3181 = vmatpush1.msra.mxu0 0.0
    %3182 = vmatprep.subr.mxu0 0.0
    %3183 = vmatpush1.msra.mxu0 0.0
    %3184 = vmatprep.subr.mxu0 0.0
    %3185 = vmatpush1.msra.mxu0 0.0
    %3186 = vmatprep.subr.mxu0 0.0
    %3187 = vmatpush1.msra.mxu0 0.0
    %3188 = vmatprep.subr.mxu0 0.0
    %3189 = vmatpush1.msra.mxu0 0.0
    %3190 = vmatprep.subr.mxu0 0.0
    %3191 = vmatpush1.msra.mxu0 0.0
    %3192 = vmatprep.subr.mxu0 0.0
    %3193 = vmatpush1.msra.mxu0 0.0
    %3194 = vmatprep.subr.mxu0 0.0
    %3195 = vmatpush1.msra.mxu0 0.0
    %3196 = vmatprep.subr.mxu0 0.0
    %3197 = vmatpush1.msra.mxu0 0.0
    %3198 = vmatprep.subr.mxu0 0.0
    %3199 = vmatpush1.msra.mxu0 0.0
    %3200 = vmatprep.subr.mxu0 0.0
    %3201 = vmatpush1.msra.mxu0 0.0
    %3202 = vmatprep.subr.mxu0 0.0
    %3203 = vmatpush1.msra.mxu0 0.0
    %3204 = vmatprep.subr.mxu0 0.0
    %3205 = vmatpush1.msra.mxu0 0.0
    %3206 = vmatprep.subr.mxu0 0.0
    %3207 = vmatpush1.msra.mxu0 0.0
    %3208 = vmatprep.subr.mxu0 0.0
    %3209 = vmatpush1.msra.mxu0 0.0
    %3210 = vmatprep.subr.mxu0 0.0
    %3211 = vmatpush1.msra.mxu0 0.0
    %3212 = vmatprep.subr.mxu0 0.0
    %3213 = vmatpush1.msra.mxu0 0.0
    %3214 = vmatprep.subr.mxu0 0.0
    %3215 = vmatpush1.msra.mxu0 0.0
    %3216 = vmatprep.subr.mxu0 0.0
    %3217 = vmatpush1.msra.mxu0 0.0
    %3218 = vmatprep.subr.mxu0 0.0
    %3219 = vmatpush1.msra.mxu0 0.0
    %3220 = vmatprep.mubr.f32.mxu0 0.0
    %3221 = vmatmul.mubr.f32.gmra.mrb[0].mxu0 %v3012
    %v3222 = vpop.f32.mrb[0].mxu0
    %v3223 = vadd.f32 %v3008, %v3222
    %v3224 = vpop.f32.mrb[0].mxu0
    %v3225 = vadd.f32 %v3008, %v3224
    %3226 = vdwg.mxu0
    %3227 = vmatprep.subr.mxu0 %v2981
    %3228 = vmatpush1.msra.mxu0 %v2980
    %3229 = vmatprep.subr.mxu0 %v2989
    %3230 = vmatpush1.msra.mxu0 %v2988
    %3231 = vmatprep.subr.mxu0 %v2997
    %3232 = vmatpush1.msra.mxu0 %v2996
    %3233 = vmatprep.subr.mxu0 %v3005
    %3234 = vmatpush1.msra.mxu0 %v3004
    %3235 = vmatprep.subr.mxu0 0.0
    %3236 = vmatpush1.msra.mxu0 0.0
    %3237 = vmatprep.subr.mxu0 0.0
    %3238 = vmatpush1.msra.mxu0 0.0
    %3239 = vmatprep.subr.mxu0 0.0
    %3240 = vmatpush1.msra.mxu0 0.0
    %3241 = vmatprep.subr.mxu0 0.0
    %3242 = vmatpush1.msra.mxu0 0.0
    %3243 = vmatprep.subr.mxu0 0.0
    %3244 = vmatpush1.msra.mxu0 0.0
    %3245 = vmatprep.subr.mxu0 0.0
    %3246 = vmatpush1.msra.mxu0 0.0
    %3247 = vmatprep.subr.mxu0 0.0
    %3248 = vmatpush1.msra.mxu0 0.0
    %3249 = vmatprep.subr.mxu0 0.0
    %3250 = vmatpush1.msra.mxu0 0.0
    %3251 = vmatprep.subr.mxu0 0.0
    %3252 = vmatpush1.msra.mxu0 0.0
    %3253 = vmatprep.subr.mxu0 0.0
    %3254 = vmatpush1.msra.mxu0 0.0
    %3255 = vmatprep.subr.mxu0 0.0
    %3256 = vmatpush1.msra.mxu0 0.0
    %3257 = vmatprep.subr.mxu0 0.0
    %3258 = vmatpush1.msra.mxu0 0.0
    %3259 = vmatprep.subr.mxu0 0.0
    %3260 = vmatpush1.msra.mxu0 0.0
    %3261 = vmatprep.subr.mxu0 0.0
    %3262 = vmatpush1.msra.mxu0 0.0
    %3263 = vmatprep.subr.mxu0 0.0
    %3264 = vmatpush1.msra.mxu0 0.0
    %3265 = vmatprep.subr.mxu0 0.0
    %3266 = vmatpush1.msra.mxu0 0.0
    %3267 = vmatprep.subr.mxu0 0.0
    %3268 = vmatpush1.msra.mxu0 0.0
    %3269 = vmatprep.subr.mxu0 0.0
    %3270 = vmatpush1.msra.mxu0 0.0
    %3271 = vmatprep.subr.mxu0 0.0
    %3272 = vmatpush1.msra.mxu0 0.0
    %3273 = vmatprep.subr.mxu0 0.0
    %3274 = vmatpush1.msra.mxu0 0.0
    %3275 = vmatprep.subr.mxu0 0.0
    %3276 = vmatpush1.msra.mxu0 0.0
    %3277 = vmatprep.subr.mxu0 0.0
    %3278 = vmatpush1.msra.mxu0 0.0
    %3279 = vmatprep.subr.mxu0 0.0
    %3280 = vmatpush1.msra.mxu0 0.0
    %3281 = vmatprep.subr.mxu0 0.0
    %3282 = vmatpush1.msra.mxu0 0.0
    %3283 = vmatprep.subr.mxu0 0.0
    %3284 = vmatpush1.msra.mxu0 0.0
    %3285 = vmatprep.subr.mxu0 0.0
    %3286 = vmatpush1.msra.mxu0 0.0
    %3287 = vmatprep.subr.mxu0 0.0
    %3288 = vmatpush1.msra.mxu0 0.0
    %3289 = vmatprep.subr.mxu0 0.0
    %3290 = vmatpush1.msra.mxu0 0.0
    %3291 = vmatprep.mubr.f32.mxu0 0.0
    %3292 = vmatmul.mubr.f32.gmra.mrb[0].mxu0 %v3012
    %v3293 = vpop.f32.mrb[0].mxu0
    %v3294 = vadd.f32 %v3008, %v3293
    %v3295 = vpop.f32.mrb[0].mxu0
    %v3296 = vadd.f32 %v3008, %v3295
    %3297 = vdwg.mxu0
    %v3306 = vcombine.low %v3081, %v3083
    %v3307 = vcombine.low %v3152, %v3154
    %v3309 = vunpack.c.l.s4 1983009808
    %v3310 = vunpack.c.0.s8 %v3309
    %v3311 = vlaneseq
    %v3312 = vshrl.u32 %v3311, 7
    %v3313 = vsub.s32 %v3310, %v3312
    %v3314 = vrot.slane %v3306, %v3313
    %v3316 = vunpack.c.l.s4 1983009808
    %v3317 = vunpack.c.0.s8 %v3316
    %v3318 = vlaneseq
    %v3319 = vshrl.u32 %v3318, 7
    %v3320 = vsub.s32 %v3317, %v3319
    %v3321 = vrot.slane %v3307, %v3320
    %v3322 = vcombine.low %v3314, %v3321
    %v3323 = vcombine.low %v3223, %v3225
    %v3324 = vcombine.low %v3294, %v3296
    %v3326 = vunpack.c.l.s4 1983009808
    %v3327 = vunpack.c.0.s8 %v3326
    %v3328 = vlaneseq
    %v3329 = vshrl.u32 %v3328, 7
    %v3330 = vsub.s32 %v3327, %v3329
    %v3331 = vrot.slane %v3323, %v3330
    %v3333 = vunpack.c.l.s4 1983009808
    %v3334 = vunpack.c.0.s8 %v3333
    %v3335 = vlaneseq
    %v3336 = vshrl.u32 %v3335, 7
    %v3337 = vsub.s32 %v3334, %v3336
    %v3338 = vrot.slane %v3324, %v3337
    %v3339 = vcombine.low %v3331, %v3338
    %3342 = vst [vmem:[#allocation7] sm:$0xff] %v3322
    %3343 = vst [vmem:[#allocation7 + $0x8] sm:$0xff] %v3339
    // Predicated region
    $region18: #{tpu_custom_call.1} parent=1 // pred_check
      _
    $region19: #{tpu_custom_call.1} parent=1 // pred_check_branch
      %3345 = sbr.rel (0) target = $region21
    $region20: #{tpu_custom_call.1} parent=1 // pred_region
      %s3347 = ssub.s32 256, 256
      %3348 = vsyncadd [#allocation4], %s3347
      %s3350 = sshll.u32 [#allocation7], 4
      %s3351 = int_to_ptr.vmem [resolvable:$true] %s3350
      %3353 = dma.vmem_to_hbm [thread:$0]  %s3351, 256, %s2, [#allocation4]
    $region21: #{tpu_custom_call.1} parent=1 // pred_fallthru
      _
    // Predicated region
    $region22: #{tpu_custom_call.1} parent=1 // pred_check
      _
    $region23: #{tpu_custom_call.1} parent=1 // pred_check_branch
      %3355 = sbr.rel (0) target = $region25
    $region24: #{tpu_custom_call.1} parent=1 // pred_region
      %3356 = dma.done [#allocation4], 256
    $region25: #{tpu_custom_call.1} parent=1 // pred_fallthru
      _
    %3357 = vsyncpa [#allocation3], 1
    %3358 = vsyncpa [#allocation6], 1
    %3359 = vsyncpa [#allocation4], 1

</llo_original>
